<compile_context>
chip_gen: v5e
topology: v5e:2x2
jax: 0.10.0
libtpu: 0.0.40
codegen_flags: <defaults>
</compile_context>

<pallas_src>
import functools

import jax
import jax.numpy as jnp
from jax import lax
from jax.experimental import pallas as pl
from jax.experimental.pallas import tpu as pltpu


def _softplus(x):
    # Numerically-safe softplus:  log(sigmoid(x)) == -_softplus(-x),
    # log(1 - sigmoid(x)) == -_softplus(x).  Avoids the -inf that
    # log(sigmoid(x)) produces for |x| > ~17 in f32.
    return jnp.maximum(x, 0.0) + jnp.log(1.0 + jnp.exp(-jnp.abs(x)))


def nvsm_loss_kernel(words_ref, proj_ref, beta_ref, rd_ref, pos_oh_ref,
                     neg_cnt_ref, reg_ref, out_ref,
                     sum_ref, sumsq_ref, loss_ref,
                     *, z, lamb, m, batch_size, mxu_dtype):
    phase = pl.program_id(0)          # 0: accumulate batch moments, 1: score
    btile = pl.program_id(1)
    n_btiles = pl.num_programs(1)

    # ---- shared per-tile work: g(), norm(), f() ---------------------------
    words = words_ref[...]                                   # (Bt, G, W)
    words_mean = jnp.mean(words, axis=1)                     # (Bt, W)
    inv_nrm = lax.rsqrt(jnp.sum(words_mean * words_mean, axis=1, keepdims=True))
    w_norm = words_mean * inv_nrm                            # (Bt, W)
    # proj is (D, W); contract on W directly -- no transpose is materialized.
    T = lax.dot_general(w_norm.astype(mxu_dtype),
                        proj_ref[...].astype(mxu_dtype),
                        dimension_numbers=(((1,), (1,)), ((), ())),
                        preferred_element_type=jnp.float32)  # (Bt, D)

    @pl.when((phase == 0) & (btile == 0))
    def _init():
        sum_ref[...] = jnp.zeros_like(sum_ref)
        sumsq_ref[...] = jnp.zeros_like(sumsq_ref)
        loss_ref[0, 0] = jnp.float32(0.0)

    @pl.when(phase == 0)
    def _moments():
        sum_ref[...] += jnp.sum(T, axis=0, keepdims=True)
        sumsq_ref[...] += jnp.sum(T * T, axis=0, keepdims=True)

    @pl.when(phase == 1)
    def _score():
        s1 = sum_ref[...]                                    # (1, D)
        s2 = sumsq_ref[...]                                  # (1, D)
        mean = s1 * (1.0 / batch_size)
        var = (s2 - s1 * mean) * (1.0 / (batch_size - 1))    # unbiased (ddof=1)
        std = jnp.sqrt(var)
        # t(): hardtanh((x - mean) / sqrt(std) + beta)  -- sqrt of the *std*,
        # exactly as written in the PyTorch module.
        t_hat = jnp.clip((T - mean) * lax.rsqrt(std) + beta_ref[...],
                         -1.0, 1.0)                          # (Bt, D)

        # Score every document once on the MXU; the sampled positive /
        # negative docs are picked out with one-hot / count weights, so the
        # (B, Z, D) gathered tensor never exists.
        # TODO(synk): for production-scale num_documents the (D, num_docs)
        # block / (Bt, num_docs) score matrix won't fit -- switch back to
        # gathered negatives (batched dot_general) or scalar-prefetch gathers.
        scores = jnp.dot(t_hat.astype(mxu_dtype), rd_ref[...].astype(mxu_dtype),
                         preferred_element_type=jnp.float32)  # (Bt, ND)

        pos_score = jnp.sum(scores * pos_oh_ref[...], axis=1, keepdims=True)
        log_p = z * (-_softplus(-pos_score))                           # (Bt, 1)
        nsample_log = -jnp.sum(neg_cnt_ref[...] * _softplus(scores),
                               axis=1, keepdims=True)                  # (Bt, 1)
        log_p_wave = (z + 1) / (2 * z) * (log_p + nsample_log)
        loss_ref[0, 0] += jnp.sum(log_p_wave)

    @pl.when((phase == 1) & (btile == n_btiles - 1))
    def _finalize():
        out_ref[0, 0] = (loss_ref[0, 0] * (1.0 / batch_size)
                         + lamb / (2.0 * m) * reg_ref[0, 0])


def nvsm_loss(rd, rv, proj, beta, word_ids, doc_ids, neg_ids, *,
              z, lamb, m, batch_tile=128, mxu_dtype=jnp.float32):
    D, num_docs = rd.shape
    W = rv.shape[0]
    B, G = word_ids.shape
    assert B > 1 and B % batch_tile == 0
    nb = B // batch_tile

    # ---- sampling glue (the torch.rand gathers of sample_batch) -----------
    words = jnp.take(rv.T, word_ids, axis=0).astype(jnp.float32)        # (B,G,W)
    pos_onehot = jax.nn.one_hot(doc_ids, num_docs, dtype=jnp.float32)   # (B,ND)
    neg_counts = jnp.sum(jax.nn.one_hot(neg_ids, num_docs, dtype=jnp.float32),
                         axis=1)                                        # (B,ND)
    beta2d = beta.reshape(1, D).astype(jnp.float32)

    # ---- regularizer over the full embedding tables stays in plain JAX ----
    reg = (jnp.sum(rd) + jnp.sum(rv) + jnp.sum(proj)
           ).reshape(1, 1).astype(jnp.float32)

    kernel = functools.partial(nvsm_loss_kernel, z=z, lamb=lamb, m=m,
                               batch_size=B, mxu_dtype=mxu_dtype)

    flops = 2 * (2 * B * W * D) + 2 * B * D * num_docs + 12 * B * num_docs
    transcendentals = 2 * B * (num_docs + 2)
    bytes_accessed = 4 * (2 * words.size + 2 * proj.size + rd.size
                          + pos_onehot.size + neg_counts.size + 2 * D + 2)

    grid_spec = pltpu.PrefetchScalarGridSpec(
        num_scalar_prefetch=0,
        grid=(2, nb),     # (phase, batch tile); batch tile is the fast axis
        in_specs=[
            pl.BlockSpec((batch_tile, G, W), lambda p, b: (b, 0, 0)),   # words
            pl.BlockSpec((D, W), lambda p, b: (0, 0)),                  # proj
            pl.BlockSpec((1, D), lambda p, b: (0, 0)),                  # beta
            pl.BlockSpec((D, num_docs), lambda p, b: (0, 0)),           # rd
            pl.BlockSpec((batch_tile, num_docs), lambda p, b: (b, 0)),  # pos 1-hot
            pl.BlockSpec((batch_tile, num_docs), lambda p, b: (b, 0)),  # neg counts
            pl.BlockSpec((1, 1), lambda p, b: (0, 0),
                         memory_space=pltpu.MemorySpace.SMEM),          # reg scalar
        ],
        out_specs=pl.BlockSpec((1, 1), lambda p, b: (0, 0),
                               memory_space=pltpu.MemorySpace.SMEM),
        scratch_shapes=[
            pltpu.VMEM((1, D), jnp.float32),     # sum_b T
            pltpu.VMEM((1, D), jnp.float32),     # sum_b T^2
            pltpu.SMEM((1, 1), jnp.float32),     # loss accumulator
        ],
    )

    out = pl.pallas_call(
        kernel,
        out_shape=jax.ShapeDtypeStruct((1, 1), jnp.float32),
        grid_spec=grid_spec,
        compiler_params=pltpu.CompilerParams(
            # Both axes carry state (batch moments / loss accumulator), so
            # they must stay "arbitrary" (sequential).
            dimension_semantics=("arbitrary", "arbitrary"),
            vmem_limit_bytes=32 * 1024 * 1024),
        cost_estimate=pl.CostEstimate(flops=int(flops),
                                      transcendentals=int(transcendentals),
                                      bytes_accessed=int(bytes_accessed)),
    )(words, proj.astype(jnp.float32), beta2d, rd.astype(jnp.float32),
      pos_onehot, neg_counts, reg)
    return out[0, 0]


def nvsm_loss_ref(rd, rv, proj, beta, word_ids, doc_ids, neg_ids, *, z, lamb, m):
    """Pure-JAX reference mirroring the PyTorch forward() exactly."""
    words = jnp.take(rv.T, word_ids, axis=0)          # (B, G, W)
    pos = jnp.take(rd.T, doc_ids, axis=0)             # (B, D)
    neg = jnp.take(rd.T, neg_ids, axis=0)             # (B, Z, D)
    B = words.shape[0]
    wm = jnp.mean(words, axis=1)
    wn = wm / jnp.linalg.norm(wm, axis=1, keepdims=True)
    T = wn @ proj.T
    mean = jnp.mean(T, axis=0)
    std = jnp.std(T, axis=0, ddof=1)
    t_hat = jnp.clip((T - mean) / jnp.sqrt(std) + beta.reshape(-1), -1.0, 1.0)
    log_p = z * (-_softplus(-jnp.sum(t_hat * pos, axis=1)))
    neg_scores = jnp.einsum('bd,bzd->bz', t_hat, neg)
    nlog = -jnp.sum(_softplus(neg_scores), axis=1)
    lpw = (z + 1) / (2 * z) * (log_p + nlog)
    reg = jnp.sum(rd) + jnp.sum(rv) + jnp.sum(proj)
    return (1.0 / B) * jnp.sum(lpw) + lamb / (2.0 * m) * reg


if __name__ == "__main__":
    # Lane-dense demo shapes (W = D = num_docs = 128, B = 256) so the MXU /
    # vregs are actually used; still small (all arrays < 1 MB).
    batch_size = 256
    batch_tile = 128
    n_gram = 5
    document_emb_size = 128   # D
    word_emb_size = 128       # W
    num_documents = 128
    vocab_size = 256
    z = 4
    lamb = 0.01
    m = 10

    key = jax.random.PRNGKey(0)
    k_rd, k_rv, k_proj, k_beta, k_doc, k_word, k_neg = jax.random.split(key, 7)

    # Deterministic parameter init (xavier-ish normals; beta uniform like torch.rand).
    rd = (jax.random.normal(k_rd, (document_emb_size, num_documents), jnp.float32)
          * jnp.sqrt(2.0 / (document_emb_size + num_documents)))
    rv = jax.random.normal(k_rv, (word_emb_size, vocab_size), jnp.float32) * 0.1
    proj = (jax.random.normal(k_proj, (document_emb_size, word_emb_size), jnp.float32)
            * jnp.sqrt(2.0 / (document_emb_size + word_emb_size)))
    beta = jax.random.uniform(k_beta, (document_emb_size, 1), jnp.float32)

    # Deterministic "sample_batch": index sampling is glue, done in plain JAX.
    doc_ids = jax.random.randint(k_doc, (batch_size,), 0, num_documents)
    word_ids = jax.random.randint(k_word, (batch_size, n_gram), 0, vocab_size)
    neg_ids = jax.random.randint(k_neg, (batch_size, z), 0, num_documents)

    # NOTE: on v6e/v7x pass mxu_dtype=jnp.bfloat16 for the two matmuls
    # (f32 accumulation kept); the demo uses f32 so the check stays tight.
    loss = nvsm_loss(rd, rv, proj, beta, word_ids, doc_ids, neg_ids,
                     z=z, lamb=lamb, m=m, batch_tile=batch_tile,
                     mxu_dtype=jnp.float32)
    loss = jax.block_until_ready(loss)

    ref = nvsm_loss_ref(rd, rv, proj, beta, word_ids, doc_ids, neg_ids,
                        z=z, lamb=lamb, m=m)
    assert jnp.allclose(loss, ref, rtol=1e-3, atol=1e-3), (loss, ref)

    print("KERNEL_OK")
</pallas_src>

<mosaic_0001>
module attributes {stable_mosaic.version = 11 : i64} {
  func.func @nvsm_loss_kernel(%arg0: i32, %arg1: i32, %arg2: memref<128x5x128xf32, #tpu.memory_space<vmem>>, %arg3: memref<128x128xf32, #tpu.memory_space<vmem>>, %arg4: memref<1x128xf32, #tpu.memory_space<vmem>>, %arg5: memref<128x128xf32, #tpu.memory_space<vmem>>, %arg6: memref<128x128xf32, #tpu.memory_space<vmem>>, %arg7: memref<128x128xf32, #tpu.memory_space<vmem>>, %arg8: memref<1x1xf32, #tpu.memory_space<smem>>, %arg9: memref<1x1xf32, #tpu.memory_space<smem>>, %arg10: memref<1x128xf32, #tpu.memory_space<vmem>>, %arg11: memref<1x128xf32, #tpu.memory_space<vmem>>, %arg12: memref<1x1xf32, #tpu.memory_space<smem>>) attributes {dimension_semantics = [#tpu.dimension_semantics<arbitrary>, #tpu.dimension_semantics<arbitrary>], iteration_bounds = array<i64: 2, 2>, scalar_prefetch = 0 : i64, scratch_operands = 3 : i64, tpu.core_type = #tpu.core_type<tc>, window_params = [{transform_indices = @transform_0, window_bounds = array<i64: 128, 5, 128>}, {pipeline_mode = #tpu.pipeline_mode<synchronous>, transform_indices = @transform_1, window_bounds = array<i64: 128, 128>}, {pipeline_mode = #tpu.pipeline_mode<synchronous>, transform_indices = @transform_2, window_bounds = array<i64: 1, 128>}, {pipeline_mode = #tpu.pipeline_mode<synchronous>, transform_indices = @transform_3, window_bounds = array<i64: 128, 128>}, {transform_indices = @transform_4, window_bounds = array<i64: 128, 128>}, {transform_indices = @transform_5, window_bounds = array<i64: 128, 128>}, {transform_indices = @transform_6, window_bounds = array<i64: 1, 1>}, {transform_indices = @transform_7, window_bounds = array<i64: 1, 1>}]} {
    %c0 = arith.constant 0 : index
    %c0_0 = arith.constant 0 : index
    %c0_1 = arith.constant 0 : index
    %0 = vector.load %arg2[%c0, %c0_0, %c0_1] : memref<128x5x128xf32, #tpu.memory_space<vmem>>, vector<128x5x128xf32>
    %cst = arith.constant dense<0.000000e+00> : vector<128x128xf32>
    %1 = vector.multi_reduction <add>, %0, %cst [1] : vector<128x5x128xf32> to vector<128x128xf32>
    %cst_2 = arith.constant 5.000000e+00 : f32
    %2 = vector.broadcast %cst_2 : f32 to vector<128x128xf32>
    %3 = arith.divf %1, %2 : vector<128x128xf32>
    %4 = arith.mulf %3, %3 : vector<128x128xf32>
    %cst_3 = arith.constant dense<0.000000e+00> : vector<128xf32>
    %5 = vector.multi_reduction <add>, %4, %cst_3 [1] : vector<128x128xf32> to vector<128xf32>
    %6 = vector.shape_cast %5 : vector<128xf32> to vector<128x1xf32>
    %7 = math.rsqrt %6 : vector<128x1xf32>
    %8 = vector.broadcast %7 : vector<128x1xf32> to vector<128x128xf32>
    %9 = arith.mulf %3, %8 : vector<128x128xf32>
    %c0_4 = arith.constant 0 : index
    %c0_5 = arith.constant 0 : index
    %10 = vector.load %arg3[%c0_4, %c0_5] : memref<128x128xf32, #tpu.memory_space<vmem>>, vector<128x128xf32>
    %cst_6 = arith.constant dense<0.000000e+00> : vector<128x128xf32>
    %11 = tpu.matmul %9, %10, %cst_6 {dimension_numbers = #tpu.dot_dimension_numbers<[1], [1], [0], [0], [0, 0, 1, 0], [], []>} : vector<128x128xf32>, vector<128x128xf32>, vector<128x128xf32> -> vector<128x128xf32>
    %c0_i32 = arith.constant 0 : i32
    %12 = arith.cmpi eq, %arg0, %c0_i32 : i32
    %c0_i32_7 = arith.constant 0 : i32
    %13 = arith.cmpi eq, %arg1, %c0_i32_7 : i32
    %14 = arith.andi %12, %13 : i1
    %15 = arith.extui %14 : i1 to i32
    %c0_i32_8 = arith.constant 0 : i32
    %16 = arith.cmpi ne, %15, %c0_i32_8 : i32
    scf.if %16 {
      %cst_15 = arith.constant 0.000000e+00 : f32
      %28 = vector.broadcast %cst_15 : f32 to vector<1x128xf32>
      %c0_16 = arith.constant 0 : index
      %c0_17 = arith.constant 0 : index
      %29 = vector.load %arg10[%c0_16, %c0_17] : memref<1x128xf32, #tpu.memory_space<vmem>>, vector<1x128xf32>
      tpu.vector_store %arg10[%c0_16, %c0_17], %28 {strides = array<i32>} : memref<1x128xf32, #tpu.memory_space<vmem>>, vector<1x128xf32>,
      %cst_18 = arith.constant 0.000000e+00 : f32
      %30 = vector.broadcast %cst_18 : f32 to vector<1x128xf32>
      %c0_19 = arith.constant 0 : index
      %c0_20 = arith.constant 0 : index
      %31 = vector.load %arg11[%c0_19, %c0_20] : memref<1x128xf32, #tpu.memory_space<vmem>>, vector<1x128xf32>
      tpu.vector_store %arg11[%c0_19, %c0_20], %30 {strides = array<i32>} : memref<1x128xf32, #tpu.memory_space<vmem>>, vector<1x128xf32>,
      %cst_21 = arith.constant 0.000000e+00 : f32
      %c0_22 = arith.constant 0 : index
      %c0_23 = arith.constant 0 : index
      %32 = memref.load %arg12[%c0_22, %c0_23] : memref<1x1xf32, #tpu.memory_space<smem>>
      memref.store %cst_21, %arg12[%c0_22, %c0_23] : memref<1x1xf32, #tpu.memory_space<smem>>
    } else {
    }
    %c0_i32_9 = arith.constant 0 : i32
    %17 = arith.cmpi eq, %arg0, %c0_i32_9 : i32
    %18 = arith.extui %17 : i1 to i32
    %c0_i32_10 = arith.constant 0 : i32
    %19 = arith.cmpi ne, %18, %c0_i32_10 : i32
    scf.if %19 {
      %c0_15 = arith.constant 0 : index
      %c0_16 = arith.constant 0 : index
      %28 = vector.load %arg10[%c0_15, %c0_16] : memref<1x128xf32, #tpu.memory_space<vmem>>, vector<1x128xf32>
      %cst_17 = arith.constant dense<0.000000e+00> : vector<128xf32>
      %29 = vector.multi_reduction <add>, %11, %cst_17 [0] : vector<128x128xf32> to vector<128xf32>
      %30 = vector.shape_cast %29 : vector<128xf32> to vector<1x128xf32>
      %31 = arith.addf %28, %30 : vector<1x128xf32>
      %c0_18 = arith.constant 0 : index
      %c0_19 = arith.constant 0 : index
      %32 = vector.load %arg10[%c0_18, %c0_19] : memref<1x128xf32, #tpu.memory_space<vmem>>, vector<1x128xf32>
      tpu.vector_store %arg10[%c0_18, %c0_19], %31 {strides = array<i32>} : memref<1x128xf32, #tpu.memory_space<vmem>>, vector<1x128xf32>,
      %c0_20 = arith.constant 0 : index
      %c0_21 = arith.constant 0 : index
      %33 = vector.load %arg11[%c0_20, %c0_21] : memref<1x128xf32, #tpu.memory_space<vmem>>, vector<1x128xf32>
      %34 = arith.mulf %11, %11 : vector<128x128xf32>
      %cst_22 = arith.constant dense<0.000000e+00> : vector<128xf32>
      %35 = vector.multi_reduction <add>, %34, %cst_22 [0] : vector<128x128xf32> to vector<128xf32>
      %36 = vector.shape_cast %35 : vector<128xf32> to vector<1x128xf32>
      %37 = arith.addf %33, %36 : vector<1x128xf32>
      %c0_23 = arith.constant 0 : index
      %c0_24 = arith.constant 0 : index
      %38 = vector.load %arg11[%c0_23, %c0_24] : memref<1x128xf32, #tpu.memory_space<vmem>>, vector<1x128xf32>
      tpu.vector_store %arg11[%c0_23, %c0_24], %37 {strides = array<i32>} : memref<1x128xf32, #tpu.memory_space<vmem>>, vector<1x128xf32>,
    } else {
    }
    %c1_i32 = arith.constant 1 : i32
    %20 = arith.cmpi eq, %arg0, %c1_i32 : i32
    %21 = arith.extui %20 : i1 to i32
    %c0_i32_11 = arith.constant 0 : i32
    %22 = arith.cmpi ne, %21, %c0_i32_11 : i32
    scf.if %22 {
      %c0_15 = arith.constant 0 : index
      %c0_16 = arith.constant 0 : index
      %28 = vector.load %arg10[%c0_15, %c0_16] : memref<1x128xf32, #tpu.memory_space<vmem>>, vector<1x128xf32>
      %c0_17 = arith.constant 0 : index
      %c0_18 = arith.constant 0 : index
      %29 = vector.load %arg11[%c0_17, %c0_18] : memref<1x128xf32, #tpu.memory_space<vmem>>, vector<1x128xf32>
      %cst_19 = arith.constant 3.906250e-03 : f32
      %30 = vector.broadcast %cst_19 : f32 to vector<1x128xf32>
      %31 = arith.mulf %28, %30 : vector<1x128xf32>
      %32 = arith.mulf %28, %31 : vector<1x128xf32>
      %33 = arith.subf %29, %32 : vector<1x128xf32>
      %cst_20 = arith.constant 0.00392156886 : f32
      %34 = vector.broadcast %cst_20 : f32 to vector<1x128xf32>
      %35 = arith.mulf %33, %34 : vector<1x128xf32>
      %36 = math.sqrt %35 : vector<1x128xf32>
      %37 = vector.broadcast %31 : vector<1x128xf32> to vector<128x128xf32>
      %38 = arith.subf %11, %37 : vector<128x128xf32>
      %39 = math.rsqrt %36 : vector<1x128xf32>
      %40 = vector.broadcast %39 : vector<1x128xf32> to vector<128x128xf32>
      %41 = arith.mulf %38, %40 : vector<128x128xf32>
      %c0_21 = arith.constant 0 : index
      %c0_22 = arith.constant 0 : index
      %42 = vector.load %arg4[%c0_21, %c0_22] : memref<1x128xf32, #tpu.memory_space<vmem>>, vector<1x128xf32>
      %43 = vector.broadcast %42 : vector<1x128xf32> to vector<128x128xf32>
      %44 = arith.addf %41, %43 : vector<128x128xf32>
      %cst_23 = arith.constant -1.000000e+00 : f32
      %cst_24 = arith.constant 1.000000e+00 : f32
      %45 = vector.broadcast %cst_23 : f32 to vector<128x128xf32>
      %46 = arith.maximumf %45, %44 : vector<128x128xf32>
      %47 = vector.broadcast %cst_24 : f32 to vector<128x128xf32>
      %48 = arith.minimumf %47, %46 : vector<128x128xf32>
      %c0_25 = arith.constant 0 : index
      %c0_26 = arith.constant 0 : index
      %49 = vector.load %arg5[%c0_25, %c0_26] : memref<128x128xf32, #tpu.memory_space<vmem>>, vector<128x128xf32>
      %cst_27 = arith.constant dense<0.000000e+00> : vector<128x128xf32>
      %50 = tpu.matmul %48, %49, %cst_27 {dimension_numbers = #tpu.dot_dimension_numbers<[1], [0], [0], [1], [0, 0, 1, 1], [], []>} : vector<128x128xf32>, vector<128x128xf32>, vector<128x128xf32> -> vector<128x128xf32>
      %c0_28 = arith.constant 0 : index
      %c0_29 = arith.constant 0 : index
      %51 = vector.load %arg6[%c0_28, %c0_29] : memref<128x128xf32, #tpu.memory_space<vmem>>, vector<128x128xf32>
      %52 = arith.mulf %50, %51 : vector<128x128xf32>
      %cst_30 = arith.constant dense<0.000000e+00> : vector<128xf32>
      %53 = vector.multi_reduction <add>, %52, %cst_30 [1] : vector<128x128xf32> to vector<128xf32>
      %54 = vector.shape_cast %53 : vector<128xf32> to vector<128x1xf32>
      %cst_31 = arith.constant 0.000000e+00 : f32
      %55 = vector.broadcast %cst_31 : f32 to vector<128x1xf32>
      %56 = arith.subf %55, %54 : vector<128x1xf32>
      %cst_32 = arith.constant 0.000000e+00 : f32
      %57 = vector.broadcast %cst_32 : f32 to vector<128x1xf32>
      %58 = arith.maximumf %56, %57 : vector<128x1xf32>
      %59 = math.absf %56 : vector<128x1xf32>
      %cst_33 = arith.constant 0.000000e+00 : f32
      %60 = vector.broadcast %cst_33 : f32 to vector<128x1xf32>
      %61 = arith.subf %60, %59 : vector<128x1xf32>
      %62 = math.exp %61 : vector<128x1xf32>
      %cst_34 = arith.constant 1.000000e+00 : f32
      %63 = vector.broadcast %cst_34 : f32 to vector<128x1xf32>
      %64 = arith.addf %63, %62 : vector<128x1xf32>
      %65 = math.log %64 : vector<128x1xf32>
      %66 = arith.addf %58, %65 : vector<128x1xf32>
      %cst_35 = arith.constant 0.000000e+00 : f32
      %67 = vector.broadcast %cst_35 : f32 to vector<128x1xf32>
      %68 = arith.subf %67, %66 : vector<128x1xf32>
      %cst_36 = arith.constant 4.000000e+00 : f32
      %69 = vector.broadcast %cst_36 : f32 to vector<128x1xf32>
      %70 = arith.mulf %69, %68 : vector<128x1xf32>
      %c0_37 = arith.constant 0 : index
      %c0_38 = arith.constant 0 : index
      %71 = vector.load %arg7[%c0_37, %c0_38] : memref<128x128xf32, #tpu.memory_space<vmem>>, vector<128x128xf32>
      %cst_39 = arith.constant 0.000000e+00 : f32
      %72 = vector.broadcast %cst_39 : f32 to vector<128x128xf32>
      %73 = arith.maximumf %50, %72 : vector<128x128xf32>
      %74 = math.absf %50 : vector<128x128xf32>
      %cst_40 = arith.constant 0.000000e+00 : f32
      %75 = vector.broadcast %cst_40 : f32 to vector<128x128xf32>
      %76 = arith.subf %75, %74 : vector<128x128xf32>
      %77 = math.exp %76 : vector<128x128xf32>
      %cst_41 = arith.constant 1.000000e+00 : f32
      %78 = vector.broadcast %cst_41 : f32 to vector<128x128xf32>
      %79 = arith.addf %78, %77 : vector<128x128xf32>
      %80 = math.log %79 : vector<128x128xf32>
      %81 = arith.addf %73, %80 : vector<128x128xf32>
      %82 = arith.mulf %71, %81 : vector<128x128xf32>
      %cst_42 = arith.constant dense<0.000000e+00> : vector<128xf32>
      %83 = vector.multi_reduction <add>, %82, %cst_42 [1] : vector<128x128xf32> to vector<128xf32>
      %84 = vector.shape_cast %83 : vector<128xf32> to vector<128x1xf32>
      %cst_43 = arith.constant 0.000000e+00 : f32
      %85 = vector.broadcast %cst_43 : f32 to vector<128x1xf32>
      %86 = arith.subf %85, %84 : vector<128x1xf32>
      %87 = arith.addf %70, %86 : vector<128x1xf32>
      %cst_44 = arith.constant 6.250000e-01 : f32
      %88 = vector.broadcast %cst_44 : f32 to vector<128x1xf32>
      %89 = arith.mulf %88, %87 : vector<128x1xf32>
      %c0_45 = arith.constant 0 : index
      %c0_46 = arith.constant 0 : index
      %90 = memref.load %arg12[%c0_45, %c0_46] : memref<1x1xf32, #tpu.memory_space<smem>>
      %91 = vector.shape_cast %89 : vector<128x1xf32> to vector<1x128x1xf32>
      %cst_47 = arith.constant dense<0.000000e+00> : vector<1xf32>
      %92 = vector.multi_reduction <add>, %91, %cst_47 [1, 2] : vector<1x128x1xf32> to vector<1xf32>
      %93 = vector.shape_cast %92 : vector<1xf32> to vector<1x1x1xf32>
      %94 = vector.extract %93[0, 0, 0] : f32 from vector<1x1x1xf32>
      %95 = arith.addf %90, %94 : f32
      %c0_48 = arith.constant 0 : index
      %c0_49 = arith.constant 0 : index
      %96 = memref.load %arg12[%c0_48, %c0_49] : memref<1x1xf32, #tpu.memory_space<smem>>
      memref.store %95, %arg12[%c0_48, %c0_49] : memref<1x1xf32, #tpu.memory_space<smem>>
    } else {
    }
    %c1_i32_12 = arith.constant 1 : i32
    %23 = arith.cmpi eq, %arg0, %c1_i32_12 : i32
    %c1_i32_13 = arith.constant 1 : i32
    %24 = arith.cmpi eq, %arg1, %c1_i32_13 : i32
    %25 = arith.andi %23, %24 : i1
    %26 = arith.extui %25 : i1 to i32
    %c0_i32_14 = arith.constant 0 : i32
    %27 = arith.cmpi ne, %26, %c0_i32_14 : i32
    scf.if %27 {
      %c0_15 = arith.constant 0 : index
      %c0_16 = arith.constant 0 : index
      %28 = memref.load %arg12[%c0_15, %c0_16] : memref<1x1xf32, #tpu.memory_space<smem>>
      %cst_17 = arith.constant 3.906250e-03 : f32
      %29 = arith.mulf %28, %cst_17 : f32
      %c0_18 = arith.constant 0 : index
      %c0_19 = arith.constant 0 : index
      %30 = memref.load %arg8[%c0_18, %c0_19] : memref<1x1xf32, #tpu.memory_space<smem>>
      %cst_20 = arith.constant 5.000000e-04 : f32
      %31 = arith.mulf %cst_20, %30 : f32
      %32 = arith.addf %29, %31 : f32
      %c0_21 = arith.constant 0 : index
      %c0_22 = arith.constant 0 : index
      %33 = memref.load %arg9[%c0_21, %c0_22] : memref<1x1xf32, #tpu.memory_space<smem>>
      memref.store %32, %arg9[%c0_21, %c0_22] : memref<1x1xf32, #tpu.memory_space<smem>>
    } else {
    }
    return
  }
  func.func @transform_0(%arg0: i32, %arg1: i32) -> (i32, i32, i32) {
    %c0_i32 = arith.constant 0 : i32
    %c0_i32_0 = arith.constant 0 : i32
    %c0_i32_1 = arith.constant 0 : i32
    return %arg1, %c0_i32, %c0_i32_0 : i32, i32, i32
  }
  func.func @transform_1(%arg0: i32, %arg1: i32) -> (i32, i32) {
    %c0_i32 = arith.constant 0 : i32
    %c0_i32_0 = arith.constant 0 : i32
    %c0_i32_1 = arith.constant 0 : i32
    return %c0_i32, %c0_i32_0 : i32, i32
  }
  func.func @transform_2(%arg0: i32, %arg1: i32) -> (i32, i32) {
    %c0_i32 = arith.constant 0 : i32
    %c0_i32_0 = arith.constant 0 : i32
    %c0_i32_1 = arith.constant 0 : i32
    return %c0_i32, %c0_i32_0 : i32, i32
  }
  func.func @transform_3(%arg0: i32, %arg1: i32) -> (i32, i32) {
    %c0_i32 = arith.constant 0 : i32
    %c0_i32_0 = arith.constant 0 : i32
    %c0_i32_1 = arith.constant 0 : i32
    return %c0_i32, %c0_i32_0 : i32, i32
  }
  func.func @transform_4(%arg0: i32, %arg1: i32) -> (i32, i32) {
    %c0_i32 = arith.constant 0 : i32
    %c0_i32_0 = arith.constant 0 : i32
    return %arg1, %c0_i32 : i32, i32
  }
  func.func @transform_5(%arg0: i32, %arg1: i32) -> (i32, i32) {
    %c0_i32 = arith.constant 0 : i32
    %c0_i32_0 = arith.constant 0 : i32
    return %arg1, %c0_i32 : i32, i32
  }
  func.func @transform_6(%arg0: i32, %arg1: i32) -> (i32, i32) {
    %c0_i32 = arith.constant 0 : i32
    %c0_i32_0 = arith.constant 0 : i32
    %c0_i32_1 = arith.constant 0 : i32
    return %c0_i32, %c0_i32_0 : i32, i32
  }
  func.func @transform_7(%arg0: i32, %arg1: i32) -> (i32, i32) {
    %c0_i32 = arith.constant 0 : i32
    %c0_i32_0 = arith.constant 0 : i32
    %c0_i32_1 = arith.constant 0 : i32
    return %c0_i32, %c0_i32_0 : i32, i32
  }
}

</mosaic_0001>

<llo_original>
// kernel: tpu_custom_call.1
$region0: #{tpu_custom_call.1}
  #allocation0 [shape = 'u32[]', space=smem, size = 0x4, offset = 0x4, fixed_abs, tag = 'smem constant byte address 0x4 - core index']
  #allocation1 [shape = 'u32[72,128]{1,0:T(1,128)}', space=vmem, size = 0x9000, scoped, tag = 'internal scratch']
  #allocation2 [shape = 'f32[1,128]{1,0:T(1,128)}', space=vmem, size = 0x200, scoped, tag = 'scratch operand']
  #allocation3 [shape = 'f32[1,128]{1,0:T(1,128)}', space=vmem, size = 0x200, scoped, tag = 'scratch operand']
  #allocation4 [shape = 'f32[1,1]{1,0:T(1,128)}', space=smem, size = 0x200, scoped, tag = 'scratch operand']
  #allocation5 [shape = 'f32[1,1]{1,0:T(1,128)S(6)}', space=smem, size = 0x200, scoped, tag = 'scoped memory for tpu_custom_call.1']
  %s0 = inlined_call_operand.vmem [shape: f32[256,5,128], index: 0, kind: input, shape index: {}]
  %s1 = inlined_call_operand.vmem [shape: f32[128,128], index: 1, kind: input, shape index: {}]
  %s2 = inlined_call_operand.vmem [shape: f32[1,128], index: 2, kind: input, shape index: {}]
  %s3 = inlined_call_operand.vmem [shape: f32[128,128], index: 3, kind: input, shape index: {}]
  %s4 = inlined_call_operand.vmem [shape: f32[256,128], index: 4, kind: input, shape index: {}]
  %s5 = inlined_call_operand.vmem [shape: f32[256,128], index: 5, kind: input, shape index: {}]
  %s6 = inlined_call_operand.<no memory space> [shape: f32[1,1], index: 6, kind: input, shape index: {}]
  %s7 = inlined_call_operand.hbm [shape: f32[1,1], index: 7, kind: output, shape index: {}]
  %s8 = sld [smem:[#allocation0]]
  $region77: #{tpu_custom_call.1} parent=0
    _
  %s10 = ssub.s32 1, %s8
  %s11 = scalar_select 0, %s10, %s8
  %12 = sst [smem:[#allocation5]] %s6
  $region1: #{tpu_custom_call.1} parent=0
    #allocation6 [shape = 'u8[512]{0}', space=smem, size = 0x200, scoped, tag = 'output window, operand 0, single buffered']
    #allocation7 [shape = 's32[2]{0}', space=sflag, size = 0x8, scoped, tag = 'scoped memory for tpu_custom_call.1']
    %13 = vsyncpa [#allocation7], 0
    loop: start=0, step=1, limit=6
    $region2: #{tpu_custom_call.1} parent=1 // loop_pre_header
      _
    $region3: #{tpu_custom_call.1} parent=1 // loop_header
      %s15 = sphi 0, %s19
      %p16 = scmp.ge.s32.totalorder %s15, 6
      %s22 = sphi 0, %s34
      %s23 = sphi 0, %s30
      %s24 = sphi 0, %s22
      %s25 = sphi 0, %s23
      %s26 = sphi 0, %s24
      %s27 = sphi 0, %s25
      %s37 = sphi 0, %s39
      %s40 = sphi 0, %s37
      %s41 = sphi 0, %s40
      %s57 = sphi 0, %s41
      %s61 = sphi 0, %s61
      %s63 = sphi 0, %s61
      %s64 = sphi 0, %s63
      %s78 = sphi 0, %s64
      %s82 = sphi 0, %s82
      %s84 = sphi 0, %s82
      %s85 = sphi 0, %s84
      %s99 = sphi 0, %s85
      %s103 = sphi 0, %s103
      %s105 = sphi 0, %s103
      %s106 = sphi 0, %s105
      %s120 = sphi 0, %s106
      %s126 = sphi 0, %s128
      %s129 = sphi 0, %s126
      %s130 = sphi 0, %s129
      %s146 = sphi 0, %s130
      %s152 = sphi 0, %s154
      %s155 = sphi 0, %s152
      %s156 = sphi 0, %s155
      %s172 = sphi 0, %s156
      %s176 = sphi 0, %s176
      %s178 = sphi 0, %s176
      %s179 = sphi 0, %s178
      %s193 = sphi 0, %s179
      %s197 = sphi 0, %s197
      %s199 = sphi 0, %s197
      %s200 = sphi 0, %s199
      %s214 = sphi 0, %s200
    $region4: #{tpu_custom_call.1} parent=1 // loop_header_branch
      %18 = sbr.rel (%p16) target = $region8
    $region5: #{tpu_custom_call.1} parent=1 // loop_body
      %s20 = ssub.s32 %s15, 1
      %s21 = ssub.s32 %s15, 2
      %s28 = sadd.s32 1, %s23
      %p29 = scmp.ge.s32.totalorder %s28, 2
      %s30 = scalar_select %p29, 0, %s28
      %s31 = sadd.s32 1, %s22
      %s32 = scalar_select %p29, %s31, %s22
      %p33 = scmp.ge.s32.totalorder %s32, 2
      %s34 = scalar_select %p33, 0, %s32
      %s35 = ssub.s32 %s23, %s30
      %p36 = scmp.eq.s32.totalorder %s35, 0
      %s38 = sadd.s32 %s37, 1
      %s39 = scalar_select %p36, %s37, %s38
      %p42 = pneg %p36
      %p43 = scmp.eq.s32.totalorder %s15, 3
      %p44 = por %p42, %p43
      %p45 = scmp.ne.s32.totalorder %s37, %s40
      %p46 = scmp.eq.s32.totalorder %s15, 0
      %p47 = por %p45, %p46
      %p48 = scmp.ne.s32.totalorder %s37, %s40
      %p49 = scmp.eq.s32.totalorder %s20, 3
      %p50 = por %p48, %p49
      %p51 = scmp.ne.s32.totalorder %s40, %s41
      %p52 = scmp.eq.s32.totalorder %s20, 0
      %p53 = por %p51, %p52
      %p54 = scmp.ne.s32.totalorder %s40, %s41
      %p55 = scmp.eq.s32.totalorder %s21, 3
      %p56 = por %p54, %p55
      %p58 = scmp.ne.s32.totalorder %s41, %s57
      %p59 = scmp.eq.s32.totalorder %s21, 0
      %p60 = por %p58, %p59
      %s62 = sadd.s32 %s61, 1
      %p65 = scmp.eq.s32.totalorder %s15, 3
      %p66 = scmp.ne.s32.totalorder %s61, %s63
      %p67 = scmp.eq.s32.totalorder %s15, 0
      %p68 = por %p66, %p67
      %p69 = scmp.ne.s32.totalorder %s61, %s63
      %p70 = scmp.eq.s32.totalorder %s20, 3
      %p71 = por %p69, %p70
      %p72 = scmp.ne.s32.totalorder %s63, %s64
      %p73 = scmp.eq.s32.totalorder %s20, 0
      %p74 = por %p72, %p73
      %p75 = scmp.ne.s32.totalorder %s63, %s64
      %p76 = scmp.eq.s32.totalorder %s21, 3
      %p77 = por %p75, %p76
      %p79 = scmp.ne.s32.totalorder %s64, %s78
      %p80 = scmp.eq.s32.totalorder %s21, 0
      %p81 = por %p79, %p80
      %s83 = sadd.s32 %s82, 1
      %p86 = scmp.eq.s32.totalorder %s15, 3
      %p87 = scmp.ne.s32.totalorder %s82, %s84
      %p88 = scmp.eq.s32.totalorder %s15, 0
      %p89 = por %p87, %p88
      %p90 = scmp.ne.s32.totalorder %s82, %s84
      %p91 = scmp.eq.s32.totalorder %s20, 3
      %p92 = por %p90, %p91
      %p93 = scmp.ne.s32.totalorder %s84, %s85
      %p94 = scmp.eq.s32.totalorder %s20, 0
      %p95 = por %p93, %p94
      %p96 = scmp.ne.s32.totalorder %s84, %s85
      %p97 = scmp.eq.s32.totalorder %s21, 3
      %p98 = por %p96, %p97
      %p100 = scmp.ne.s32.totalorder %s85, %s99
      %p101 = scmp.eq.s32.totalorder %s21, 0
      %p102 = por %p100, %p101
      %s104 = sadd.s32 %s103, 1
      %p107 = scmp.eq.s32.totalorder %s15, 3
      %p108 = scmp.ne.s32.totalorder %s103, %s105
      %p109 = scmp.eq.s32.totalorder %s15, 0
      %p110 = por %p108, %p109
      %p111 = scmp.ne.s32.totalorder %s103, %s105
      %p112 = scmp.eq.s32.totalorder %s20, 3
      %p113 = por %p111, %p112
      %p114 = scmp.ne.s32.totalorder %s105, %s106
      %p115 = scmp.eq.s32.totalorder %s20, 0
      %p116 = por %p114, %p115
      %p117 = scmp.ne.s32.totalorder %s105, %s106
      %p118 = scmp.eq.s32.totalorder %s21, 3
      %p119 = por %p117, %p118
      %p121 = scmp.ne.s32.totalorder %s106, %s120
      %p122 = scmp.eq.s32.totalorder %s21, 0
      %p123 = por %p121, %p122
      %s124 = ssub.s32 %s23, %s30
      %p125 = scmp.eq.s32.totalorder %s124, 0
      %s127 = sadd.s32 %s126, 1
      %s128 = scalar_select %p125, %s126, %s127
      %p131 = pneg %p125
      %p132 = scmp.eq.s32.totalorder %s15, 3
      %p133 = por %p131, %p132
      %p134 = scmp.ne.s32.totalorder %s126, %s129
      %p135 = scmp.eq.s32.totalorder %s15, 0
      %p136 = por %p134, %p135
      %p137 = scmp.ne.s32.totalorder %s126, %s129
      %p138 = scmp.eq.s32.totalorder %s20, 3
      %p139 = por %p137, %p138
      %p140 = scmp.ne.s32.totalorder %s129, %s130
      %p141 = scmp.eq.s32.totalorder %s20, 0
      %p142 = por %p140, %p141
      %p143 = scmp.ne.s32.totalorder %s129, %s130
      %p144 = scmp.eq.s32.totalorder %s21, 3
      %p145 = por %p143, %p144
      %p147 = scmp.ne.s32.totalorder %s130, %s146
      %p148 = scmp.eq.s32.totalorder %s21, 0
      %p149 = por %p147, %p148
      %s150 = ssub.s32 %s23, %s30
      %p151 = scmp.eq.s32.totalorder %s150, 0
      %s153 = sadd.s32 %s152, 1
      %s154 = scalar_select %p151, %s152, %s153
      %p157 = pneg %p151
      %p158 = scmp.eq.s32.totalorder %s15, 3
      %p159 = por %p157, %p158
      %p160 = scmp.ne.s32.totalorder %s152, %s155
      %p161 = scmp.eq.s32.totalorder %s15, 0
      %p162 = por %p160, %p161
      %p163 = scmp.ne.s32.totalorder %s152, %s155
      %p164 = scmp.eq.s32.totalorder %s20, 3
      %p165 = por %p163, %p164
      %p166 = scmp.ne.s32.totalorder %s155, %s156
      %p167 = scmp.eq.s32.totalorder %s20, 0
      %p168 = por %p166, %p167
      %p169 = scmp.ne.s32.totalorder %s155, %s156
      %p170 = scmp.eq.s32.totalorder %s21, 3
      %p171 = por %p169, %p170
      %p173 = scmp.ne.s32.totalorder %s156, %s172
      %p174 = scmp.eq.s32.totalorder %s21, 0
      %p175 = por %p173, %p174
      %s177 = sadd.s32 %s176, 1
      %p180 = scmp.eq.s32.totalorder %s15, 3
      %p181 = scmp.ne.s32.totalorder %s176, %s178
      %p182 = scmp.eq.s32.totalorder %s15, 0
      %p183 = por %p181, %p182
      %p184 = scmp.ne.s32.totalorder %s176, %s178
      %p185 = scmp.eq.s32.totalorder %s20, 3
      %p186 = por %p184, %p185
      %p187 = scmp.ne.s32.totalorder %s178, %s179
      %p188 = scmp.eq.s32.totalorder %s20, 0
      %p189 = por %p187, %p188
      %p190 = scmp.ne.s32.totalorder %s178, %s179
      %p191 = scmp.eq.s32.totalorder %s21, 3
      %p192 = por %p190, %p191
      %p194 = scmp.ne.s32.totalorder %s179, %s193
      %p195 = scmp.eq.s32.totalorder %s21, 0
      %p196 = por %p194, %p195
      %s198 = sadd.s32 %s197, 1
      %p201 = scmp.eq.s32.totalorder %s15, 3
      %p202 = scmp.ne.s32.totalorder %s197, %s199
      %p203 = scmp.eq.s32.totalorder %s15, 0
      %p204 = por %p202, %p203
      %p205 = scmp.ne.s32.totalorder %s197, %s199
      %p206 = scmp.eq.s32.totalorder %s20, 3
      %p207 = por %p205, %p206
      %p208 = scmp.ne.s32.totalorder %s199, %s200
      %p209 = scmp.eq.s32.totalorder %s20, 0
      %p210 = por %p208, %p209
      %p211 = scmp.ne.s32.totalorder %s199, %s200
      %p212 = scmp.eq.s32.totalorder %s21, 3
      %p213 = por %p211, %p212
      %p215 = scmp.ne.s32.totalorder %s200, %s214
      %p216 = scmp.eq.s32.totalorder %s21, 0
      %p217 = por %p215, %p216
      %p218 = scmp.le.s32.totalorder 1, %s15
      %p219 = scmp.lt.s32.totalorder %s15, 5
      %p220 = pnand %p218, %p219
      %p221 = pneg %p220
      // Predicated region
      $region9: #{tpu_custom_call.1} parent=5 // pred_check
        _
      $region10: #{tpu_custom_call.1} parent=5 // pred_check_branch
        %223 = sbr.rel (%p220) target = $region12
      $region11: #{tpu_custom_call.1} parent=5 // pred_region
        %s224 = ssub.s32 %s15, 1
        // Predicated region
        $region13: #{tpu_custom_call.1} parent=11 // pred_check
          %p225 = pneg %p74
        $region14: #{tpu_custom_call.1} parent=11 // pred_check_branch
          %227 = sbr.rel (%p225) target = $region16
        $region15: #{tpu_custom_call.1} parent=11 // pred_region
          _
        $region16: #{tpu_custom_call.1} parent=11 // pred_fallthru
          _
        // Predicated region
        $region17: #{tpu_custom_call.1} parent=11 // pred_check
          %p228 = pneg %p95
        $region18: #{tpu_custom_call.1} parent=11 // pred_check_branch
          %230 = sbr.rel (%p228) target = $region20
        $region19: #{tpu_custom_call.1} parent=11 // pred_region
          _
        $region20: #{tpu_custom_call.1} parent=11 // pred_fallthru
          _
        // Predicated region
        $region21: #{tpu_custom_call.1} parent=11 // pred_check
          %p231 = pneg %p116
        $region22: #{tpu_custom_call.1} parent=11 // pred_check_branch
          %233 = sbr.rel (%p231) target = $region24
        $region23: #{tpu_custom_call.1} parent=11 // pred_region
          _
        $region24: #{tpu_custom_call.1} parent=11 // pred_fallthru
          _
        // Predicated region
        $region25: #{tpu_custom_call.1} parent=11 // pred_check
          %p234 = pneg %p189
        $region26: #{tpu_custom_call.1} parent=11 // pred_check_branch
          %236 = sbr.rel (%p234) target = $region28
        $region27: #{tpu_custom_call.1} parent=11 // pred_region
          _
        $region28: #{tpu_custom_call.1} parent=11 // pred_fallthru
          _
      $region12: #{tpu_custom_call.1} parent=5 // pred_fallthru
        _
      %p237 = scmp.lt.s32.totalorder %s15, 4
      // Predicated region
      $region29: #{tpu_custom_call.1} parent=5 // pred_check
        %p238 = pneg %p237
      $region30: #{tpu_custom_call.1} parent=5 // pred_check_branch
        %240 = sbr.rel (%p238) target = $region32
      $region31: #{tpu_custom_call.1} parent=5 // pred_region
        // Predicated region
        $region33: #{tpu_custom_call.1} parent=31 // pred_check
          %p241 = pneg %p47
        $region34: #{tpu_custom_call.1} parent=31 // pred_check_branch
          %243 = sbr.rel (%p241) target = $region36
        $region35: #{tpu_custom_call.1} parent=31 // pred_region
          %s244 = smul.u32 128, %s23
          %p245 = scmp.lt.s32.totalorder %s244, 255
          %s246 = scalar_select %p245, %s244, 255
          %s247 = smul.addr %s246, 8
          %s248 = scalar_lea.vmem %s0, %s247
          %s249 = smul.u32 128, %s23
        $region36: #{tpu_custom_call.1} parent=31 // pred_fallthru
          _
        // Predicated region
        $region37: #{tpu_custom_call.1} parent=31 // pred_check
          %p250 = pneg %p136
        $region38: #{tpu_custom_call.1} parent=31 // pred_check_branch
          %252 = sbr.rel (%p250) target = $region40
        $region39: #{tpu_custom_call.1} parent=31 // pred_region
          %s253 = smul.u32 16, %s23
          %p254 = scmp.lt.s32.totalorder %s253, 31
          %s255 = scalar_select %p254, %s253, 31
          %s256 = smul.addr %s255, 8
          %s257 = scalar_lea.vmem %s4, %s256
          %s258 = smul.u32 16, %s23
        $region40: #{tpu_custom_call.1} parent=31 // pred_fallthru
          _
        // Predicated region
        $region41: #{tpu_custom_call.1} parent=31 // pred_check
          %p259 = pneg %p162
        $region42: #{tpu_custom_call.1} parent=31 // pred_check_branch
          %261 = sbr.rel (%p259) target = $region44
        $region43: #{tpu_custom_call.1} parent=31 // pred_region
          %s262 = smul.u32 16, %s23
          %p263 = scmp.lt.s32.totalorder %s262, 31
          %s264 = scalar_select %p263, %s262, 31
          %s265 = smul.addr %s264, 8
          %s266 = scalar_lea.vmem %s5, %s265
          %s267 = smul.u32 16, %s23
        $region44: #{tpu_custom_call.1} parent=31 // pred_fallthru
          _
      $region32: #{tpu_custom_call.1} parent=5 // pred_fallthru
        _
      %p268 = scmp.le.s32.totalorder 1, %s15
      %p269 = scmp.lt.s32.totalorder %s15, 5
      %p270 = pnand %p268, %p269
      %p271 = pneg %p270
      // Predicated region
      $region45: #{tpu_custom_call.1} parent=5 // pred_check
        _
      $region46: #{tpu_custom_call.1} parent=5 // pred_check_branch
        %273 = sbr.rel (%p270) target = $region48
      $region47: #{tpu_custom_call.1} parent=5 // pred_region
        %s274 = ssub.s32 %s15, 1
        %s275 = smul.u32 128, %s25
        %p276 = scmp.lt.s32.totalorder %s275, 255
        %s277 = scalar_select %p276, %s275, 255
        %s278 = smul.addr %s277, 8
        %s279 = scalar_lea.vmem %s0, %s278
        %p280 = pneg %p53
        %p281 = pneg %p50
        %p282 = pneg %p74
        %p283 = pneg %p71
        %p284 = pneg %p95
        %p285 = pneg %p92
        %p286 = pneg %p116
        %p287 = pneg %p113
        %s288 = smul.u32 16, %s25
        %p289 = scmp.lt.s32.totalorder %s288, 31
        %s290 = scalar_select %p289, %s288, 31
        %s291 = smul.addr %s290, 8
        %s292 = scalar_lea.vmem %s4, %s291
        %p293 = pneg %p142
        %p294 = pneg %p139
        %s295 = smul.u32 16, %s25
        %p296 = scmp.lt.s32.totalorder %s295, 31
        %s297 = scalar_select %p296, %s295, 31
        %s298 = smul.addr %s297, 8
        %s299 = scalar_lea.vmem %s5, %s298
        %p300 = pneg %p168
        %p301 = pneg %p165
        %p302 = pneg %p189
        %p303 = pneg %p186
        %p304 = pneg %p210
        %p305 = pneg %p207
        %s306 = smul.u32 128, %s25
        %p307 = scmp.lt.s32.totalorder %s306, 255
        %s308 = scalar_select %p307, %s306, 255
        %s309 = smul.addr %s308, 8
        %s310 = scalar_lea.vmem %s0, %s309
        %s311 = smul.u32 128, %s25
        %s312 = smul.u32 16, %s25
        %p313 = scmp.lt.s32.totalorder %s312, 31
        %s314 = scalar_select %p313, %s312, 31
        %s315 = smul.addr %s314, 8
        %s316 = scalar_lea.vmem %s4, %s315
        %s317 = smul.u32 16, %s25
        %s318 = smul.u32 16, %s25
        %p319 = scmp.lt.s32.totalorder %s318, 31
        %s320 = scalar_select %p319, %s318, 31
        %s321 = smul.addr %s320, 8
        %s322 = scalar_lea.vmem %s5, %s321
        %s323 = smul.u32 16, %s25
        %v324 = vld [vmem:[%s310] sm:$0x1f]
        %v325 = vld [vmem:[%s310 + $0x8] sm:$0x1f]
        %v326 = vld [vmem:[%s310 + $0x10] sm:$0x1f]
        %v327 = vld [vmem:[%s310 + $0x18] sm:$0x1f]
        %v328 = vld [vmem:[%s310 + $0x20] sm:$0x1f]
        %v329 = vld [vmem:[%s310 + $0x28] sm:$0x1f]
        %v330 = vld [vmem:[%s310 + $0x30] sm:$0x1f]
        %v331 = vld [vmem:[%s310 + $0x38] sm:$0x1f]
        %v332 = vld [vmem:[%s310 + $0x40] sm:$0x1f]
        %v333 = vld [vmem:[%s310 + $0x48] sm:$0x1f]
        %v334 = vld [vmem:[%s310 + $0x50] sm:$0x1f]
        %v335 = vld [vmem:[%s310 + $0x58] sm:$0x1f]
        %v336 = vld [vmem:[%s310 + $0x60] sm:$0x1f]
        %v337 = vld [vmem:[%s310 + $0x68] sm:$0x1f]
        %v338 = vld [vmem:[%s310 + $0x70] sm:$0x1f]
        %v339 = vld [vmem:[%s310 + $0x78] sm:$0x1f]
        %v340 = vld [vmem:[%s310 + $0x80] sm:$0x1f]
        %v341 = vld [vmem:[%s310 + $0x88] sm:$0x1f]
        %v342 = vld [vmem:[%s310 + $0x90] sm:$0x1f]
        %v343 = vld [vmem:[%s310 + $0x98] sm:$0x1f]
        %v344 = vld [vmem:[%s310 + $0xa0] sm:$0x1f]
        %v345 = vld [vmem:[%s310 + $0xa8] sm:$0x1f]
        %v346 = vld [vmem:[%s310 + $0xb0] sm:$0x1f]
        %v347 = vld [vmem:[%s310 + $0xb8] sm:$0x1f]
        %v348 = vld [vmem:[%s310 + $0xc0] sm:$0x1f]
        %v349 = vld [vmem:[%s310 + $0xc8] sm:$0x1f]
        %v350 = vld [vmem:[%s310 + $0xd0] sm:$0x1f]
        %v351 = vld [vmem:[%s310 + $0xd8] sm:$0x1f]
        %v352 = vld [vmem:[%s310 + $0xe0] sm:$0x1f]
        %v353 = vld [vmem:[%s310 + $0xe8] sm:$0x1f]
        %v354 = vld [vmem:[%s310 + $0xf0] sm:$0x1f]
        %v355 = vld [vmem:[%s310 + $0xf8] sm:$0x1f]
        %v356 = vld [vmem:[%s310 + $0x100] sm:$0x1f]
        %v357 = vld [vmem:[%s310 + $0x108] sm:$0x1f]
        %v358 = vld [vmem:[%s310 + $0x110] sm:$0x1f]
        %v359 = vld [vmem:[%s310 + $0x118] sm:$0x1f]
        %v360 = vld [vmem:[%s310 + $0x120] sm:$0x1f]
        %v361 = vld [vmem:[%s310 + $0x128] sm:$0x1f]
        %v362 = vld [vmem:[%s310 + $0x130] sm:$0x1f]
        %v363 = vld [vmem:[%s310 + $0x138] sm:$0x1f]
        %v364 = vld [vmem:[%s310 + $0x140] sm:$0x1f]
        %v365 = vld [vmem:[%s310 + $0x148] sm:$0x1f]
        %v366 = vld [vmem:[%s310 + $0x150] sm:$0x1f]
        %v367 = vld [vmem:[%s310 + $0x158] sm:$0x1f]
        %v368 = vld [vmem:[%s310 + $0x160] sm:$0x1f]
        %v369 = vld [vmem:[%s310 + $0x168] sm:$0x1f]
        %v370 = vld [vmem:[%s310 + $0x170] sm:$0x1f]
        %v371 = vld [vmem:[%s310 + $0x178] sm:$0x1f]
        %v372 = vld [vmem:[%s310 + $0x180] sm:$0x1f]
        %v373 = vld [vmem:[%s310 + $0x188] sm:$0x1f]
        %v374 = vld [vmem:[%s310 + $0x190] sm:$0x1f]
        %v375 = vld [vmem:[%s310 + $0x198] sm:$0x1f]
        %v376 = vld [vmem:[%s310 + $0x1a0] sm:$0x1f]
        %v377 = vld [vmem:[%s310 + $0x1a8] sm:$0x1f]
        %v378 = vld [vmem:[%s310 + $0x1b0] sm:$0x1f]
        %v379 = vld [vmem:[%s310 + $0x1b8] sm:$0x1f]
        %v380 = vld [vmem:[%s310 + $0x1c0] sm:$0x1f]
        %v381 = vld [vmem:[%s310 + $0x1c8] sm:$0x1f]
        %v382 = vld [vmem:[%s310 + $0x1d0] sm:$0x1f]
        %v383 = vld [vmem:[%s310 + $0x1d8] sm:$0x1f]
        %v384 = vld [vmem:[%s310 + $0x1e0] sm:$0x1f]
        %v385 = vld [vmem:[%s310 + $0x1e8] sm:$0x1f]
        %v386 = vld [vmem:[%s310 + $0x1f0] sm:$0x1f]
        %v387 = vld [vmem:[%s310 + $0x1f8] sm:$0x1f]
        %v388 = vld [vmem:[%s310 + $0x200] sm:$0x1f]
        %v389 = vld [vmem:[%s310 + $0x208] sm:$0x1f]
        %v390 = vld [vmem:[%s310 + $0x210] sm:$0x1f]
        %v391 = vld [vmem:[%s310 + $0x218] sm:$0x1f]
        %v392 = vld [vmem:[%s310 + $0x220] sm:$0x1f]
        %v393 = vld [vmem:[%s310 + $0x228] sm:$0x1f]
        %v394 = vld [vmem:[%s310 + $0x230] sm:$0x1f]
        %v395 = vld [vmem:[%s310 + $0x238] sm:$0x1f]
        %v396 = vld [vmem:[%s310 + $0x240] sm:$0x1f]
        %v397 = vld [vmem:[%s310 + $0x248] sm:$0x1f]
        %v398 = vld [vmem:[%s310 + $0x250] sm:$0x1f]
        %v399 = vld [vmem:[%s310 + $0x258] sm:$0x1f]
        %v400 = vld [vmem:[%s310 + $0x260] sm:$0x1f]
        %v401 = vld [vmem:[%s310 + $0x268] sm:$0x1f]
        %v402 = vld [vmem:[%s310 + $0x270] sm:$0x1f]
        %v403 = vld [vmem:[%s310 + $0x278] sm:$0x1f]
        %v404 = vld [vmem:[%s310 + $0x280] sm:$0x1f]
        %v405 = vld [vmem:[%s310 + $0x288] sm:$0x1f]
        %v406 = vld [vmem:[%s310 + $0x290] sm:$0x1f]
        %v407 = vld [vmem:[%s310 + $0x298] sm:$0x1f]
        %v408 = vld [vmem:[%s310 + $0x2a0] sm:$0x1f]
        %v409 = vld [vmem:[%s310 + $0x2a8] sm:$0x1f]
        %v410 = vld [vmem:[%s310 + $0x2b0] sm:$0x1f]
        %v411 = vld [vmem:[%s310 + $0x2b8] sm:$0x1f]
        %v412 = vld [vmem:[%s310 + $0x2c0] sm:$0x1f]
        %v413 = vld [vmem:[%s310 + $0x2c8] sm:$0x1f]
        %v414 = vld [vmem:[%s310 + $0x2d0] sm:$0x1f]
        %v415 = vld [vmem:[%s310 + $0x2d8] sm:$0x1f]
        %v416 = vld [vmem:[%s310 + $0x2e0] sm:$0x1f]
        %v417 = vld [vmem:[%s310 + $0x2e8] sm:$0x1f]
        %v418 = vld [vmem:[%s310 + $0x2f0] sm:$0x1f]
        %v419 = vld [vmem:[%s310 + $0x2f8] sm:$0x1f]
        %v420 = vld [vmem:[%s310 + $0x300] sm:$0x1f]
        %v421 = vld [vmem:[%s310 + $0x308] sm:$0x1f]
        %v422 = vld [vmem:[%s310 + $0x310] sm:$0x1f]
        %v423 = vld [vmem:[%s310 + $0x318] sm:$0x1f]
        %v424 = vld [vmem:[%s310 + $0x320] sm:$0x1f]
        %v425 = vld [vmem:[%s310 + $0x328] sm:$0x1f]
        %v426 = vld [vmem:[%s310 + $0x330] sm:$0x1f]
        %v427 = vld [vmem:[%s310 + $0x338] sm:$0x1f]
        %v428 = vld [vmem:[%s310 + $0x340] sm:$0x1f]
        %v429 = vld [vmem:[%s310 + $0x348] sm:$0x1f]
        %v430 = vld [vmem:[%s310 + $0x350] sm:$0x1f]
        %v431 = vld [vmem:[%s310 + $0x358] sm:$0x1f]
        %v432 = vld [vmem:[%s310 + $0x360] sm:$0x1f]
        %v433 = vld [vmem:[%s310 + $0x368] sm:$0x1f]
        %v434 = vld [vmem:[%s310 + $0x370] sm:$0x1f]
        %v435 = vld [vmem:[%s310 + $0x378] sm:$0x1f]
        %v436 = vld [vmem:[%s310 + $0x380] sm:$0x1f]
        %v437 = vld [vmem:[%s310 + $0x388] sm:$0x1f]
        %v438 = vld [vmem:[%s310 + $0x390] sm:$0x1f]
        %v439 = vld [vmem:[%s310 + $0x398] sm:$0x1f]
        %v440 = vld [vmem:[%s310 + $0x3a0] sm:$0x1f]
        %v441 = vld [vmem:[%s310 + $0x3a8] sm:$0x1f]
        %v442 = vld [vmem:[%s310 + $0x3b0] sm:$0x1f]
        %v443 = vld [vmem:[%s310 + $0x3b8] sm:$0x1f]
        %v444 = vld [vmem:[%s310 + $0x3c0] sm:$0x1f]
        %v445 = vld [vmem:[%s310 + $0x3c8] sm:$0x1f]
        %v446 = vld [vmem:[%s310 + $0x3d0] sm:$0x1f]
        %v447 = vld [vmem:[%s310 + $0x3d8] sm:$0x1f]
        %v448 = vld [vmem:[%s310 + $0x3e0] sm:$0x1f]
        %v449 = vld [vmem:[%s310 + $0x3e8] sm:$0x1f]
        %v450 = vld [vmem:[%s310 + $0x3f0] sm:$0x1f]
        %v451 = vld [vmem:[%s310 + $0x3f8] sm:$0x1f]
        %vm452 = vcmask 1044480
        %v453 = vsel %vm452, %v324, 0.0
        %v454 = vrot.slane %v453, 4
        %v455 = vadd.f32 %v453, %v454
        %v456 = vrot.slane %v455, 2
        %v457 = vadd.f32 %v455, %v456
        %v458 = vrot.slane %v457, 1
        %v459 = vadd.f32 %v457, %v458
        %v460 = vsel %vm452, %v325, 0.0
        %v461 = vrot.slane %v460, 4
        %v462 = vadd.f32 %v460, %v461
        %v463 = vrot.slane %v462, 2
        %v464 = vadd.f32 %v462, %v463
        %v465 = vrot.slane %v464, 1
        %v466 = vadd.f32 %v464, %v465
        %v467 = vsel %vm452, %v326, 0.0
        %v468 = vrot.slane %v467, 4
        %v469 = vadd.f32 %v467, %v468
        %v470 = vrot.slane %v469, 2
        %v471 = vadd.f32 %v469, %v470
        %v472 = vrot.slane %v471, 1
        %v473 = vadd.f32 %v471, %v472
        %v474 = vsel %vm452, %v327, 0.0
        %v475 = vrot.slane %v474, 4
        %v476 = vadd.f32 %v474, %v475
        %v477 = vrot.slane %v476, 2
        %v478 = vadd.f32 %v476, %v477
        %v479 = vrot.slane %v478, 1
        %v480 = vadd.f32 %v478, %v479
        %v481 = vsel %vm452, %v328, 0.0
        %v482 = vrot.slane %v481, 4
        %v483 = vadd.f32 %v481, %v482
        %v484 = vrot.slane %v483, 2
        %v485 = vadd.f32 %v483, %v484
        %v486 = vrot.slane %v485, 1
        %v487 = vadd.f32 %v485, %v486
        %v488 = vsel %vm452, %v329, 0.0
        %v489 = vrot.slane %v488, 4
        %v490 = vadd.f32 %v488, %v489
        %v491 = vrot.slane %v490, 2
        %v492 = vadd.f32 %v490, %v491
        %v493 = vrot.slane %v492, 1
        %v494 = vadd.f32 %v492, %v493
        %v495 = vsel %vm452, %v330, 0.0
        %v496 = vrot.slane %v495, 4
        %v497 = vadd.f32 %v495, %v496
        %v498 = vrot.slane %v497, 2
        %v499 = vadd.f32 %v497, %v498
        %v500 = vrot.slane %v499, 1
        %v501 = vadd.f32 %v499, %v500
        %v502 = vsel %vm452, %v331, 0.0
        %v503 = vrot.slane %v502, 4
        %v504 = vadd.f32 %v502, %v503
        %v505 = vrot.slane %v504, 2
        %v506 = vadd.f32 %v504, %v505
        %v507 = vrot.slane %v506, 1
        %v508 = vadd.f32 %v506, %v507
        %v509 = vsel %vm452, %v332, 0.0
        %v510 = vrot.slane %v509, 4
        %v511 = vadd.f32 %v509, %v510
        %v512 = vrot.slane %v511, 2
        %v513 = vadd.f32 %v511, %v512
        %v514 = vrot.slane %v513, 1
        %v515 = vadd.f32 %v513, %v514
        %v516 = vsel %vm452, %v333, 0.0
        %v517 = vrot.slane %v516, 4
        %v518 = vadd.f32 %v516, %v517
        %v519 = vrot.slane %v518, 2
        %v520 = vadd.f32 %v518, %v519
        %v521 = vrot.slane %v520, 1
        %v522 = vadd.f32 %v520, %v521
        %v523 = vsel %vm452, %v334, 0.0
        %v524 = vrot.slane %v523, 4
        %v525 = vadd.f32 %v523, %v524
        %v526 = vrot.slane %v525, 2
        %v527 = vadd.f32 %v525, %v526
        %v528 = vrot.slane %v527, 1
        %v529 = vadd.f32 %v527, %v528
        %v530 = vsel %vm452, %v335, 0.0
        %v531 = vrot.slane %v530, 4
        %v532 = vadd.f32 %v530, %v531
        %v533 = vrot.slane %v532, 2
        %v534 = vadd.f32 %v532, %v533
        %v535 = vrot.slane %v534, 1
        %v536 = vadd.f32 %v534, %v535
        %v537 = vsel %vm452, %v336, 0.0
        %v538 = vrot.slane %v537, 4
        %v539 = vadd.f32 %v537, %v538
        %v540 = vrot.slane %v539, 2
        %v541 = vadd.f32 %v539, %v540
        %v542 = vrot.slane %v541, 1
        %v543 = vadd.f32 %v541, %v542
        %v544 = vsel %vm452, %v337, 0.0
        %v545 = vrot.slane %v544, 4
        %v546 = vadd.f32 %v544, %v545
        %v547 = vrot.slane %v546, 2
        %v548 = vadd.f32 %v546, %v547
        %v549 = vrot.slane %v548, 1
        %v550 = vadd.f32 %v548, %v549
        %v551 = vsel %vm452, %v338, 0.0
        %v552 = vrot.slane %v551, 4
        %v553 = vadd.f32 %v551, %v552
        %v554 = vrot.slane %v553, 2
        %v555 = vadd.f32 %v553, %v554
        %v556 = vrot.slane %v555, 1
        %v557 = vadd.f32 %v555, %v556
        %v558 = vsel %vm452, %v339, 0.0
        %v559 = vrot.slane %v558, 4
        %v560 = vadd.f32 %v558, %v559
        %v561 = vrot.slane %v560, 2
        %v562 = vadd.f32 %v560, %v561
        %v563 = vrot.slane %v562, 1
        %v564 = vadd.f32 %v562, %v563
        %v565 = vsel %vm452, %v340, 0.0
        %v566 = vrot.slane %v565, 4
        %v567 = vadd.f32 %v565, %v566
        %v568 = vrot.slane %v567, 2
        %v569 = vadd.f32 %v567, %v568
        %v570 = vrot.slane %v569, 1
        %v571 = vadd.f32 %v569, %v570
        %v572 = vsel %vm452, %v341, 0.0
        %v573 = vrot.slane %v572, 4
        %v574 = vadd.f32 %v572, %v573
        %v575 = vrot.slane %v574, 2
        %v576 = vadd.f32 %v574, %v575
        %v577 = vrot.slane %v576, 1
        %v578 = vadd.f32 %v576, %v577
        %v579 = vsel %vm452, %v342, 0.0
        %v580 = vrot.slane %v579, 4
        %v581 = vadd.f32 %v579, %v580
        %v582 = vrot.slane %v581, 2
        %v583 = vadd.f32 %v581, %v582
        %v584 = vrot.slane %v583, 1
        %v585 = vadd.f32 %v583, %v584
        %v586 = vsel %vm452, %v343, 0.0
        %v587 = vrot.slane %v586, 4
        %v588 = vadd.f32 %v586, %v587
        %v589 = vrot.slane %v588, 2
        %v590 = vadd.f32 %v588, %v589
        %v591 = vrot.slane %v590, 1
        %v592 = vadd.f32 %v590, %v591
        %v593 = vsel %vm452, %v344, 0.0
        %v594 = vrot.slane %v593, 4
        %v595 = vadd.f32 %v593, %v594
        %v596 = vrot.slane %v595, 2
        %v597 = vadd.f32 %v595, %v596
        %v598 = vrot.slane %v597, 1
        %v599 = vadd.f32 %v597, %v598
        %v600 = vsel %vm452, %v345, 0.0
        %v601 = vrot.slane %v600, 4
        %v602 = vadd.f32 %v600, %v601
        %v603 = vrot.slane %v602, 2
        %v604 = vadd.f32 %v602, %v603
        %v605 = vrot.slane %v604, 1
        %v606 = vadd.f32 %v604, %v605
        %v607 = vsel %vm452, %v346, 0.0
        %v608 = vrot.slane %v607, 4
        %v609 = vadd.f32 %v607, %v608
        %v610 = vrot.slane %v609, 2
        %v611 = vadd.f32 %v609, %v610
        %v612 = vrot.slane %v611, 1
        %v613 = vadd.f32 %v611, %v612
        %v614 = vsel %vm452, %v347, 0.0
        %v615 = vrot.slane %v614, 4
        %v616 = vadd.f32 %v614, %v615
        %v617 = vrot.slane %v616, 2
        %v618 = vadd.f32 %v616, %v617
        %v619 = vrot.slane %v618, 1
        %v620 = vadd.f32 %v618, %v619
        %v621 = vsel %vm452, %v348, 0.0
        %v622 = vrot.slane %v621, 4
        %v623 = vadd.f32 %v621, %v622
        %v624 = vrot.slane %v623, 2
        %v625 = vadd.f32 %v623, %v624
        %v626 = vrot.slane %v625, 1
        %v627 = vadd.f32 %v625, %v626
        %v628 = vsel %vm452, %v349, 0.0
        %v629 = vrot.slane %v628, 4
        %v630 = vadd.f32 %v628, %v629
        %v631 = vrot.slane %v630, 2
        %v632 = vadd.f32 %v630, %v631
        %v633 = vrot.slane %v632, 1
        %v634 = vadd.f32 %v632, %v633
        %v635 = vsel %vm452, %v350, 0.0
        %v636 = vrot.slane %v635, 4
        %v637 = vadd.f32 %v635, %v636
        %v638 = vrot.slane %v637, 2
        %v639 = vadd.f32 %v637, %v638
        %v640 = vrot.slane %v639, 1
        %v641 = vadd.f32 %v639, %v640
        %v642 = vsel %vm452, %v351, 0.0
        %v643 = vrot.slane %v642, 4
        %v644 = vadd.f32 %v642, %v643
        %v645 = vrot.slane %v644, 2
        %v646 = vadd.f32 %v644, %v645
        %v647 = vrot.slane %v646, 1
        %v648 = vadd.f32 %v646, %v647
        %v649 = vsel %vm452, %v352, 0.0
        %v650 = vrot.slane %v649, 4
        %v651 = vadd.f32 %v649, %v650
        %v652 = vrot.slane %v651, 2
        %v653 = vadd.f32 %v651, %v652
        %v654 = vrot.slane %v653, 1
        %v655 = vadd.f32 %v653, %v654
        %v656 = vsel %vm452, %v353, 0.0
        %v657 = vrot.slane %v656, 4
        %v658 = vadd.f32 %v656, %v657
        %v659 = vrot.slane %v658, 2
        %v660 = vadd.f32 %v658, %v659
        %v661 = vrot.slane %v660, 1
        %v662 = vadd.f32 %v660, %v661
        %v663 = vsel %vm452, %v354, 0.0
        %v664 = vrot.slane %v663, 4
        %v665 = vadd.f32 %v663, %v664
        %v666 = vrot.slane %v665, 2
        %v667 = vadd.f32 %v665, %v666
        %v668 = vrot.slane %v667, 1
        %v669 = vadd.f32 %v667, %v668
        %v670 = vsel %vm452, %v355, 0.0
        %v671 = vrot.slane %v670, 4
        %v672 = vadd.f32 %v670, %v671
        %v673 = vrot.slane %v672, 2
        %v674 = vadd.f32 %v672, %v673
        %v675 = vrot.slane %v674, 1
        %v676 = vadd.f32 %v674, %v675
        %v677 = vsel %vm452, %v356, 0.0
        %v678 = vrot.slane %v677, 4
        %v679 = vadd.f32 %v677, %v678
        %v680 = vrot.slane %v679, 2
        %v681 = vadd.f32 %v679, %v680
        %v682 = vrot.slane %v681, 1
        %v683 = vadd.f32 %v681, %v682
        %v684 = vsel %vm452, %v357, 0.0
        %v685 = vrot.slane %v684, 4
        %v686 = vadd.f32 %v684, %v685
        %v687 = vrot.slane %v686, 2
        %v688 = vadd.f32 %v686, %v687
        %v689 = vrot.slane %v688, 1
        %v690 = vadd.f32 %v688, %v689
        %v691 = vsel %vm452, %v358, 0.0
        %v692 = vrot.slane %v691, 4
        %v693 = vadd.f32 %v691, %v692
        %v694 = vrot.slane %v693, 2
        %v695 = vadd.f32 %v693, %v694
        %v696 = vrot.slane %v695, 1
        %v697 = vadd.f32 %v695, %v696
        %v698 = vsel %vm452, %v359, 0.0
        %v699 = vrot.slane %v698, 4
        %v700 = vadd.f32 %v698, %v699
        %v701 = vrot.slane %v700, 2
        %v702 = vadd.f32 %v700, %v701
        %v703 = vrot.slane %v702, 1
        %v704 = vadd.f32 %v702, %v703
        %v705 = vsel %vm452, %v360, 0.0
        %v706 = vrot.slane %v705, 4
        %v707 = vadd.f32 %v705, %v706
        %v708 = vrot.slane %v707, 2
        %v709 = vadd.f32 %v707, %v708
        %v710 = vrot.slane %v709, 1
        %v711 = vadd.f32 %v709, %v710
        %v712 = vsel %vm452, %v361, 0.0
        %v713 = vrot.slane %v712, 4
        %v714 = vadd.f32 %v712, %v713
        %v715 = vrot.slane %v714, 2
        %v716 = vadd.f32 %v714, %v715
        %v717 = vrot.slane %v716, 1
        %v718 = vadd.f32 %v716, %v717
        %v719 = vsel %vm452, %v362, 0.0
        %v720 = vrot.slane %v719, 4
        %v721 = vadd.f32 %v719, %v720
        %v722 = vrot.slane %v721, 2
        %v723 = vadd.f32 %v721, %v722
        %v724 = vrot.slane %v723, 1
        %v725 = vadd.f32 %v723, %v724
        %v726 = vsel %vm452, %v363, 0.0
        %v727 = vrot.slane %v726, 4
        %v728 = vadd.f32 %v726, %v727
        %v729 = vrot.slane %v728, 2
        %v730 = vadd.f32 %v728, %v729
        %v731 = vrot.slane %v730, 1
        %v732 = vadd.f32 %v730, %v731
        %v733 = vsel %vm452, %v364, 0.0
        %v734 = vrot.slane %v733, 4
        %v735 = vadd.f32 %v733, %v734
        %v736 = vrot.slane %v735, 2
        %v737 = vadd.f32 %v735, %v736
        %v738 = vrot.slane %v737, 1
        %v739 = vadd.f32 %v737, %v738
        %v740 = vsel %vm452, %v365, 0.0
        %v741 = vrot.slane %v740, 4
        %v742 = vadd.f32 %v740, %v741
        %v743 = vrot.slane %v742, 2
        %v744 = vadd.f32 %v742, %v743
        %v745 = vrot.slane %v744, 1
        %v746 = vadd.f32 %v744, %v745
        %v747 = vsel %vm452, %v366, 0.0
        %v748 = vrot.slane %v747, 4
        %v749 = vadd.f32 %v747, %v748
        %v750 = vrot.slane %v749, 2
        %v751 = vadd.f32 %v749, %v750
        %v752 = vrot.slane %v751, 1
        %v753 = vadd.f32 %v751, %v752
        %v754 = vsel %vm452, %v367, 0.0
        %v755 = vrot.slane %v754, 4
        %v756 = vadd.f32 %v754, %v755
        %v757 = vrot.slane %v756, 2
        %v758 = vadd.f32 %v756, %v757
        %v759 = vrot.slane %v758, 1
        %v760 = vadd.f32 %v758, %v759
        %v761 = vsel %vm452, %v368, 0.0
        %v762 = vrot.slane %v761, 4
        %v763 = vadd.f32 %v761, %v762
        %v764 = vrot.slane %v763, 2
        %v765 = vadd.f32 %v763, %v764
        %v766 = vrot.slane %v765, 1
        %v767 = vadd.f32 %v765, %v766
        %v768 = vsel %vm452, %v369, 0.0
        %v769 = vrot.slane %v768, 4
        %v770 = vadd.f32 %v768, %v769
        %v771 = vrot.slane %v770, 2
        %v772 = vadd.f32 %v770, %v771
        %v773 = vrot.slane %v772, 1
        %v774 = vadd.f32 %v772, %v773
        %v775 = vsel %vm452, %v370, 0.0
        %v776 = vrot.slane %v775, 4
        %v777 = vadd.f32 %v775, %v776
        %v778 = vrot.slane %v777, 2
        %v779 = vadd.f32 %v777, %v778
        %v780 = vrot.slane %v779, 1
        %v781 = vadd.f32 %v779, %v780
        %v782 = vsel %vm452, %v371, 0.0
        %v783 = vrot.slane %v782, 4
        %v784 = vadd.f32 %v782, %v783
        %v785 = vrot.slane %v784, 2
        %v786 = vadd.f32 %v784, %v785
        %v787 = vrot.slane %v786, 1
        %v788 = vadd.f32 %v786, %v787
        %v789 = vsel %vm452, %v372, 0.0
        %v790 = vrot.slane %v789, 4
        %v791 = vadd.f32 %v789, %v790
        %v792 = vrot.slane %v791, 2
        %v793 = vadd.f32 %v791, %v792
        %v794 = vrot.slane %v793, 1
        %v795 = vadd.f32 %v793, %v794
        %v796 = vsel %vm452, %v373, 0.0
        %v797 = vrot.slane %v796, 4
        %v798 = vadd.f32 %v796, %v797
        %v799 = vrot.slane %v798, 2
        %v800 = vadd.f32 %v798, %v799
        %v801 = vrot.slane %v800, 1
        %v802 = vadd.f32 %v800, %v801
        %v803 = vsel %vm452, %v374, 0.0
        %v804 = vrot.slane %v803, 4
        %v805 = vadd.f32 %v803, %v804
        %v806 = vrot.slane %v805, 2
        %v807 = vadd.f32 %v805, %v806
        %v808 = vrot.slane %v807, 1
        %v809 = vadd.f32 %v807, %v808
        %v810 = vsel %vm452, %v375, 0.0
        %v811 = vrot.slane %v810, 4
        %v812 = vadd.f32 %v810, %v811
        %v813 = vrot.slane %v812, 2
        %v814 = vadd.f32 %v812, %v813
        %v815 = vrot.slane %v814, 1
        %v816 = vadd.f32 %v814, %v815
        %v817 = vsel %vm452, %v376, 0.0
        %v818 = vrot.slane %v817, 4
        %v819 = vadd.f32 %v817, %v818
        %v820 = vrot.slane %v819, 2
        %v821 = vadd.f32 %v819, %v820
        %v822 = vrot.slane %v821, 1
        %v823 = vadd.f32 %v821, %v822
        %v824 = vsel %vm452, %v377, 0.0
        %v825 = vrot.slane %v824, 4
        %v826 = vadd.f32 %v824, %v825
        %v827 = vrot.slane %v826, 2
        %v828 = vadd.f32 %v826, %v827
        %v829 = vrot.slane %v828, 1
        %v830 = vadd.f32 %v828, %v829
        %v831 = vsel %vm452, %v378, 0.0
        %v832 = vrot.slane %v831, 4
        %v833 = vadd.f32 %v831, %v832
        %v834 = vrot.slane %v833, 2
        %v835 = vadd.f32 %v833, %v834
        %v836 = vrot.slane %v835, 1
        %v837 = vadd.f32 %v835, %v836
        %v838 = vsel %vm452, %v379, 0.0
        %v839 = vrot.slane %v838, 4
        %v840 = vadd.f32 %v838, %v839
        %v841 = vrot.slane %v840, 2
        %v842 = vadd.f32 %v840, %v841
        %v843 = vrot.slane %v842, 1
        %v844 = vadd.f32 %v842, %v843
        %v845 = vsel %vm452, %v380, 0.0
        %v846 = vrot.slane %v845, 4
        %v847 = vadd.f32 %v845, %v846
        %v848 = vrot.slane %v847, 2
        %v849 = vadd.f32 %v847, %v848
        %v850 = vrot.slane %v849, 1
        %v851 = vadd.f32 %v849, %v850
        %v852 = vsel %vm452, %v381, 0.0
        %v853 = vrot.slane %v852, 4
        %v854 = vadd.f32 %v852, %v853
        %v855 = vrot.slane %v854, 2
        %v856 = vadd.f32 %v854, %v855
        %v857 = vrot.slane %v856, 1
        %v858 = vadd.f32 %v856, %v857
        %v859 = vsel %vm452, %v382, 0.0
        %v860 = vrot.slane %v859, 4
        %v861 = vadd.f32 %v859, %v860
        %v862 = vrot.slane %v861, 2
        %v863 = vadd.f32 %v861, %v862
        %v864 = vrot.slane %v863, 1
        %v865 = vadd.f32 %v863, %v864
        %v866 = vsel %vm452, %v383, 0.0
        %v867 = vrot.slane %v866, 4
        %v868 = vadd.f32 %v866, %v867
        %v869 = vrot.slane %v868, 2
        %v870 = vadd.f32 %v868, %v869
        %v871 = vrot.slane %v870, 1
        %v872 = vadd.f32 %v870, %v871
        %v873 = vsel %vm452, %v384, 0.0
        %v874 = vrot.slane %v873, 4
        %v875 = vadd.f32 %v873, %v874
        %v876 = vrot.slane %v875, 2
        %v877 = vadd.f32 %v875, %v876
        %v878 = vrot.slane %v877, 1
        %v879 = vadd.f32 %v877, %v878
        %v880 = vsel %vm452, %v385, 0.0
        %v881 = vrot.slane %v880, 4
        %v882 = vadd.f32 %v880, %v881
        %v883 = vrot.slane %v882, 2
        %v884 = vadd.f32 %v882, %v883
        %v885 = vrot.slane %v884, 1
        %v886 = vadd.f32 %v884, %v885
        %v887 = vsel %vm452, %v386, 0.0
        %v888 = vrot.slane %v887, 4
        %v889 = vadd.f32 %v887, %v888
        %v890 = vrot.slane %v889, 2
        %v891 = vadd.f32 %v889, %v890
        %v892 = vrot.slane %v891, 1
        %v893 = vadd.f32 %v891, %v892
        %v894 = vsel %vm452, %v387, 0.0
        %v895 = vrot.slane %v894, 4
        %v896 = vadd.f32 %v894, %v895
        %v897 = vrot.slane %v896, 2
        %v898 = vadd.f32 %v896, %v897
        %v899 = vrot.slane %v898, 1
        %v900 = vadd.f32 %v898, %v899
        %v901 = vsel %vm452, %v388, 0.0
        %v902 = vrot.slane %v901, 4
        %v903 = vadd.f32 %v901, %v902
        %v904 = vrot.slane %v903, 2
        %v905 = vadd.f32 %v903, %v904
        %v906 = vrot.slane %v905, 1
        %v907 = vadd.f32 %v905, %v906
        %v908 = vsel %vm452, %v389, 0.0
        %v909 = vrot.slane %v908, 4
        %v910 = vadd.f32 %v908, %v909
        %v911 = vrot.slane %v910, 2
        %v912 = vadd.f32 %v910, %v911
        %v913 = vrot.slane %v912, 1
        %v914 = vadd.f32 %v912, %v913
        %v915 = vsel %vm452, %v390, 0.0
        %v916 = vrot.slane %v915, 4
        %v917 = vadd.f32 %v915, %v916
        %v918 = vrot.slane %v917, 2
        %v919 = vadd.f32 %v917, %v918
        %v920 = vrot.slane %v919, 1
        %v921 = vadd.f32 %v919, %v920
        %v922 = vsel %vm452, %v391, 0.0
        %v923 = vrot.slane %v922, 4
        %v924 = vadd.f32 %v922, %v923
        %v925 = vrot.slane %v924, 2
        %v926 = vadd.f32 %v924, %v925
        %v927 = vrot.slane %v926, 1
        %v928 = vadd.f32 %v926, %v927
        %v929 = vsel %vm452, %v392, 0.0
        %v930 = vrot.slane %v929, 4
        %v931 = vadd.f32 %v929, %v930
        %v932 = vrot.slane %v931, 2
        %v933 = vadd.f32 %v931, %v932
        %v934 = vrot.slane %v933, 1
        %v935 = vadd.f32 %v933, %v934
        %v936 = vsel %vm452, %v393, 0.0
        %v937 = vrot.slane %v936, 4
        %v938 = vadd.f32 %v936, %v937
        %v939 = vrot.slane %v938, 2
        %v940 = vadd.f32 %v938, %v939
        %v941 = vrot.slane %v940, 1
        %v942 = vadd.f32 %v940, %v941
        %v943 = vsel %vm452, %v394, 0.0
        %v944 = vrot.slane %v943, 4
        %v945 = vadd.f32 %v943, %v944
        %v946 = vrot.slane %v945, 2
        %v947 = vadd.f32 %v945, %v946
        %v948 = vrot.slane %v947, 1
        %v949 = vadd.f32 %v947, %v948
        %v950 = vsel %vm452, %v395, 0.0
        %v951 = vrot.slane %v950, 4
        %v952 = vadd.f32 %v950, %v951
        %v953 = vrot.slane %v952, 2
        %v954 = vadd.f32 %v952, %v953
        %v955 = vrot.slane %v954, 1
        %v956 = vadd.f32 %v954, %v955
        %v957 = vsel %vm452, %v396, 0.0
        %v958 = vrot.slane %v957, 4
        %v959 = vadd.f32 %v957, %v958
        %v960 = vrot.slane %v959, 2
        %v961 = vadd.f32 %v959, %v960
        %v962 = vrot.slane %v961, 1
        %v963 = vadd.f32 %v961, %v962
        %v964 = vsel %vm452, %v397, 0.0
        %v965 = vrot.slane %v964, 4
        %v966 = vadd.f32 %v964, %v965
        %v967 = vrot.slane %v966, 2
        %v968 = vadd.f32 %v966, %v967
        %v969 = vrot.slane %v968, 1
        %v970 = vadd.f32 %v968, %v969
        %v971 = vsel %vm452, %v398, 0.0
        %v972 = vrot.slane %v971, 4
        %v973 = vadd.f32 %v971, %v972
        %v974 = vrot.slane %v973, 2
        %v975 = vadd.f32 %v973, %v974
        %v976 = vrot.slane %v975, 1
        %v977 = vadd.f32 %v975, %v976
        %v978 = vsel %vm452, %v399, 0.0
        %v979 = vrot.slane %v978, 4
        %v980 = vadd.f32 %v978, %v979
        %v981 = vrot.slane %v980, 2
        %v982 = vadd.f32 %v980, %v981
        %v983 = vrot.slane %v982, 1
        %v984 = vadd.f32 %v982, %v983
        %v985 = vsel %vm452, %v400, 0.0
        %v986 = vrot.slane %v985, 4
        %v987 = vadd.f32 %v985, %v986
        %v988 = vrot.slane %v987, 2
        %v989 = vadd.f32 %v987, %v988
        %v990 = vrot.slane %v989, 1
        %v991 = vadd.f32 %v989, %v990
        %v992 = vsel %vm452, %v401, 0.0
        %v993 = vrot.slane %v992, 4
        %v994 = vadd.f32 %v992, %v993
        %v995 = vrot.slane %v994, 2
        %v996 = vadd.f32 %v994, %v995
        %v997 = vrot.slane %v996, 1
        %v998 = vadd.f32 %v996, %v997
        %v999 = vsel %vm452, %v402, 0.0
        %v1000 = vrot.slane %v999, 4
        %v1001 = vadd.f32 %v999, %v1000
        %v1002 = vrot.slane %v1001, 2
        %v1003 = vadd.f32 %v1001, %v1002
        %v1004 = vrot.slane %v1003, 1
        %v1005 = vadd.f32 %v1003, %v1004
        %v1006 = vsel %vm452, %v403, 0.0
        %v1007 = vrot.slane %v1006, 4
        %v1008 = vadd.f32 %v1006, %v1007
        %v1009 = vrot.slane %v1008, 2
        %v1010 = vadd.f32 %v1008, %v1009
        %v1011 = vrot.slane %v1010, 1
        %v1012 = vadd.f32 %v1010, %v1011
        %v1013 = vsel %vm452, %v404, 0.0
        %v1014 = vrot.slane %v1013, 4
        %v1015 = vadd.f32 %v1013, %v1014
        %v1016 = vrot.slane %v1015, 2
        %v1017 = vadd.f32 %v1015, %v1016
        %v1018 = vrot.slane %v1017, 1
        %v1019 = vadd.f32 %v1017, %v1018
        %v1020 = vsel %vm452, %v405, 0.0
        %v1021 = vrot.slane %v1020, 4
        %v1022 = vadd.f32 %v1020, %v1021
        %v1023 = vrot.slane %v1022, 2
        %v1024 = vadd.f32 %v1022, %v1023
        %v1025 = vrot.slane %v1024, 1
        %v1026 = vadd.f32 %v1024, %v1025
        %v1027 = vsel %vm452, %v406, 0.0
        %v1028 = vrot.slane %v1027, 4
        %v1029 = vadd.f32 %v1027, %v1028
        %v1030 = vrot.slane %v1029, 2
        %v1031 = vadd.f32 %v1029, %v1030
        %v1032 = vrot.slane %v1031, 1
        %v1033 = vadd.f32 %v1031, %v1032
        %v1034 = vsel %vm452, %v407, 0.0
        %v1035 = vrot.slane %v1034, 4
        %v1036 = vadd.f32 %v1034, %v1035
        %v1037 = vrot.slane %v1036, 2
        %v1038 = vadd.f32 %v1036, %v1037
        %v1039 = vrot.slane %v1038, 1
        %v1040 = vadd.f32 %v1038, %v1039
        %v1041 = vsel %vm452, %v408, 0.0
        %v1042 = vrot.slane %v1041, 4
        %v1043 = vadd.f32 %v1041, %v1042
        %v1044 = vrot.slane %v1043, 2
        %v1045 = vadd.f32 %v1043, %v1044
        %v1046 = vrot.slane %v1045, 1
        %v1047 = vadd.f32 %v1045, %v1046
        %v1048 = vsel %vm452, %v409, 0.0
        %v1049 = vrot.slane %v1048, 4
        %v1050 = vadd.f32 %v1048, %v1049
        %v1051 = vrot.slane %v1050, 2
        %v1052 = vadd.f32 %v1050, %v1051
        %v1053 = vrot.slane %v1052, 1
        %v1054 = vadd.f32 %v1052, %v1053
        %v1055 = vsel %vm452, %v410, 0.0
        %v1056 = vrot.slane %v1055, 4
        %v1057 = vadd.f32 %v1055, %v1056
        %v1058 = vrot.slane %v1057, 2
        %v1059 = vadd.f32 %v1057, %v1058
        %v1060 = vrot.slane %v1059, 1
        %v1061 = vadd.f32 %v1059, %v1060
        %v1062 = vsel %vm452, %v411, 0.0
        %v1063 = vrot.slane %v1062, 4
        %v1064 = vadd.f32 %v1062, %v1063
        %v1065 = vrot.slane %v1064, 2
        %v1066 = vadd.f32 %v1064, %v1065
        %v1067 = vrot.slane %v1066, 1
        %v1068 = vadd.f32 %v1066, %v1067
        %v1069 = vsel %vm452, %v412, 0.0
        %v1070 = vrot.slane %v1069, 4
        %v1071 = vadd.f32 %v1069, %v1070
        %v1072 = vrot.slane %v1071, 2
        %v1073 = vadd.f32 %v1071, %v1072
        %v1074 = vrot.slane %v1073, 1
        %v1075 = vadd.f32 %v1073, %v1074
        %v1076 = vsel %vm452, %v413, 0.0
        %v1077 = vrot.slane %v1076, 4
        %v1078 = vadd.f32 %v1076, %v1077
        %v1079 = vrot.slane %v1078, 2
        %v1080 = vadd.f32 %v1078, %v1079
        %v1081 = vrot.slane %v1080, 1
        %v1082 = vadd.f32 %v1080, %v1081
        %v1083 = vsel %vm452, %v414, 0.0
        %v1084 = vrot.slane %v1083, 4
        %v1085 = vadd.f32 %v1083, %v1084
        %v1086 = vrot.slane %v1085, 2
        %v1087 = vadd.f32 %v1085, %v1086
        %v1088 = vrot.slane %v1087, 1
        %v1089 = vadd.f32 %v1087, %v1088
        %v1090 = vsel %vm452, %v415, 0.0
        %v1091 = vrot.slane %v1090, 4
        %v1092 = vadd.f32 %v1090, %v1091
        %v1093 = vrot.slane %v1092, 2
        %v1094 = vadd.f32 %v1092, %v1093
        %v1095 = vrot.slane %v1094, 1
        %v1096 = vadd.f32 %v1094, %v1095
        %v1097 = vsel %vm452, %v416, 0.0
        %v1098 = vrot.slane %v1097, 4
        %v1099 = vadd.f32 %v1097, %v1098
        %v1100 = vrot.slane %v1099, 2
        %v1101 = vadd.f32 %v1099, %v1100
        %v1102 = vrot.slane %v1101, 1
        %v1103 = vadd.f32 %v1101, %v1102
        %v1104 = vsel %vm452, %v417, 0.0
        %v1105 = vrot.slane %v1104, 4
        %v1106 = vadd.f32 %v1104, %v1105
        %v1107 = vrot.slane %v1106, 2
        %v1108 = vadd.f32 %v1106, %v1107
        %v1109 = vrot.slane %v1108, 1
        %v1110 = vadd.f32 %v1108, %v1109
        %v1111 = vsel %vm452, %v418, 0.0
        %v1112 = vrot.slane %v1111, 4
        %v1113 = vadd.f32 %v1111, %v1112
        %v1114 = vrot.slane %v1113, 2
        %v1115 = vadd.f32 %v1113, %v1114
        %v1116 = vrot.slane %v1115, 1
        %v1117 = vadd.f32 %v1115, %v1116
        %v1118 = vsel %vm452, %v419, 0.0
        %v1119 = vrot.slane %v1118, 4
        %v1120 = vadd.f32 %v1118, %v1119
        %v1121 = vrot.slane %v1120, 2
        %v1122 = vadd.f32 %v1120, %v1121
        %v1123 = vrot.slane %v1122, 1
        %v1124 = vadd.f32 %v1122, %v1123
        %v1125 = vsel %vm452, %v420, 0.0
        %v1126 = vrot.slane %v1125, 4
        %v1127 = vadd.f32 %v1125, %v1126
        %v1128 = vrot.slane %v1127, 2
        %v1129 = vadd.f32 %v1127, %v1128
        %v1130 = vrot.slane %v1129, 1
        %v1131 = vadd.f32 %v1129, %v1130
        %v1132 = vsel %vm452, %v421, 0.0
        %v1133 = vrot.slane %v1132, 4
        %v1134 = vadd.f32 %v1132, %v1133
        %v1135 = vrot.slane %v1134, 2
        %v1136 = vadd.f32 %v1134, %v1135
        %v1137 = vrot.slane %v1136, 1
        %v1138 = vadd.f32 %v1136, %v1137
        %v1139 = vsel %vm452, %v422, 0.0
        %v1140 = vrot.slane %v1139, 4
        %v1141 = vadd.f32 %v1139, %v1140
        %v1142 = vrot.slane %v1141, 2
        %v1143 = vadd.f32 %v1141, %v1142
        %v1144 = vrot.slane %v1143, 1
        %v1145 = vadd.f32 %v1143, %v1144
        %v1146 = vsel %vm452, %v423, 0.0
        %v1147 = vrot.slane %v1146, 4
        %v1148 = vadd.f32 %v1146, %v1147
        %v1149 = vrot.slane %v1148, 2
        %v1150 = vadd.f32 %v1148, %v1149
        %v1151 = vrot.slane %v1150, 1
        %v1152 = vadd.f32 %v1150, %v1151
        %v1153 = vsel %vm452, %v424, 0.0
        %v1154 = vrot.slane %v1153, 4
        %v1155 = vadd.f32 %v1153, %v1154
        %v1156 = vrot.slane %v1155, 2
        %v1157 = vadd.f32 %v1155, %v1156
        %v1158 = vrot.slane %v1157, 1
        %v1159 = vadd.f32 %v1157, %v1158
        %v1160 = vsel %vm452, %v425, 0.0
        %v1161 = vrot.slane %v1160, 4
        %v1162 = vadd.f32 %v1160, %v1161
        %v1163 = vrot.slane %v1162, 2
        %v1164 = vadd.f32 %v1162, %v1163
        %v1165 = vrot.slane %v1164, 1
        %v1166 = vadd.f32 %v1164, %v1165
        %v1167 = vsel %vm452, %v426, 0.0
        %v1168 = vrot.slane %v1167, 4
        %v1169 = vadd.f32 %v1167, %v1168
        %v1170 = vrot.slane %v1169, 2
        %v1171 = vadd.f32 %v1169, %v1170
        %v1172 = vrot.slane %v1171, 1
        %v1173 = vadd.f32 %v1171, %v1172
        %v1174 = vsel %vm452, %v427, 0.0
        %v1175 = vrot.slane %v1174, 4
        %v1176 = vadd.f32 %v1174, %v1175
        %v1177 = vrot.slane %v1176, 2
        %v1178 = vadd.f32 %v1176, %v1177
        %v1179 = vrot.slane %v1178, 1
        %v1180 = vadd.f32 %v1178, %v1179
        %v1181 = vsel %vm452, %v428, 0.0
        %v1182 = vrot.slane %v1181, 4
        %v1183 = vadd.f32 %v1181, %v1182
        %v1184 = vrot.slane %v1183, 2
        %v1185 = vadd.f32 %v1183, %v1184
        %v1186 = vrot.slane %v1185, 1
        %v1187 = vadd.f32 %v1185, %v1186
        %v1188 = vsel %vm452, %v429, 0.0
        %v1189 = vrot.slane %v1188, 4
        %v1190 = vadd.f32 %v1188, %v1189
        %v1191 = vrot.slane %v1190, 2
        %v1192 = vadd.f32 %v1190, %v1191
        %v1193 = vrot.slane %v1192, 1
        %v1194 = vadd.f32 %v1192, %v1193
        %v1195 = vsel %vm452, %v430, 0.0
        %v1196 = vrot.slane %v1195, 4
        %v1197 = vadd.f32 %v1195, %v1196
        %v1198 = vrot.slane %v1197, 2
        %v1199 = vadd.f32 %v1197, %v1198
        %v1200 = vrot.slane %v1199, 1
        %v1201 = vadd.f32 %v1199, %v1200
        %v1202 = vsel %vm452, %v431, 0.0
        %v1203 = vrot.slane %v1202, 4
        %v1204 = vadd.f32 %v1202, %v1203
        %v1205 = vrot.slane %v1204, 2
        %v1206 = vadd.f32 %v1204, %v1205
        %v1207 = vrot.slane %v1206, 1
        %v1208 = vadd.f32 %v1206, %v1207
        %v1209 = vsel %vm452, %v432, 0.0
        %v1210 = vrot.slane %v1209, 4
        %v1211 = vadd.f32 %v1209, %v1210
        %v1212 = vrot.slane %v1211, 2
        %v1213 = vadd.f32 %v1211, %v1212
        %v1214 = vrot.slane %v1213, 1
        %v1215 = vadd.f32 %v1213, %v1214
        %v1216 = vsel %vm452, %v433, 0.0
        %v1217 = vrot.slane %v1216, 4
        %v1218 = vadd.f32 %v1216, %v1217
        %v1219 = vrot.slane %v1218, 2
        %v1220 = vadd.f32 %v1218, %v1219
        %v1221 = vrot.slane %v1220, 1
        %v1222 = vadd.f32 %v1220, %v1221
        %v1223 = vsel %vm452, %v434, 0.0
        %v1224 = vrot.slane %v1223, 4
        %v1225 = vadd.f32 %v1223, %v1224
        %v1226 = vrot.slane %v1225, 2
        %v1227 = vadd.f32 %v1225, %v1226
        %v1228 = vrot.slane %v1227, 1
        %v1229 = vadd.f32 %v1227, %v1228
        %v1230 = vsel %vm452, %v435, 0.0
        %v1231 = vrot.slane %v1230, 4
        %v1232 = vadd.f32 %v1230, %v1231
        %v1233 = vrot.slane %v1232, 2
        %v1234 = vadd.f32 %v1232, %v1233
        %v1235 = vrot.slane %v1234, 1
        %v1236 = vadd.f32 %v1234, %v1235
        %v1237 = vsel %vm452, %v436, 0.0
        %v1238 = vrot.slane %v1237, 4
        %v1239 = vadd.f32 %v1237, %v1238
        %v1240 = vrot.slane %v1239, 2
        %v1241 = vadd.f32 %v1239, %v1240
        %v1242 = vrot.slane %v1241, 1
        %v1243 = vadd.f32 %v1241, %v1242
        %v1244 = vsel %vm452, %v437, 0.0
        %v1245 = vrot.slane %v1244, 4
        %v1246 = vadd.f32 %v1244, %v1245
        %v1247 = vrot.slane %v1246, 2
        %v1248 = vadd.f32 %v1246, %v1247
        %v1249 = vrot.slane %v1248, 1
        %v1250 = vadd.f32 %v1248, %v1249
        %v1251 = vsel %vm452, %v438, 0.0
        %v1252 = vrot.slane %v1251, 4
        %v1253 = vadd.f32 %v1251, %v1252
        %v1254 = vrot.slane %v1253, 2
        %v1255 = vadd.f32 %v1253, %v1254
        %v1256 = vrot.slane %v1255, 1
        %v1257 = vadd.f32 %v1255, %v1256
        %v1258 = vsel %vm452, %v439, 0.0
        %v1259 = vrot.slane %v1258, 4
        %v1260 = vadd.f32 %v1258, %v1259
        %v1261 = vrot.slane %v1260, 2
        %v1262 = vadd.f32 %v1260, %v1261
        %v1263 = vrot.slane %v1262, 1
        %v1264 = vadd.f32 %v1262, %v1263
        %v1265 = vsel %vm452, %v440, 0.0
        %v1266 = vrot.slane %v1265, 4
        %v1267 = vadd.f32 %v1265, %v1266
        %v1268 = vrot.slane %v1267, 2
        %v1269 = vadd.f32 %v1267, %v1268
        %v1270 = vrot.slane %v1269, 1
        %v1271 = vadd.f32 %v1269, %v1270
        %v1272 = vsel %vm452, %v441, 0.0
        %v1273 = vrot.slane %v1272, 4
        %v1274 = vadd.f32 %v1272, %v1273
        %v1275 = vrot.slane %v1274, 2
        %v1276 = vadd.f32 %v1274, %v1275
        %v1277 = vrot.slane %v1276, 1
        %v1278 = vadd.f32 %v1276, %v1277
        %v1279 = vsel %vm452, %v442, 0.0
        %v1280 = vrot.slane %v1279, 4
        %v1281 = vadd.f32 %v1279, %v1280
        %v1282 = vrot.slane %v1281, 2
        %v1283 = vadd.f32 %v1281, %v1282
        %v1284 = vrot.slane %v1283, 1
        %v1285 = vadd.f32 %v1283, %v1284
        %v1286 = vsel %vm452, %v443, 0.0
        %v1287 = vrot.slane %v1286, 4
        %v1288 = vadd.f32 %v1286, %v1287
        %v1289 = vrot.slane %v1288, 2
        %v1290 = vadd.f32 %v1288, %v1289
        %v1291 = vrot.slane %v1290, 1
        %v1292 = vadd.f32 %v1290, %v1291
        %v1293 = vsel %vm452, %v444, 0.0
        %v1294 = vrot.slane %v1293, 4
        %v1295 = vadd.f32 %v1293, %v1294
        %v1296 = vrot.slane %v1295, 2
        %v1297 = vadd.f32 %v1295, %v1296
        %v1298 = vrot.slane %v1297, 1
        %v1299 = vadd.f32 %v1297, %v1298
        %v1300 = vsel %vm452, %v445, 0.0
        %v1301 = vrot.slane %v1300, 4
        %v1302 = vadd.f32 %v1300, %v1301
        %v1303 = vrot.slane %v1302, 2
        %v1304 = vadd.f32 %v1302, %v1303
        %v1305 = vrot.slane %v1304, 1
        %v1306 = vadd.f32 %v1304, %v1305
        %v1307 = vsel %vm452, %v446, 0.0
        %v1308 = vrot.slane %v1307, 4
        %v1309 = vadd.f32 %v1307, %v1308
        %v1310 = vrot.slane %v1309, 2
        %v1311 = vadd.f32 %v1309, %v1310
        %v1312 = vrot.slane %v1311, 1
        %v1313 = vadd.f32 %v1311, %v1312
        %v1314 = vsel %vm452, %v447, 0.0
        %v1315 = vrot.slane %v1314, 4
        %v1316 = vadd.f32 %v1314, %v1315
        %v1317 = vrot.slane %v1316, 2
        %v1318 = vadd.f32 %v1316, %v1317
        %v1319 = vrot.slane %v1318, 1
        %v1320 = vadd.f32 %v1318, %v1319
        %v1321 = vsel %vm452, %v448, 0.0
        %v1322 = vrot.slane %v1321, 4
        %v1323 = vadd.f32 %v1321, %v1322
        %v1324 = vrot.slane %v1323, 2
        %v1325 = vadd.f32 %v1323, %v1324
        %v1326 = vrot.slane %v1325, 1
        %v1327 = vadd.f32 %v1325, %v1326
        %v1328 = vsel %vm452, %v449, 0.0
        %v1329 = vrot.slane %v1328, 4
        %v1330 = vadd.f32 %v1328, %v1329
        %v1331 = vrot.slane %v1330, 2
        %v1332 = vadd.f32 %v1330, %v1331
        %v1333 = vrot.slane %v1332, 1
        %v1334 = vadd.f32 %v1332, %v1333
        %v1335 = vsel %vm452, %v450, 0.0
        %v1336 = vrot.slane %v1335, 4
        %v1337 = vadd.f32 %v1335, %v1336
        %v1338 = vrot.slane %v1337, 2
        %v1339 = vadd.f32 %v1337, %v1338
        %v1340 = vrot.slane %v1339, 1
        %v1341 = vadd.f32 %v1339, %v1340
        %v1342 = vsel %vm452, %v451, 0.0
        %v1343 = vrot.slane %v1342, 4
        %v1344 = vadd.f32 %v1342, %v1343
        %v1345 = vrot.slane %v1344, 2
        %v1346 = vadd.f32 %v1344, %v1345
        %v1347 = vrot.slane %v1346, 1
        %v1348 = vadd.f32 %v1346, %v1347
        %v1349 = vrcp.pop 5.0
        %v1350 = vmul.f32 5.0, %v1349
        %v1351 = vsub.f32 1.0, %v1350
        %v1352 = vmul.f32 %v1349, %v1351
        %v1353 = vadd.f32 %v1349, %v1352
        %vm1354 = vweird.f32 %v1349
        %v1355 = vsel %vm1354, %v1349, %v1353
        %v1356 = vmul.f32 %v459, %v1355
        %v1357 = vmul.f32 %v466, %v1355
        %v1358 = vmul.f32 %v473, %v1355
        %v1359 = vmul.f32 %v480, %v1355
        %v1360 = vmul.f32 %v487, %v1355
        %v1361 = vmul.f32 %v494, %v1355
        %v1362 = vmul.f32 %v501, %v1355
        %v1363 = vmul.f32 %v508, %v1355
        %v1364 = vmul.f32 %v515, %v1355
        %v1365 = vmul.f32 %v522, %v1355
        %v1366 = vmul.f32 %v529, %v1355
        %v1367 = vmul.f32 %v536, %v1355
        %v1368 = vmul.f32 %v543, %v1355
        %v1369 = vmul.f32 %v550, %v1355
        %v1370 = vmul.f32 %v557, %v1355
        %v1371 = vmul.f32 %v564, %v1355
        %v1372 = vmul.f32 %v571, %v1355
        %v1373 = vmul.f32 %v578, %v1355
        %v1374 = vmul.f32 %v585, %v1355
        %v1375 = vmul.f32 %v592, %v1355
        %v1376 = vmul.f32 %v599, %v1355
        %v1377 = vmul.f32 %v606, %v1355
        %v1378 = vmul.f32 %v613, %v1355
        %v1379 = vmul.f32 %v620, %v1355
        %v1380 = vmul.f32 %v627, %v1355
        %v1381 = vmul.f32 %v634, %v1355
        %v1382 = vmul.f32 %v641, %v1355
        %v1383 = vmul.f32 %v648, %v1355
        %v1384 = vmul.f32 %v655, %v1355
        %v1385 = vmul.f32 %v662, %v1355
        %v1386 = vmul.f32 %v669, %v1355
        %v1387 = vmul.f32 %v676, %v1355
        %v1388 = vmul.f32 %v683, %v1355
        %v1389 = vmul.f32 %v690, %v1355
        %v1390 = vmul.f32 %v697, %v1355
        %v1391 = vmul.f32 %v704, %v1355
        %v1392 = vmul.f32 %v711, %v1355
        %v1393 = vmul.f32 %v718, %v1355
        %v1394 = vmul.f32 %v725, %v1355
        %v1395 = vmul.f32 %v732, %v1355
        %v1396 = vmul.f32 %v739, %v1355
        %v1397 = vmul.f32 %v746, %v1355
        %v1398 = vmul.f32 %v753, %v1355
        %v1399 = vmul.f32 %v760, %v1355
        %v1400 = vmul.f32 %v767, %v1355
        %v1401 = vmul.f32 %v774, %v1355
        %v1402 = vmul.f32 %v781, %v1355
        %v1403 = vmul.f32 %v788, %v1355
        %v1404 = vmul.f32 %v795, %v1355
        %v1405 = vmul.f32 %v802, %v1355
        %v1406 = vmul.f32 %v809, %v1355
        %v1407 = vmul.f32 %v816, %v1355
        %v1408 = vmul.f32 %v823, %v1355
        %v1409 = vmul.f32 %v830, %v1355
        %v1410 = vmul.f32 %v837, %v1355
        %v1411 = vmul.f32 %v844, %v1355
        %v1412 = vmul.f32 %v851, %v1355
        %v1413 = vmul.f32 %v858, %v1355
        %v1414 = vmul.f32 %v865, %v1355
        %v1415 = vmul.f32 %v872, %v1355
        %v1416 = vmul.f32 %v879, %v1355
        %v1417 = vmul.f32 %v886, %v1355
        %v1418 = vmul.f32 %v893, %v1355
        %v1419 = vmul.f32 %v900, %v1355
        %v1420 = vmul.f32 %v907, %v1355
        %v1421 = vmul.f32 %v914, %v1355
        %v1422 = vmul.f32 %v921, %v1355
        %v1423 = vmul.f32 %v928, %v1355
        %v1424 = vmul.f32 %v935, %v1355
        %v1425 = vmul.f32 %v942, %v1355
        %v1426 = vmul.f32 %v949, %v1355
        %v1427 = vmul.f32 %v956, %v1355
        %v1428 = vmul.f32 %v963, %v1355
        %v1429 = vmul.f32 %v970, %v1355
        %v1430 = vmul.f32 %v977, %v1355
        %v1431 = vmul.f32 %v984, %v1355
        %v1432 = vmul.f32 %v991, %v1355
        %v1433 = vmul.f32 %v998, %v1355
        %v1434 = vmul.f32 %v1005, %v1355
        %v1435 = vmul.f32 %v1012, %v1355
        %v1436 = vmul.f32 %v1019, %v1355
        %v1437 = vmul.f32 %v1026, %v1355
        %v1438 = vmul.f32 %v1033, %v1355
        %v1439 = vmul.f32 %v1040, %v1355
        %v1440 = vmul.f32 %v1047, %v1355
        %v1441 = vmul.f32 %v1054, %v1355
        %v1442 = vmul.f32 %v1061, %v1355
        %v1443 = vmul.f32 %v1068, %v1355
        %v1444 = vmul.f32 %v1075, %v1355
        %v1445 = vmul.f32 %v1082, %v1355
        %v1446 = vmul.f32 %v1089, %v1355
        %v1447 = vmul.f32 %v1096, %v1355
        %v1448 = vmul.f32 %v1103, %v1355
        %v1449 = vmul.f32 %v1110, %v1355
        %v1450 = vmul.f32 %v1117, %v1355
        %v1451 = vmul.f32 %v1124, %v1355
        %v1452 = vmul.f32 %v1131, %v1355
        %v1453 = vmul.f32 %v1138, %v1355
        %v1454 = vmul.f32 %v1145, %v1355
        %v1455 = vmul.f32 %v1152, %v1355
        %v1456 = vmul.f32 %v1159, %v1355
        %v1457 = vmul.f32 %v1166, %v1355
        %v1458 = vmul.f32 %v1173, %v1355
        %v1459 = vmul.f32 %v1180, %v1355
        %v1460 = vmul.f32 %v1187, %v1355
        %v1461 = vmul.f32 %v1194, %v1355
        %v1462 = vmul.f32 %v1201, %v1355
        %v1463 = vmul.f32 %v1208, %v1355
        %v1464 = vmul.f32 %v1215, %v1355
        %v1465 = vmul.f32 %v1222, %v1355
        %v1466 = vmul.f32 %v1229, %v1355
        %v1467 = vmul.f32 %v1236, %v1355
        %v1468 = vmul.f32 %v1243, %v1355
        %v1469 = vmul.f32 %v1250, %v1355
        %v1470 = vmul.f32 %v1257, %v1355
        %v1471 = vmul.f32 %v1264, %v1355
        %v1472 = vmul.f32 %v1271, %v1355
        %v1473 = vmul.f32 %v1278, %v1355
        %v1474 = vmul.f32 %v1285, %v1355
        %v1475 = vmul.f32 %v1292, %v1355
        %v1476 = vmul.f32 %v1299, %v1355
        %v1477 = vmul.f32 %v1306, %v1355
        %v1478 = vmul.f32 %v1313, %v1355
        %v1479 = vmul.f32 %v1320, %v1355
        %v1480 = vmul.f32 %v1327, %v1355
        %v1481 = vmul.f32 %v1334, %v1355
        %v1482 = vmul.f32 %v1341, %v1355
        %v1483 = vmul.f32 %v1348, %v1355
        %v1484 = vmul.f32 %v1356, %v1356
        %v1485 = vmul.f32 %v1357, %v1357
        %v1486 = vmul.f32 %v1358, %v1358
        %v1487 = vmul.f32 %v1359, %v1359
        %v1488 = vmul.f32 %v1360, %v1360
        %v1489 = vmul.f32 %v1361, %v1361
        %v1490 = vmul.f32 %v1362, %v1362
        %v1491 = vmul.f32 %v1363, %v1363
        %v1492 = vmul.f32 %v1364, %v1364
        %v1493 = vmul.f32 %v1365, %v1365
        %v1494 = vmul.f32 %v1366, %v1366
        %v1495 = vmul.f32 %v1367, %v1367
        %v1496 = vmul.f32 %v1368, %v1368
        %v1497 = vmul.f32 %v1369, %v1369
        %v1498 = vmul.f32 %v1370, %v1370
        %v1499 = vmul.f32 %v1371, %v1371
        %v1500 = vmul.f32 %v1372, %v1372
        %v1501 = vmul.f32 %v1373, %v1373
        %v1502 = vmul.f32 %v1374, %v1374
        %v1503 = vmul.f32 %v1375, %v1375
        %v1504 = vmul.f32 %v1376, %v1376
        %v1505 = vmul.f32 %v1377, %v1377
        %v1506 = vmul.f32 %v1378, %v1378
        %v1507 = vmul.f32 %v1379, %v1379
        %v1508 = vmul.f32 %v1380, %v1380
        %v1509 = vmul.f32 %v1381, %v1381
        %v1510 = vmul.f32 %v1382, %v1382
        %v1511 = vmul.f32 %v1383, %v1383
        %v1512 = vmul.f32 %v1384, %v1384
        %v1513 = vmul.f32 %v1385, %v1385
        %v1514 = vmul.f32 %v1386, %v1386
        %v1515 = vmul.f32 %v1387, %v1387
        %v1516 = vmul.f32 %v1388, %v1388
        %v1517 = vmul.f32 %v1389, %v1389
        %v1518 = vmul.f32 %v1390, %v1390
        %v1519 = vmul.f32 %v1391, %v1391
        %v1520 = vmul.f32 %v1392, %v1392
        %v1521 = vmul.f32 %v1393, %v1393
        %v1522 = vmul.f32 %v1394, %v1394
        %v1523 = vmul.f32 %v1395, %v1395
        %v1524 = vmul.f32 %v1396, %v1396
        %v1525 = vmul.f32 %v1397, %v1397
        %v1526 = vmul.f32 %v1398, %v1398
        %v1527 = vmul.f32 %v1399, %v1399
        %v1528 = vmul.f32 %v1400, %v1400
        %v1529 = vmul.f32 %v1401, %v1401
        %v1530 = vmul.f32 %v1402, %v1402
        %v1531 = vmul.f32 %v1403, %v1403
        %v1532 = vmul.f32 %v1404, %v1404
        %v1533 = vmul.f32 %v1405, %v1405
        %v1534 = vmul.f32 %v1406, %v1406
        %v1535 = vmul.f32 %v1407, %v1407
        %v1536 = vmul.f32 %v1408, %v1408
        %v1537 = vmul.f32 %v1409, %v1409
        %v1538 = vmul.f32 %v1410, %v1410
        %v1539 = vmul.f32 %v1411, %v1411
        %v1540 = vmul.f32 %v1412, %v1412
        %v1541 = vmul.f32 %v1413, %v1413
        %v1542 = vmul.f32 %v1414, %v1414
        %v1543 = vmul.f32 %v1415, %v1415
        %v1544 = vmul.f32 %v1416, %v1416
        %v1545 = vmul.f32 %v1417, %v1417
        %v1546 = vmul.f32 %v1418, %v1418
        %v1547 = vmul.f32 %v1419, %v1419
        %v1548 = vmul.f32 %v1420, %v1420
        %v1549 = vmul.f32 %v1421, %v1421
        %v1550 = vmul.f32 %v1422, %v1422
        %v1551 = vmul.f32 %v1423, %v1423
        %v1552 = vmul.f32 %v1424, %v1424
        %v1553 = vmul.f32 %v1425, %v1425
        %v1554 = vmul.f32 %v1426, %v1426
        %v1555 = vmul.f32 %v1427, %v1427
        %v1556 = vmul.f32 %v1428, %v1428
        %v1557 = vmul.f32 %v1429, %v1429
        %v1558 = vmul.f32 %v1430, %v1430
        %v1559 = vmul.f32 %v1431, %v1431
        %v1560 = vmul.f32 %v1432, %v1432
        %v1561 = vmul.f32 %v1433, %v1433
        %v1562 = vmul.f32 %v1434, %v1434
        %v1563 = vmul.f32 %v1435, %v1435
        %v1564 = vmul.f32 %v1436, %v1436
        %v1565 = vmul.f32 %v1437, %v1437
        %v1566 = vmul.f32 %v1438, %v1438
        %v1567 = vmul.f32 %v1439, %v1439
        %v1568 = vmul.f32 %v1440, %v1440
        %v1569 = vmul.f32 %v1441, %v1441
        %v1570 = vmul.f32 %v1442, %v1442
        %v1571 = vmul.f32 %v1443, %v1443
        %v1572 = vmul.f32 %v1444, %v1444
        %v1573 = vmul.f32 %v1445, %v1445
        %v1574 = vmul.f32 %v1446, %v1446
        %v1575 = vmul.f32 %v1447, %v1447
        %v1576 = vmul.f32 %v1448, %v1448
        %v1577 = vmul.f32 %v1449, %v1449
        %v1578 = vmul.f32 %v1450, %v1450
        %v1579 = vmul.f32 %v1451, %v1451
        %v1580 = vmul.f32 %v1452, %v1452
        %v1581 = vmul.f32 %v1453, %v1453
        %v1582 = vmul.f32 %v1454, %v1454
        %v1583 = vmul.f32 %v1455, %v1455
        %v1584 = vmul.f32 %v1456, %v1456
        %v1585 = vmul.f32 %v1457, %v1457
        %v1586 = vmul.f32 %v1458, %v1458
        %v1587 = vmul.f32 %v1459, %v1459
        %v1588 = vmul.f32 %v1460, %v1460
        %v1589 = vmul.f32 %v1461, %v1461
        %v1590 = vmul.f32 %v1462, %v1462
        %v1591 = vmul.f32 %v1463, %v1463
        %v1592 = vmul.f32 %v1464, %v1464
        %v1593 = vmul.f32 %v1465, %v1465
        %v1594 = vmul.f32 %v1466, %v1466
        %v1595 = vmul.f32 %v1467, %v1467
        %v1596 = vmul.f32 %v1468, %v1468
        %v1597 = vmul.f32 %v1469, %v1469
        %v1598 = vmul.f32 %v1470, %v1470
        %v1599 = vmul.f32 %v1471, %v1471
        %v1600 = vmul.f32 %v1472, %v1472
        %v1601 = vmul.f32 %v1473, %v1473
        %v1602 = vmul.f32 %v1474, %v1474
        %v1603 = vmul.f32 %v1475, %v1475
        %v1604 = vmul.f32 %v1476, %v1476
        %v1605 = vmul.f32 %v1477, %v1477
        %v1606 = vmul.f32 %v1478, %v1478
        %v1607 = vmul.f32 %v1479, %v1479
        %v1608 = vmul.f32 %v1480, %v1480
        %v1609 = vmul.f32 %v1481, %v1481
        %v1610 = vmul.f32 %v1482, %v1482
        %v1611 = vmul.f32 %v1483, %v1483
        %vm1740 = vcmask 1041409
        %v1741 = vsel %vm1740, %v1485, %v1484
        %vm1742 = vcmask 1042434
        %v1743 = vsel %vm1742, %v1486, %v1741
        %vm1744 = vcmask 1043459
        %v1745 = vsel %vm1744, %v1487, %v1743
        %vm1746 = vcmask 1044484
        %v1747 = vsel %vm1746, %v1488, %v1745
        %vm1748 = vcmask 1045509
        %v1749 = vsel %vm1748, %v1489, %v1747
        %vm1750 = vcmask 1046534
        %v1751 = vsel %vm1750, %v1490, %v1749
        %vm1752 = vcmask 1047559
        %v1753 = vsel %vm1752, %v1491, %v1751
        %v1754 = vsel %vm1740, %v1493, %v1492
        %v1755 = vsel %vm1742, %v1494, %v1754
        %v1756 = vsel %vm1744, %v1495, %v1755
        %v1757 = vsel %vm1746, %v1496, %v1756
        %v1758 = vsel %vm1748, %v1497, %v1757
        %v1759 = vsel %vm1750, %v1498, %v1758
        %v1760 = vsel %vm1752, %v1499, %v1759
        %v1761 = vsel %vm1740, %v1501, %v1500
        %v1762 = vsel %vm1742, %v1502, %v1761
        %v1763 = vsel %vm1744, %v1503, %v1762
        %v1764 = vsel %vm1746, %v1504, %v1763
        %v1765 = vsel %vm1748, %v1505, %v1764
        %v1766 = vsel %vm1750, %v1506, %v1765
        %v1767 = vsel %vm1752, %v1507, %v1766
        %v1768 = vsel %vm1740, %v1509, %v1508
        %v1769 = vsel %vm1742, %v1510, %v1768
        %v1770 = vsel %vm1744, %v1511, %v1769
        %v1771 = vsel %vm1746, %v1512, %v1770
        %v1772 = vsel %vm1748, %v1513, %v1771
        %v1773 = vsel %vm1750, %v1514, %v1772
        %v1774 = vsel %vm1752, %v1515, %v1773
        %v1775 = vsel %vm1740, %v1517, %v1516
        %v1776 = vsel %vm1742, %v1518, %v1775
        %v1777 = vsel %vm1744, %v1519, %v1776
        %v1778 = vsel %vm1746, %v1520, %v1777
        %v1779 = vsel %vm1748, %v1521, %v1778
        %v1780 = vsel %vm1750, %v1522, %v1779
        %v1781 = vsel %vm1752, %v1523, %v1780
        %v1782 = vsel %vm1740, %v1525, %v1524
        %v1783 = vsel %vm1742, %v1526, %v1782
        %v1784 = vsel %vm1744, %v1527, %v1783
        %v1785 = vsel %vm1746, %v1528, %v1784
        %v1786 = vsel %vm1748, %v1529, %v1785
        %v1787 = vsel %vm1750, %v1530, %v1786
        %v1788 = vsel %vm1752, %v1531, %v1787
        %v1789 = vsel %vm1740, %v1533, %v1532
        %v1790 = vsel %vm1742, %v1534, %v1789
        %v1791 = vsel %vm1744, %v1535, %v1790
        %v1792 = vsel %vm1746, %v1536, %v1791
        %v1793 = vsel %vm1748, %v1537, %v1792
        %v1794 = vsel %vm1750, %v1538, %v1793
        %v1795 = vsel %vm1752, %v1539, %v1794
        %v1796 = vsel %vm1740, %v1541, %v1540
        %v1797 = vsel %vm1742, %v1542, %v1796
        %v1798 = vsel %vm1744, %v1543, %v1797
        %v1799 = vsel %vm1746, %v1544, %v1798
        %v1800 = vsel %vm1748, %v1545, %v1799
        %v1801 = vsel %vm1750, %v1546, %v1800
        %v1802 = vsel %vm1752, %v1547, %v1801
        %v1803 = vsel %vm1740, %v1549, %v1548
        %v1804 = vsel %vm1742, %v1550, %v1803
        %v1805 = vsel %vm1744, %v1551, %v1804
        %v1806 = vsel %vm1746, %v1552, %v1805
        %v1807 = vsel %vm1748, %v1553, %v1806
        %v1808 = vsel %vm1750, %v1554, %v1807
        %v1809 = vsel %vm1752, %v1555, %v1808
        %v1810 = vsel %vm1740, %v1557, %v1556
        %v1811 = vsel %vm1742, %v1558, %v1810
        %v1812 = vsel %vm1744, %v1559, %v1811
        %v1813 = vsel %vm1746, %v1560, %v1812
        %v1814 = vsel %vm1748, %v1561, %v1813
        %v1815 = vsel %vm1750, %v1562, %v1814
        %v1816 = vsel %vm1752, %v1563, %v1815
        %v1817 = vsel %vm1740, %v1565, %v1564
        %v1818 = vsel %vm1742, %v1566, %v1817
        %v1819 = vsel %vm1744, %v1567, %v1818
        %v1820 = vsel %vm1746, %v1568, %v1819
        %v1821 = vsel %vm1748, %v1569, %v1820
        %v1822 = vsel %vm1750, %v1570, %v1821
        %v1823 = vsel %vm1752, %v1571, %v1822
        %v1824 = vsel %vm1740, %v1573, %v1572
        %v1825 = vsel %vm1742, %v1574, %v1824
        %v1826 = vsel %vm1744, %v1575, %v1825
        %v1827 = vsel %vm1746, %v1576, %v1826
        %v1828 = vsel %vm1748, %v1577, %v1827
        %v1829 = vsel %vm1750, %v1578, %v1828
        %v1830 = vsel %vm1752, %v1579, %v1829
        %v1831 = vsel %vm1740, %v1581, %v1580
        %v1832 = vsel %vm1742, %v1582, %v1831
        %v1833 = vsel %vm1744, %v1583, %v1832
        %v1834 = vsel %vm1746, %v1584, %v1833
        %v1835 = vsel %vm1748, %v1585, %v1834
        %v1836 = vsel %vm1750, %v1586, %v1835
        %v1837 = vsel %vm1752, %v1587, %v1836
        %v1838 = vsel %vm1740, %v1589, %v1588
        %v1839 = vsel %vm1742, %v1590, %v1838
        %v1840 = vsel %vm1744, %v1591, %v1839
        %v1841 = vsel %vm1746, %v1592, %v1840
        %v1842 = vsel %vm1748, %v1593, %v1841
        %v1843 = vsel %vm1750, %v1594, %v1842
        %v1844 = vsel %vm1752, %v1595, %v1843
        %v1845 = vsel %vm1740, %v1597, %v1596
        %v1846 = vsel %vm1742, %v1598, %v1845
        %v1847 = vsel %vm1744, %v1599, %v1846
        %v1848 = vsel %vm1746, %v1600, %v1847
        %v1849 = vsel %vm1748, %v1601, %v1848
        %v1850 = vsel %vm1750, %v1602, %v1849
        %v1851 = vsel %vm1752, %v1603, %v1850
        %v1852 = vsel %vm1740, %v1605, %v1604
        %v1853 = vsel %vm1742, %v1606, %v1852
        %v1854 = vsel %vm1744, %v1607, %v1853
        %v1855 = vsel %vm1746, %v1608, %v1854
        %v1856 = vsel %vm1748, %v1609, %v1855
        %v1857 = vsel %vm1750, %v1610, %v1856
        %v1858 = vsel %vm1752, %v1611, %v1857
        %1875 = vadd.xlane.f32.xlu0 %v1753
        %v1876 = vpop.xlane.xlu0 %1875
        %1877 = vadd.xlane.f32.xlu0 %v1760
        %v1878 = vpop.xlane.xlu0 %1877
        %1879 = vadd.xlane.f32.xlu0 %v1767
        %v1880 = vpop.xlane.xlu0 %1879
        %1881 = vadd.xlane.f32.xlu0 %v1774
        %v1882 = vpop.xlane.xlu0 %1881
        %1883 = vadd.xlane.f32.xlu0 %v1781
        %v1884 = vpop.xlane.xlu0 %1883
        %1885 = vadd.xlane.f32.xlu0 %v1788
        %v1886 = vpop.xlane.xlu0 %1885
        %1887 = vadd.xlane.f32.xlu0 %v1795
        %v1888 = vpop.xlane.xlu0 %1887
        %1889 = vadd.xlane.f32.xlu0 %v1802
        %v1890 = vpop.xlane.xlu0 %1889
        %1891 = vadd.xlane.f32.xlu0 %v1809
        %v1892 = vpop.xlane.xlu0 %1891
        %1893 = vadd.xlane.f32.xlu0 %v1816
        %v1894 = vpop.xlane.xlu0 %1893
        %1895 = vadd.xlane.f32.xlu0 %v1823
        %v1896 = vpop.xlane.xlu0 %1895
        %1897 = vadd.xlane.f32.xlu0 %v1830
        %v1898 = vpop.xlane.xlu0 %1897
        %1899 = vadd.xlane.f32.xlu0 %v1837
        %v1900 = vpop.xlane.xlu0 %1899
        %1901 = vadd.xlane.f32.xlu0 %v1844
        %v1902 = vpop.xlane.xlu0 %1901
        %1903 = vadd.xlane.f32.xlu0 %v1851
        %v1904 = vpop.xlane.xlu0 %1903
        %1905 = vadd.xlane.f32.xlu0 %v1858
        %v1906 = vpop.xlane.xlu0 %1905
        %v1907 = vrsqrt.pop %v1876
        %v1908 = vmul.f32 %v1907, %v1876
        %v1909 = vmul.f32 %v1908, %v1907
        %v1910 = vmul.f32 0.5, %v1909
        %v1911 = vsub.f32 1.5, %v1910
        %v1912 = vmul.f32 %v1907, %v1911
        %vm1913 = vweird.f32 %v1876
        %vm1914 = vweird.f32 %v1907
        %vm1915 = vmor %vm1913, %vm1914
        %v1916 = vsel %vm1915, %v1907, %v1912
        %v1917 = vrsqrt.pop %v1878
        %v1918 = vmul.f32 %v1917, %v1878
        %v1919 = vmul.f32 %v1918, %v1917
        %v1920 = vmul.f32 0.5, %v1919
        %v1921 = vsub.f32 1.5, %v1920
        %v1922 = vmul.f32 %v1917, %v1921
        %vm1923 = vweird.f32 %v1878
        %vm1924 = vweird.f32 %v1917
        %vm1925 = vmor %vm1923, %vm1924
        %v1926 = vsel %vm1925, %v1917, %v1922
        %v1927 = vrsqrt.pop %v1880
        %v1928 = vmul.f32 %v1927, %v1880
        %v1929 = vmul.f32 %v1928, %v1927
        %v1930 = vmul.f32 0.5, %v1929
        %v1931 = vsub.f32 1.5, %v1930
        %v1932 = vmul.f32 %v1927, %v1931
        %vm1933 = vweird.f32 %v1880
        %vm1934 = vweird.f32 %v1927
        %vm1935 = vmor %vm1933, %vm1934
        %v1936 = vsel %vm1935, %v1927, %v1932
        %v1937 = vrsqrt.pop %v1882
        %v1938 = vmul.f32 %v1937, %v1882
        %v1939 = vmul.f32 %v1938, %v1937
        %v1940 = vmul.f32 0.5, %v1939
        %v1941 = vsub.f32 1.5, %v1940
        %v1942 = vmul.f32 %v1937, %v1941
        %vm1943 = vweird.f32 %v1882
        %vm1944 = vweird.f32 %v1937
        %vm1945 = vmor %vm1943, %vm1944
        %v1946 = vsel %vm1945, %v1937, %v1942
        %v1947 = vrsqrt.pop %v1884
        %v1948 = vmul.f32 %v1947, %v1884
        %v1949 = vmul.f32 %v1948, %v1947
        %v1950 = vmul.f32 0.5, %v1949
        %v1951 = vsub.f32 1.5, %v1950
        %v1952 = vmul.f32 %v1947, %v1951
        %vm1953 = vweird.f32 %v1884
        %vm1954 = vweird.f32 %v1947
        %vm1955 = vmor %vm1953, %vm1954
        %v1956 = vsel %vm1955, %v1947, %v1952
        %v1957 = vrsqrt.pop %v1886
        %v1958 = vmul.f32 %v1957, %v1886
        %v1959 = vmul.f32 %v1958, %v1957
        %v1960 = vmul.f32 0.5, %v1959
        %v1961 = vsub.f32 1.5, %v1960
        %v1962 = vmul.f32 %v1957, %v1961
        %vm1963 = vweird.f32 %v1886
        %vm1964 = vweird.f32 %v1957
        %vm1965 = vmor %vm1963, %vm1964
        %v1966 = vsel %vm1965, %v1957, %v1962
        %v1967 = vrsqrt.pop %v1888
        %v1968 = vmul.f32 %v1967, %v1888
        %v1969 = vmul.f32 %v1968, %v1967
        %v1970 = vmul.f32 0.5, %v1969
        %v1971 = vsub.f32 1.5, %v1970
        %v1972 = vmul.f32 %v1967, %v1971
        %vm1973 = vweird.f32 %v1888
        %vm1974 = vweird.f32 %v1967
        %vm1975 = vmor %vm1973, %vm1974
        %v1976 = vsel %vm1975, %v1967, %v1972
        %v1977 = vrsqrt.pop %v1890
        %v1978 = vmul.f32 %v1977, %v1890
        %v1979 = vmul.f32 %v1978, %v1977
        %v1980 = vmul.f32 0.5, %v1979
        %v1981 = vsub.f32 1.5, %v1980
        %v1982 = vmul.f32 %v1977, %v1981
        %vm1983 = vweird.f32 %v1890
        %vm1984 = vweird.f32 %v1977
        %vm1985 = vmor %vm1983, %vm1984
        %v1986 = vsel %vm1985, %v1977, %v1982
        %v1987 = vrsqrt.pop %v1892
        %v1988 = vmul.f32 %v1987, %v1892
        %v1989 = vmul.f32 %v1988, %v1987
        %v1990 = vmul.f32 0.5, %v1989
        %v1991 = vsub.f32 1.5, %v1990
        %v1992 = vmul.f32 %v1987, %v1991
        %vm1993 = vweird.f32 %v1892
        %vm1994 = vweird.f32 %v1987
        %vm1995 = vmor %vm1993, %vm1994
        %v1996 = vsel %vm1995, %v1987, %v1992
        %v1997 = vrsqrt.pop %v1894
        %v1998 = vmul.f32 %v1997, %v1894
        %v1999 = vmul.f32 %v1998, %v1997
        %v2000 = vmul.f32 0.5, %v1999
        %v2001 = vsub.f32 1.5, %v2000
        %v2002 = vmul.f32 %v1997, %v2001
        %vm2003 = vweird.f32 %v1894
        %vm2004 = vweird.f32 %v1997
        %vm2005 = vmor %vm2003, %vm2004
        %v2006 = vsel %vm2005, %v1997, %v2002
        %v2007 = vrsqrt.pop %v1896
        %v2008 = vmul.f32 %v2007, %v1896
        %v2009 = vmul.f32 %v2008, %v2007
        %v2010 = vmul.f32 0.5, %v2009
        %v2011 = vsub.f32 1.5, %v2010
        %v2012 = vmul.f32 %v2007, %v2011
        %vm2013 = vweird.f32 %v1896
        %vm2014 = vweird.f32 %v2007
        %vm2015 = vmor %vm2013, %vm2014
        %v2016 = vsel %vm2015, %v2007, %v2012
        %v2017 = vrsqrt.pop %v1898
        %v2018 = vmul.f32 %v2017, %v1898
        %v2019 = vmul.f32 %v2018, %v2017
        %v2020 = vmul.f32 0.5, %v2019
        %v2021 = vsub.f32 1.5, %v2020
        %v2022 = vmul.f32 %v2017, %v2021
        %vm2023 = vweird.f32 %v1898
        %vm2024 = vweird.f32 %v2017
        %vm2025 = vmor %vm2023, %vm2024
        %v2026 = vsel %vm2025, %v2017, %v2022
        %v2027 = vrsqrt.pop %v1900
        %v2028 = vmul.f32 %v2027, %v1900
        %v2029 = vmul.f32 %v2028, %v2027
        %v2030 = vmul.f32 0.5, %v2029
        %v2031 = vsub.f32 1.5, %v2030
        %v2032 = vmul.f32 %v2027, %v2031
        %vm2033 = vweird.f32 %v1900
        %vm2034 = vweird.f32 %v2027
        %vm2035 = vmor %vm2033, %vm2034
        %v2036 = vsel %vm2035, %v2027, %v2032
        %v2037 = vrsqrt.pop %v1902
        %v2038 = vmul.f32 %v2037, %v1902
        %v2039 = vmul.f32 %v2038, %v2037
        %v2040 = vmul.f32 0.5, %v2039
        %v2041 = vsub.f32 1.5, %v2040
        %v2042 = vmul.f32 %v2037, %v2041
        %vm2043 = vweird.f32 %v1902
        %vm2044 = vweird.f32 %v2037
        %vm2045 = vmor %vm2043, %vm2044
        %v2046 = vsel %vm2045, %v2037, %v2042
        %v2047 = vrsqrt.pop %v1904
        %v2048 = vmul.f32 %v2047, %v1904
        %v2049 = vmul.f32 %v2048, %v2047
        %v2050 = vmul.f32 0.5, %v2049
        %v2051 = vsub.f32 1.5, %v2050
        %v2052 = vmul.f32 %v2047, %v2051
        %vm2053 = vweird.f32 %v1904
        %vm2054 = vweird.f32 %v2047
        %vm2055 = vmor %vm2053, %vm2054
        %v2056 = vsel %vm2055, %v2047, %v2052
        %v2057 = vrsqrt.pop %v1906
        %v2058 = vmul.f32 %v2057, %v1906
        %v2059 = vmul.f32 %v2058, %v2057
        %v2060 = vmul.f32 0.5, %v2059
        %v2061 = vsub.f32 1.5, %v2060
        %v2062 = vmul.f32 %v2057, %v2061
        %vm2063 = vweird.f32 %v1906
        %vm2064 = vweird.f32 %v2057
        %vm2065 = vmor %vm2063, %vm2064
        %v2066 = vsel %vm2065, %v2057, %v2062
        %v2083 = vrot.slane %v1916, 1
        %v2084 = vrot.slane %v1916, 2
        %v2085 = vrot.slane %v1916, 3
        %v2086 = vrot.slane %v1916, 4
        %v2087 = vrot.slane %v1916, 5
        %v2088 = vrot.slane %v1916, 6
        %v2089 = vrot.slane %v1916, 7
        %v2090 = vrot.slane %v1926, 1
        %v2091 = vrot.slane %v1926, 2
        %v2092 = vrot.slane %v1926, 3
        %v2093 = vrot.slane %v1926, 4
        %v2094 = vrot.slane %v1926, 5
        %v2095 = vrot.slane %v1926, 6
        %v2096 = vrot.slane %v1926, 7
        %v2097 = vrot.slane %v1936, 1
        %v2098 = vrot.slane %v1936, 2
        %v2099 = vrot.slane %v1936, 3
        %v2100 = vrot.slane %v1936, 4
        %v2101 = vrot.slane %v1936, 5
        %v2102 = vrot.slane %v1936, 6
        %v2103 = vrot.slane %v1936, 7
        %v2104 = vrot.slane %v1946, 1
        %v2105 = vrot.slane %v1946, 2
        %v2106 = vrot.slane %v1946, 3
        %v2107 = vrot.slane %v1946, 4
        %v2108 = vrot.slane %v1946, 5
        %v2109 = vrot.slane %v1946, 6
        %v2110 = vrot.slane %v1946, 7
        %v2111 = vrot.slane %v1956, 1
        %v2112 = vrot.slane %v1956, 2
        %v2113 = vrot.slane %v1956, 3
        %v2114 = vrot.slane %v1956, 4
        %v2115 = vrot.slane %v1956, 5
        %v2116 = vrot.slane %v1956, 6
        %v2117 = vrot.slane %v1956, 7
        %v2118 = vrot.slane %v1966, 1
        %v2119 = vrot.slane %v1966, 2
        %v2120 = vrot.slane %v1966, 3
        %v2121 = vrot.slane %v1966, 4
        %v2122 = vrot.slane %v1966, 5
        %v2123 = vrot.slane %v1966, 6
        %v2124 = vrot.slane %v1966, 7
        %v2125 = vrot.slane %v1976, 1
        %v2126 = vrot.slane %v1976, 2
        %v2127 = vrot.slane %v1976, 3
        %v2128 = vrot.slane %v1976, 4
        %v2129 = vrot.slane %v1976, 5
        %v2130 = vrot.slane %v1976, 6
        %v2131 = vrot.slane %v1976, 7
        %v2132 = vrot.slane %v1986, 1
        %v2133 = vrot.slane %v1986, 2
        %v2134 = vrot.slane %v1986, 3
        %v2135 = vrot.slane %v1986, 4
        %v2136 = vrot.slane %v1986, 5
        %v2137 = vrot.slane %v1986, 6
        %v2138 = vrot.slane %v1986, 7
        %v2139 = vrot.slane %v1996, 1
        %v2140 = vrot.slane %v1996, 2
        %v2141 = vrot.slane %v1996, 3
        %v2142 = vrot.slane %v1996, 4
        %v2143 = vrot.slane %v1996, 5
        %v2144 = vrot.slane %v1996, 6
        %v2145 = vrot.slane %v1996, 7
        %v2146 = vrot.slane %v2006, 1
        %v2147 = vrot.slane %v2006, 2
        %v2148 = vrot.slane %v2006, 3
        %v2149 = vrot.slane %v2006, 4
        %v2150 = vrot.slane %v2006, 5
        %v2151 = vrot.slane %v2006, 6
        %v2152 = vrot.slane %v2006, 7
        %v2153 = vrot.slane %v2016, 1
        %v2154 = vrot.slane %v2016, 2
        %v2155 = vrot.slane %v2016, 3
        %v2156 = vrot.slane %v2016, 4
        %v2157 = vrot.slane %v2016, 5
        %v2158 = vrot.slane %v2016, 6
        %v2159 = vrot.slane %v2016, 7
        %v2160 = vrot.slane %v2026, 1
        %v2161 = vrot.slane %v2026, 2
        %v2162 = vrot.slane %v2026, 3
        %v2163 = vrot.slane %v2026, 4
        %v2164 = vrot.slane %v2026, 5
        %v2165 = vrot.slane %v2026, 6
        %v2166 = vrot.slane %v2026, 7
        %v2167 = vrot.slane %v2036, 1
        %v2168 = vrot.slane %v2036, 2
        %v2169 = vrot.slane %v2036, 3
        %v2170 = vrot.slane %v2036, 4
        %v2171 = vrot.slane %v2036, 5
        %v2172 = vrot.slane %v2036, 6
        %v2173 = vrot.slane %v2036, 7
        %v2174 = vrot.slane %v2046, 1
        %v2175 = vrot.slane %v2046, 2
        %v2176 = vrot.slane %v2046, 3
        %v2177 = vrot.slane %v2046, 4
        %v2178 = vrot.slane %v2046, 5
        %v2179 = vrot.slane %v2046, 6
        %v2180 = vrot.slane %v2046, 7
        %v2181 = vrot.slane %v2056, 1
        %v2182 = vrot.slane %v2056, 2
        %v2183 = vrot.slane %v2056, 3
        %v2184 = vrot.slane %v2056, 4
        %v2185 = vrot.slane %v2056, 5
        %v2186 = vrot.slane %v2056, 6
        %v2187 = vrot.slane %v2056, 7
        %v2188 = vrot.slane %v2066, 1
        %v2189 = vrot.slane %v2066, 2
        %v2190 = vrot.slane %v2066, 3
        %v2191 = vrot.slane %v2066, 4
        %v2192 = vrot.slane %v2066, 5
        %v2193 = vrot.slane %v2066, 6
        %v2194 = vrot.slane %v2066, 7
        %v2323 = vmul.f32 %v1356, %v1916
        %v2324 = vmul.f32 %v1357, %v2083
        %v2325 = vmul.f32 %v1358, %v2084
        %v2326 = vmul.f32 %v1359, %v2085
        %v2327 = vmul.f32 %v1360, %v2086
        %v2328 = vmul.f32 %v1361, %v2087
        %v2329 = vmul.f32 %v1362, %v2088
        %v2330 = vmul.f32 %v1363, %v2089
        %v2331 = vmul.f32 %v1364, %v1926
        %v2332 = vmul.f32 %v1365, %v2090
        %v2333 = vmul.f32 %v1366, %v2091
        %v2334 = vmul.f32 %v1367, %v2092
        %v2335 = vmul.f32 %v1368, %v2093
        %v2336 = vmul.f32 %v1369, %v2094
        %v2337 = vmul.f32 %v1370, %v2095
        %v2338 = vmul.f32 %v1371, %v2096
        %v2339 = vmul.f32 %v1372, %v1936
        %v2340 = vmul.f32 %v1373, %v2097
        %v2341 = vmul.f32 %v1374, %v2098
        %v2342 = vmul.f32 %v1375, %v2099
        %v2343 = vmul.f32 %v1376, %v2100
        %v2344 = vmul.f32 %v1377, %v2101
        %v2345 = vmul.f32 %v1378, %v2102
        %v2346 = vmul.f32 %v1379, %v2103
        %v2347 = vmul.f32 %v1380, %v1946
        %v2348 = vmul.f32 %v1381, %v2104
        %v2349 = vmul.f32 %v1382, %v2105
        %v2350 = vmul.f32 %v1383, %v2106
        %v2351 = vmul.f32 %v1384, %v2107
        %v2352 = vmul.f32 %v1385, %v2108
        %v2353 = vmul.f32 %v1386, %v2109
        %v2354 = vmul.f32 %v1387, %v2110
        %v2355 = vmul.f32 %v1388, %v1956
        %v2356 = vmul.f32 %v1389, %v2111
        %v2357 = vmul.f32 %v1390, %v2112
        %v2358 = vmul.f32 %v1391, %v2113
        %v2359 = vmul.f32 %v1392, %v2114
        %v2360 = vmul.f32 %v1393, %v2115
        %v2361 = vmul.f32 %v1394, %v2116
        %v2362 = vmul.f32 %v1395, %v2117
        %v2363 = vmul.f32 %v1396, %v1966
        %v2364 = vmul.f32 %v1397, %v2118
        %v2365 = vmul.f32 %v1398, %v2119
        %v2366 = vmul.f32 %v1399, %v2120
        %v2367 = vmul.f32 %v1400, %v2121
        %v2368 = vmul.f32 %v1401, %v2122
        %v2369 = vmul.f32 %v1402, %v2123
        %v2370 = vmul.f32 %v1403, %v2124
        %v2371 = vmul.f32 %v1404, %v1976
        %v2372 = vmul.f32 %v1405, %v2125
        %v2373 = vmul.f32 %v1406, %v2126
        %v2374 = vmul.f32 %v1407, %v2127
        %v2375 = vmul.f32 %v1408, %v2128
        %v2376 = vmul.f32 %v1409, %v2129
        %v2377 = vmul.f32 %v1410, %v2130
        %v2378 = vmul.f32 %v1411, %v2131
        %v2379 = vmul.f32 %v1412, %v1986
        %v2380 = vmul.f32 %v1413, %v2132
        %v2381 = vmul.f32 %v1414, %v2133
        %v2382 = vmul.f32 %v1415, %v2134
        %v2383 = vmul.f32 %v1416, %v2135
        %v2384 = vmul.f32 %v1417, %v2136
        %v2385 = vmul.f32 %v1418, %v2137
        %v2386 = vmul.f32 %v1419, %v2138
        %v2387 = vmul.f32 %v1420, %v1996
        %v2388 = vmul.f32 %v1421, %v2139
        %v2389 = vmul.f32 %v1422, %v2140
        %v2390 = vmul.f32 %v1423, %v2141
        %v2391 = vmul.f32 %v1424, %v2142
        %v2392 = vmul.f32 %v1425, %v2143
        %v2393 = vmul.f32 %v1426, %v2144
        %v2394 = vmul.f32 %v1427, %v2145
        %v2395 = vmul.f32 %v1428, %v2006
        %v2396 = vmul.f32 %v1429, %v2146
        %v2397 = vmul.f32 %v1430, %v2147
        %v2398 = vmul.f32 %v1431, %v2148
        %v2399 = vmul.f32 %v1432, %v2149
        %v2400 = vmul.f32 %v1433, %v2150
        %v2401 = vmul.f32 %v1434, %v2151
        %v2402 = vmul.f32 %v1435, %v2152
        %v2403 = vmul.f32 %v1436, %v2016
        %v2404 = vmul.f32 %v1437, %v2153
        %v2405 = vmul.f32 %v1438, %v2154
        %v2406 = vmul.f32 %v1439, %v2155
        %v2407 = vmul.f32 %v1440, %v2156
        %v2408 = vmul.f32 %v1441, %v2157
        %v2409 = vmul.f32 %v1442, %v2158
        %v2410 = vmul.f32 %v1443, %v2159
        %v2411 = vmul.f32 %v1444, %v2026
        %v2412 = vmul.f32 %v1445, %v2160
        %v2413 = vmul.f32 %v1446, %v2161
        %v2414 = vmul.f32 %v1447, %v2162
        %v2415 = vmul.f32 %v1448, %v2163
        %v2416 = vmul.f32 %v1449, %v2164
        %v2417 = vmul.f32 %v1450, %v2165
        %v2418 = vmul.f32 %v1451, %v2166
        %v2419 = vmul.f32 %v1452, %v2036
        %v2420 = vmul.f32 %v1453, %v2167
        %v2421 = vmul.f32 %v1454, %v2168
        %v2422 = vmul.f32 %v1455, %v2169
        %v2423 = vmul.f32 %v1456, %v2170
        %v2424 = vmul.f32 %v1457, %v2171
        %v2425 = vmul.f32 %v1458, %v2172
        %v2426 = vmul.f32 %v1459, %v2173
        %v2427 = vmul.f32 %v1460, %v2046
        %v2428 = vmul.f32 %v1461, %v2174
        %v2429 = vmul.f32 %v1462, %v2175
        %v2430 = vmul.f32 %v1463, %v2176
        %v2431 = vmul.f32 %v1464, %v2177
        %v2432 = vmul.f32 %v1465, %v2178
        %v2433 = vmul.f32 %v1466, %v2179
        %v2434 = vmul.f32 %v1467, %v2180
        %v2435 = vmul.f32 %v1468, %v2056
        %v2436 = vmul.f32 %v1469, %v2181
        %v2437 = vmul.f32 %v1470, %v2182
        %v2438 = vmul.f32 %v1471, %v2183
        %v2439 = vmul.f32 %v1472, %v2184
        %v2440 = vmul.f32 %v1473, %v2185
        %v2441 = vmul.f32 %v1474, %v2186
        %v2442 = vmul.f32 %v1475, %v2187
        %v2443 = vmul.f32 %v1476, %v2066
        %v2444 = vmul.f32 %v1477, %v2188
        %v2445 = vmul.f32 %v1478, %v2189
        %v2446 = vmul.f32 %v1479, %v2190
        %v2447 = vmul.f32 %v1480, %v2191
        %v2448 = vmul.f32 %v1481, %v2192
        %v2449 = vmul.f32 %v1482, %v2193
        %v2450 = vmul.f32 %v1483, %v2194
        %v2451 = vld [vmem:[%s1] sm:$0xff]
        %v2452 = vld [vmem:[%s1 + $0x8] sm:$0xff]
        %v2453 = vld [vmem:[%s1 + $0x10] sm:$0xff]
        %v2454 = vld [vmem:[%s1 + $0x18] sm:$0xff]
        %v2455 = vld [vmem:[%s1 + $0x20] sm:$0xff]
        %v2456 = vld [vmem:[%s1 + $0x28] sm:$0xff]
        %v2457 = vld [vmem:[%s1 + $0x30] sm:$0xff]
        %v2458 = vld [vmem:[%s1 + $0x38] sm:$0xff]
        %v2459 = vld [vmem:[%s1 + $0x40] sm:$0xff]
        %v2460 = vld [vmem:[%s1 + $0x48] sm:$0xff]
        %v2461 = vld [vmem:[%s1 + $0x50] sm:$0xff]
        %v2462 = vld [vmem:[%s1 + $0x58] sm:$0xff]
        %v2463 = vld [vmem:[%s1 + $0x60] sm:$0xff]
        %v2464 = vld [vmem:[%s1 + $0x68] sm:$0xff]
        %v2465 = vld [vmem:[%s1 + $0x70] sm:$0xff]
        %v2466 = vld [vmem:[%s1 + $0x78] sm:$0xff]
        %v2595 = vrot.slane %v2324, 7
        %v2596 = vsel %vm1740, %v2595, %v2323
        %v2597 = vrot.slane %v2325, 6
        %v2598 = vsel %vm1742, %v2597, %v2596
        %v2599 = vrot.slane %v2326, 5
        %v2600 = vsel %vm1744, %v2599, %v2598
        %v2601 = vrot.slane %v2327, 4
        %v2602 = vsel %vm1746, %v2601, %v2600
        %v2603 = vrot.slane %v2328, 3
        %v2604 = vsel %vm1748, %v2603, %v2602
        %v2605 = vrot.slane %v2329, 2
        %v2606 = vsel %vm1750, %v2605, %v2604
        %v2607 = vrot.slane %v2330, 1
        %v2608 = vsel %vm1752, %v2607, %v2606
        %v2609 = vrot.slane %v2332, 7
        %v2610 = vsel %vm1740, %v2609, %v2331
        %v2611 = vrot.slane %v2333, 6
        %v2612 = vsel %vm1742, %v2611, %v2610
        %v2613 = vrot.slane %v2334, 5
        %v2614 = vsel %vm1744, %v2613, %v2612
        %v2615 = vrot.slane %v2335, 4
        %v2616 = vsel %vm1746, %v2615, %v2614
        %v2617 = vrot.slane %v2336, 3
        %v2618 = vsel %vm1748, %v2617, %v2616
        %v2619 = vrot.slane %v2337, 2
        %v2620 = vsel %vm1750, %v2619, %v2618
        %v2621 = vrot.slane %v2338, 1
        %v2622 = vsel %vm1752, %v2621, %v2620
        %v2623 = vrot.slane %v2340, 7
        %v2624 = vsel %vm1740, %v2623, %v2339
        %v2625 = vrot.slane %v2341, 6
        %v2626 = vsel %vm1742, %v2625, %v2624
        %v2627 = vrot.slane %v2342, 5
        %v2628 = vsel %vm1744, %v2627, %v2626
        %v2629 = vrot.slane %v2343, 4
        %v2630 = vsel %vm1746, %v2629, %v2628
        %v2631 = vrot.slane %v2344, 3
        %v2632 = vsel %vm1748, %v2631, %v2630
        %v2633 = vrot.slane %v2345, 2
        %v2634 = vsel %vm1750, %v2633, %v2632
        %v2635 = vrot.slane %v2346, 1
        %v2636 = vsel %vm1752, %v2635, %v2634
        %v2637 = vrot.slane %v2348, 7
        %v2638 = vsel %vm1740, %v2637, %v2347
        %v2639 = vrot.slane %v2349, 6
        %v2640 = vsel %vm1742, %v2639, %v2638
        %v2641 = vrot.slane %v2350, 5
        %v2642 = vsel %vm1744, %v2641, %v2640
        %v2643 = vrot.slane %v2351, 4
        %v2644 = vsel %vm1746, %v2643, %v2642
        %v2645 = vrot.slane %v2352, 3
        %v2646 = vsel %vm1748, %v2645, %v2644
        %v2647 = vrot.slane %v2353, 2
        %v2648 = vsel %vm1750, %v2647, %v2646
        %v2649 = vrot.slane %v2354, 1
        %v2650 = vsel %vm1752, %v2649, %v2648
        %v2651 = vrot.slane %v2356, 7
        %v2652 = vsel %vm1740, %v2651, %v2355
        %v2653 = vrot.slane %v2357, 6
        %v2654 = vsel %vm1742, %v2653, %v2652
        %v2655 = vrot.slane %v2358, 5
        %v2656 = vsel %vm1744, %v2655, %v2654
        %v2657 = vrot.slane %v2359, 4
        %v2658 = vsel %vm1746, %v2657, %v2656
        %v2659 = vrot.slane %v2360, 3
        %v2660 = vsel %vm1748, %v2659, %v2658
        %v2661 = vrot.slane %v2361, 2
        %v2662 = vsel %vm1750, %v2661, %v2660
        %v2663 = vrot.slane %v2362, 1
        %v2664 = vsel %vm1752, %v2663, %v2662
        %v2665 = vrot.slane %v2364, 7
        %v2666 = vsel %vm1740, %v2665, %v2363
        %v2667 = vrot.slane %v2365, 6
        %v2668 = vsel %vm1742, %v2667, %v2666
        %v2669 = vrot.slane %v2366, 5
        %v2670 = vsel %vm1744, %v2669, %v2668
        %v2671 = vrot.slane %v2367, 4
        %v2672 = vsel %vm1746, %v2671, %v2670
        %v2673 = vrot.slane %v2368, 3
        %v2674 = vsel %vm1748, %v2673, %v2672
        %v2675 = vrot.slane %v2369, 2
        %v2676 = vsel %vm1750, %v2675, %v2674
        %v2677 = vrot.slane %v2370, 1
        %v2678 = vsel %vm1752, %v2677, %v2676
        %v2679 = vrot.slane %v2372, 7
        %v2680 = vsel %vm1740, %v2679, %v2371
        %v2681 = vrot.slane %v2373, 6
        %v2682 = vsel %vm1742, %v2681, %v2680
        %v2683 = vrot.slane %v2374, 5
        %v2684 = vsel %vm1744, %v2683, %v2682
        %v2685 = vrot.slane %v2375, 4
        %v2686 = vsel %vm1746, %v2685, %v2684
        %v2687 = vrot.slane %v2376, 3
        %v2688 = vsel %vm1748, %v2687, %v2686
        %v2689 = vrot.slane %v2377, 2
        %v2690 = vsel %vm1750, %v2689, %v2688
        %v2691 = vrot.slane %v2378, 1
        %v2692 = vsel %vm1752, %v2691, %v2690
        %v2693 = vrot.slane %v2380, 7
        %v2694 = vsel %vm1740, %v2693, %v2379
        %v2695 = vrot.slane %v2381, 6
        %v2696 = vsel %vm1742, %v2695, %v2694
        %v2697 = vrot.slane %v2382, 5
        %v2698 = vsel %vm1744, %v2697, %v2696
        %v2699 = vrot.slane %v2383, 4
        %v2700 = vsel %vm1746, %v2699, %v2698
        %v2701 = vrot.slane %v2384, 3
        %v2702 = vsel %vm1748, %v2701, %v2700
        %v2703 = vrot.slane %v2385, 2
        %v2704 = vsel %vm1750, %v2703, %v2702
        %v2705 = vrot.slane %v2386, 1
        %v2706 = vsel %vm1752, %v2705, %v2704
        %v2707 = vrot.slane %v2388, 7
        %v2708 = vsel %vm1740, %v2707, %v2387
        %v2709 = vrot.slane %v2389, 6
        %v2710 = vsel %vm1742, %v2709, %v2708
        %v2711 = vrot.slane %v2390, 5
        %v2712 = vsel %vm1744, %v2711, %v2710
        %v2713 = vrot.slane %v2391, 4
        %v2714 = vsel %vm1746, %v2713, %v2712
        %v2715 = vrot.slane %v2392, 3
        %v2716 = vsel %vm1748, %v2715, %v2714
        %v2717 = vrot.slane %v2393, 2
        %v2718 = vsel %vm1750, %v2717, %v2716
        %v2719 = vrot.slane %v2394, 1
        %v2720 = vsel %vm1752, %v2719, %v2718
        %v2721 = vrot.slane %v2396, 7
        %v2722 = vsel %vm1740, %v2721, %v2395
        %v2723 = vrot.slane %v2397, 6
        %v2724 = vsel %vm1742, %v2723, %v2722
        %v2725 = vrot.slane %v2398, 5
        %v2726 = vsel %vm1744, %v2725, %v2724
        %v2727 = vrot.slane %v2399, 4
        %v2728 = vsel %vm1746, %v2727, %v2726
        %v2729 = vrot.slane %v2400, 3
        %v2730 = vsel %vm1748, %v2729, %v2728
        %v2731 = vrot.slane %v2401, 2
        %v2732 = vsel %vm1750, %v2731, %v2730
        %v2733 = vrot.slane %v2402, 1
        %v2734 = vsel %vm1752, %v2733, %v2732
        %v2735 = vrot.slane %v2404, 7
        %v2736 = vsel %vm1740, %v2735, %v2403
        %v2737 = vrot.slane %v2405, 6
        %v2738 = vsel %vm1742, %v2737, %v2736
        %v2739 = vrot.slane %v2406, 5
        %v2740 = vsel %vm1744, %v2739, %v2738
        %v2741 = vrot.slane %v2407, 4
        %v2742 = vsel %vm1746, %v2741, %v2740
        %v2743 = vrot.slane %v2408, 3
        %v2744 = vsel %vm1748, %v2743, %v2742
        %v2745 = vrot.slane %v2409, 2
        %v2746 = vsel %vm1750, %v2745, %v2744
        %v2747 = vrot.slane %v2410, 1
        %v2748 = vsel %vm1752, %v2747, %v2746
        %v2749 = vrot.slane %v2412, 7
        %v2750 = vsel %vm1740, %v2749, %v2411
        %v2751 = vrot.slane %v2413, 6
        %v2752 = vsel %vm1742, %v2751, %v2750
        %v2753 = vrot.slane %v2414, 5
        %v2754 = vsel %vm1744, %v2753, %v2752
        %v2755 = vrot.slane %v2415, 4
        %v2756 = vsel %vm1746, %v2755, %v2754
        %v2757 = vrot.slane %v2416, 3
        %v2758 = vsel %vm1748, %v2757, %v2756
        %v2759 = vrot.slane %v2417, 2
        %v2760 = vsel %vm1750, %v2759, %v2758
        %v2761 = vrot.slane %v2418, 1
        %v2762 = vsel %vm1752, %v2761, %v2760
        %v2763 = vrot.slane %v2420, 7
        %v2764 = vsel %vm1740, %v2763, %v2419
        %v2765 = vrot.slane %v2421, 6
        %v2766 = vsel %vm1742, %v2765, %v2764
        %v2767 = vrot.slane %v2422, 5
        %v2768 = vsel %vm1744, %v2767, %v2766
        %v2769 = vrot.slane %v2423, 4
        %v2770 = vsel %vm1746, %v2769, %v2768
        %v2771 = vrot.slane %v2424, 3
        %v2772 = vsel %vm1748, %v2771, %v2770
        %v2773 = vrot.slane %v2425, 2
        %v2774 = vsel %vm1750, %v2773, %v2772
        %v2775 = vrot.slane %v2426, 1
        %v2776 = vsel %vm1752, %v2775, %v2774
        %v2777 = vrot.slane %v2428, 7
        %v2778 = vsel %vm1740, %v2777, %v2427
        %v2779 = vrot.slane %v2429, 6
        %v2780 = vsel %vm1742, %v2779, %v2778
        %v2781 = vrot.slane %v2430, 5
        %v2782 = vsel %vm1744, %v2781, %v2780
        %v2783 = vrot.slane %v2431, 4
        %v2784 = vsel %vm1746, %v2783, %v2782
        %v2785 = vrot.slane %v2432, 3
        %v2786 = vsel %vm1748, %v2785, %v2784
        %v2787 = vrot.slane %v2433, 2
        %v2788 = vsel %vm1750, %v2787, %v2786
        %v2789 = vrot.slane %v2434, 1
        %v2790 = vsel %vm1752, %v2789, %v2788
        %v2791 = vrot.slane %v2436, 7
        %v2792 = vsel %vm1740, %v2791, %v2435
        %v2793 = vrot.slane %v2437, 6
        %v2794 = vsel %vm1742, %v2793, %v2792
        %v2795 = vrot.slane %v2438, 5
        %v2796 = vsel %vm1744, %v2795, %v2794
        %v2797 = vrot.slane %v2439, 4
        %v2798 = vsel %vm1746, %v2797, %v2796
        %v2799 = vrot.slane %v2440, 3
        %v2800 = vsel %vm1748, %v2799, %v2798
        %v2801 = vrot.slane %v2441, 2
        %v2802 = vsel %vm1750, %v2801, %v2800
        %v2803 = vrot.slane %v2442, 1
        %v2804 = vsel %vm1752, %v2803, %v2802
        %v2805 = vrot.slane %v2444, 7
        %v2806 = vsel %vm1740, %v2805, %v2443
        %v2807 = vrot.slane %v2445, 6
        %v2808 = vsel %vm1742, %v2807, %v2806
        %v2809 = vrot.slane %v2446, 5
        %v2810 = vsel %vm1744, %v2809, %v2808
        %v2811 = vrot.slane %v2447, 4
        %v2812 = vsel %vm1746, %v2811, %v2810
        %v2813 = vrot.slane %v2448, 3
        %v2814 = vsel %vm1748, %v2813, %v2812
        %v2815 = vrot.slane %v2449, 2
        %v2816 = vsel %vm1750, %v2815, %v2814
        %v2817 = vrot.slane %v2450, 1
        %v2818 = vsel %vm1752, %v2817, %v2816
        %2835 = vmatpush.xpose.msra.mxu0 %v2466
        %2836 = vmatpush.xpose.msra.mxu0 %v2465
        %2837 = vmatpush.xpose.msra.mxu0 %v2464
        %2838 = vmatpush.xpose.msra.mxu0 %v2463
        %2839 = vmatpush.xpose.msra.mxu0 %v2462
        %2840 = vmatpush.xpose.msra.mxu0 %v2461
        %2841 = vmatpush.xpose.msra.mxu0 %v2460
        %2842 = vmatpush.xpose.msra.mxu0 %v2459
        %2843 = vmatpush.xpose.msra.mxu0 %v2458
        %2844 = vmatpush.xpose.msra.mxu0 %v2457
        %2845 = vmatpush.xpose.msra.mxu0 %v2456
        %2846 = vmatpush.xpose.msra.mxu0 %v2455
        %2847 = vmatpush.xpose.msra.mxu0 %v2454
        %2848 = vmatpush.xpose.msra.mxu0 %v2453
        %2849 = vmatpush.xpose.msra.mxu0 %v2452
        %2850 = vmatpush.xpose.msra.mxu0 %v2451
        %2851 = vmatmul.f32.gmra.mxu0 %v2608
        %v2852 = vpop.f32.mrf.mxu0
        %v2853 = vadd.f32 0.0, %v2852
        %2854 = vmatmul.f32.gmra.mxu0 %v2622
        %v2855 = vpop.f32.mrf.mxu0
        %v2856 = vadd.f32 0.0, %v2855
        %2857 = vmatmul.f32.gmra.mxu0 %v2636
        %v2858 = vpop.f32.mrf.mxu0
        %v2859 = vadd.f32 0.0, %v2858
        %2860 = vmatmul.f32.gmra.mxu0 %v2650
        %v2861 = vpop.f32.mrf.mxu0
        %v2862 = vadd.f32 0.0, %v2861
        %2863 = vmatmul.f32.gmra.mxu0 %v2664
        %v2864 = vpop.f32.mrf.mxu0
        %v2865 = vadd.f32 0.0, %v2864
        %2866 = vmatmul.f32.gmra.mxu0 %v2678
        %v2867 = vpop.f32.mrf.mxu0
        %v2868 = vadd.f32 0.0, %v2867
        %2869 = vmatmul.f32.gmra.mxu0 %v2692
        %v2870 = vpop.f32.mrf.mxu0
        %v2871 = vadd.f32 0.0, %v2870
        %2872 = vmatmul.f32.gmra.mxu0 %v2706
        %v2873 = vpop.f32.mrf.mxu0
        %v2874 = vadd.f32 0.0, %v2873
        %2875 = vmatmul.f32.gmra.mxu0 %v2720
        %v2876 = vpop.f32.mrf.mxu0
        %v2877 = vadd.f32 0.0, %v2876
        %2878 = vmatmul.f32.gmra.mxu0 %v2734
        %v2879 = vpop.f32.mrf.mxu0
        %v2880 = vadd.f32 0.0, %v2879
        %2881 = vmatmul.f32.gmra.mxu0 %v2748
        %v2882 = vpop.f32.mrf.mxu0
        %v2883 = vadd.f32 0.0, %v2882
        %2884 = vmatmul.f32.gmra.mxu0 %v2762
        %v2885 = vpop.f32.mrf.mxu0
        %v2886 = vadd.f32 0.0, %v2885
        %2887 = vmatmul.f32.gmra.mxu0 %v2776
        %v2888 = vpop.f32.mrf.mxu0
        %v2889 = vadd.f32 0.0, %v2888
        %2890 = vmatmul.f32.gmra.mxu0 %v2790
        %v2891 = vpop.f32.mrf.mxu0
        %v2892 = vadd.f32 0.0, %v2891
        %2893 = vmatmul.f32.gmra.mxu0 %v2804
        %v2894 = vpop.f32.mrf.mxu0
        %v2895 = vadd.f32 0.0, %v2894
        %2896 = vmatmul.f32.gmra.mxu0 %v2818
        %v2897 = vpop.f32.mrf.mxu0
        %v2898 = vadd.f32 0.0, %v2897
        %2899 = vdwg.mxu0
        %p2900 = scmp.eq.s32.totalorder %s24, 0
        %p2901 = scmp.eq.s32.totalorder %s25, 0
        %p2902 = pnand %p2900, %p2901
        %p2903 = pneg %p2902
        // Predicated region
        $region49: #{tpu_custom_call.1} parent=47 // pred_check
          _
        $region50: #{tpu_custom_call.1} parent=47 // pred_check_branch
          %2905 = sbr.rel (%p2902) target = $region52
        $region51: #{tpu_custom_call.1} parent=47 // pred_region
          %2906 = vst [vmem:[#allocation2] sm:$0x1] 0.0
          %2907 = vst [vmem:[#allocation3] sm:$0x1] 0.0
          %s2908 = scalar_lea.smem [#allocation4], 0
          %2909 = sst [smem:[%s2908]] 0.0
        $region52: #{tpu_custom_call.1} parent=47 // pred_fallthru
          _
        // Predicated region
        $region53: #{tpu_custom_call.1} parent=47 // pred_check
          %p2910 = pneg %p2900
        $region54: #{tpu_custom_call.1} parent=47 // pred_check_branch
          %2912 = sbr.rel (%p2910) target = $region56
        $region55: #{tpu_custom_call.1} parent=47 // pred_region
          %v2913 = vld [vmem:[#allocation2] sm:$0x1]
          %v2914 = vadd.f32 %v2853, %v2856
          %v2915 = vadd.f32 %v2914, %v2859
          %v2916 = vadd.f32 %v2915, %v2862
          %v2917 = vadd.f32 %v2916, %v2865
          %v2918 = vadd.f32 %v2917, %v2868
          %v2919 = vadd.f32 %v2918, %v2871
          %v2920 = vadd.f32 %v2919, %v2874
          %v2921 = vadd.f32 %v2920, %v2877
          %v2922 = vadd.f32 %v2921, %v2880
          %v2923 = vadd.f32 %v2922, %v2883
          %v2924 = vadd.f32 %v2923, %v2886
          %v2925 = vadd.f32 %v2924, %v2889
          %v2926 = vadd.f32 %v2925, %v2892
          %v2927 = vadd.f32 %v2926, %v2895
          %v2928 = vadd.f32 %v2927, %v2898
          %v2929 = vrot.slane %v2928, 4
          %v2930 = vadd.f32 %v2928, %v2929
          %v2931 = vrot.slane %v2930, 2
          %v2932 = vadd.f32 %v2930, %v2931
          %v2933 = vrot.slane %v2932, 1
          %v2934 = vadd.f32 %v2932, %v2933
          %v2935 = vadd.f32 %v2913, %v2934
          %2936 = vst [vmem:[#allocation2] sm:$0x1] %v2935
          %v2937 = vld [vmem:[#allocation3] sm:$0x1]
          %v2938 = vmul.f32 %v2853, %v2853
          %v2939 = vmul.f32 %v2856, %v2856
          %v2940 = vmul.f32 %v2859, %v2859
          %v2941 = vmul.f32 %v2862, %v2862
          %v2942 = vmul.f32 %v2865, %v2865
          %v2943 = vmul.f32 %v2868, %v2868
          %v2944 = vmul.f32 %v2871, %v2871
          %v2945 = vmul.f32 %v2874, %v2874
          %v2946 = vmul.f32 %v2877, %v2877
          %v2947 = vmul.f32 %v2880, %v2880
          %v2948 = vmul.f32 %v2883, %v2883
          %v2949 = vmul.f32 %v2886, %v2886
          %v2950 = vmul.f32 %v2889, %v2889
          %v2951 = vmul.f32 %v2892, %v2892
          %v2952 = vmul.f32 %v2895, %v2895
          %v2953 = vmul.f32 %v2898, %v2898
          %v2954 = vadd.f32 %v2938, %v2939
          %v2955 = vadd.f32 %v2954, %v2940
          %v2956 = vadd.f32 %v2955, %v2941
          %v2957 = vadd.f32 %v2956, %v2942
          %v2958 = vadd.f32 %v2957, %v2943
          %v2959 = vadd.f32 %v2958, %v2944
          %v2960 = vadd.f32 %v2959, %v2945
          %v2961 = vadd.f32 %v2960, %v2946
          %v2962 = vadd.f32 %v2961, %v2947
          %v2963 = vadd.f32 %v2962, %v2948
          %v2964 = vadd.f32 %v2963, %v2949
          %v2965 = vadd.f32 %v2964, %v2950
          %v2966 = vadd.f32 %v2965, %v2951
          %v2967 = vadd.f32 %v2966, %v2952
          %v2968 = vadd.f32 %v2967, %v2953
          %v2969 = vrot.slane %v2968, 4
          %v2970 = vadd.f32 %v2968, %v2969
          %v2971 = vrot.slane %v2970, 2
          %v2972 = vadd.f32 %v2970, %v2971
          %v2973 = vrot.slane %v2972, 1
          %v2974 = vadd.f32 %v2972, %v2973
          %v2975 = vadd.f32 %v2937, %v2974
          %2976 = vst [vmem:[#allocation3] sm:$0x1] %v2975
        $region56: #{tpu_custom_call.1} parent=47 // pred_fallthru
          _
        %p2977 = scmp.eq.s32.totalorder %s24, 1
        // Predicated region
        $region57: #{tpu_custom_call.1} parent=47 // pred_check
          %p2978 = pneg %p2977
        $region58: #{tpu_custom_call.1} parent=47 // pred_check_branch
          %2980 = sbr.rel (%p2978) target = $region60
        $region59: #{tpu_custom_call.1} parent=47 // pred_region
          %v2981 = vld [vmem:[#allocation2] sm:$0x1]
          %v2982 = vld [vmem:[#allocation3] sm:$0x1]
          %v2983 = vmul.f32 %v2981, 0.00390625
          %v2984 = vmul.f32 %v2981, %v2983
          %v2985 = vsub.f32 %v2982, %v2984
          %v2986 = vmul.f32 %v2985, 0.003921569
          %v2987 = vrsqrt.pop %v2986
          %v2988 = vmul.f32 %v2987, %v2986
          %v2989 = vmul.f32 %v2988, %v2987
          %v2990 = vmul.f32 0.5, %v2989
          %v2991 = vsub.f32 1.5, %v2990
          %v2992 = vmul.f32 %v2987, %v2991
          %v2993 = vmul.f32 %v2986, %v2992
          %vm2994 = vcmp.eq.f32.partialorder %v2986, inf
          %v2995 = vsel %vm2994, %v2986, %v2993
          %vm2996 = vcmp.eq.f32.partialorder %v2986, 0.0
          %v2997 = vand.u32 %v2986, 2147483648
          %v2998 = vsel %vm2996, %v2997, %v2995
          %v3000 = vperm.slane %v2983, 0
          %v3002 = vsub.f32 %v2853, %v3000
          %v3003 = vsub.f32 %v2856, %v3000
          %v3004 = vsub.f32 %v2859, %v3000
          %v3005 = vsub.f32 %v2862, %v3000
          %v3006 = vsub.f32 %v2865, %v3000
          %v3007 = vsub.f32 %v2868, %v3000
          %v3008 = vsub.f32 %v2871, %v3000
          %v3009 = vsub.f32 %v2874, %v3000
          %v3010 = vsub.f32 %v2877, %v3000
          %v3011 = vsub.f32 %v2880, %v3000
          %v3012 = vsub.f32 %v2883, %v3000
          %v3013 = vsub.f32 %v2886, %v3000
          %v3014 = vsub.f32 %v2889, %v3000
          %v3015 = vsub.f32 %v2892, %v3000
          %v3016 = vsub.f32 %v2895, %v3000
          %v3017 = vsub.f32 %v2898, %v3000
          %v3018 = vrsqrt.pop %v2998
          %v3019 = vmul.f32 %v3018, %v2998
          %v3020 = vmul.f32 %v3019, %v3018
          %v3021 = vmul.f32 0.5, %v3020
          %v3022 = vsub.f32 1.5, %v3021
          %v3023 = vmul.f32 %v3018, %v3022
          %vm3024 = vweird.f32 %v2998
          %vm3025 = vweird.f32 %v3018
          %vm3026 = vmor %vm3024, %vm3025
          %v3027 = vsel %vm3026, %v3018, %v3023
          %v3029 = vperm.slane %v3027, 0
          %v3031 = vmul.f32 %v3002, %v3029
          %v3032 = vmul.f32 %v3003, %v3029
          %v3033 = vmul.f32 %v3004, %v3029
          %v3034 = vmul.f32 %v3005, %v3029
          %v3035 = vmul.f32 %v3006, %v3029
          %v3036 = vmul.f32 %v3007, %v3029
          %v3037 = vmul.f32 %v3008, %v3029
          %v3038 = vmul.f32 %v3009, %v3029
          %v3039 = vmul.f32 %v3010, %v3029
          %v3040 = vmul.f32 %v3011, %v3029
          %v3041 = vmul.f32 %v3012, %v3029
          %v3042 = vmul.f32 %v3013, %v3029
          %v3043 = vmul.f32 %v3014, %v3029
          %v3044 = vmul.f32 %v3015, %v3029
          %v3045 = vmul.f32 %v3016, %v3029
          %v3046 = vmul.f32 %v3017, %v3029
          %v3047 = vld [vmem:[%s2] sm:$0x1]
          %v3049 = vperm.slane %v3047, 0
          %v3051 = vadd.f32 %v3031, %v3049
          %v3052 = vadd.f32 %v3032, %v3049
          %v3053 = vadd.f32 %v3033, %v3049
          %v3054 = vadd.f32 %v3034, %v3049
          %v3055 = vadd.f32 %v3035, %v3049
          %v3056 = vadd.f32 %v3036, %v3049
          %v3057 = vadd.f32 %v3037, %v3049
          %v3058 = vadd.f32 %v3038, %v3049
          %v3059 = vadd.f32 %v3039, %v3049
          %v3060 = vadd.f32 %v3040, %v3049
          %v3061 = vadd.f32 %v3041, %v3049
          %v3062 = vadd.f32 %v3042, %v3049
          %v3063 = vadd.f32 %v3043, %v3049
          %v3064 = vadd.f32 %v3044, %v3049
          %v3065 = vadd.f32 %v3045, %v3049
          %v3066 = vadd.f32 %v3046, %v3049
          %v3067 = vmax.f32 %v3051, -1.0
          %v3068 = vmax.f32 %v3052, -1.0
          %v3069 = vmax.f32 %v3053, -1.0
          %v3070 = vmax.f32 %v3054, -1.0
          %v3071 = vmax.f32 %v3055, -1.0
          %v3072 = vmax.f32 %v3056, -1.0
          %v3073 = vmax.f32 %v3057, -1.0
          %v3074 = vmax.f32 %v3058, -1.0
          %v3075 = vmax.f32 %v3059, -1.0
          %v3076 = vmax.f32 %v3060, -1.0
          %v3077 = vmax.f32 %v3061, -1.0
          %v3078 = vmax.f32 %v3062, -1.0
          %v3079 = vmax.f32 %v3063, -1.0
          %v3080 = vmax.f32 %v3064, -1.0
          %v3081 = vmax.f32 %v3065, -1.0
          %v3082 = vmax.f32 %v3066, -1.0
          %v3083 = vmin.f32 %v3067, 1.0
          %v3084 = vmin.f32 %v3068, 1.0
          %v3085 = vmin.f32 %v3069, 1.0
          %v3086 = vmin.f32 %v3070, 1.0
          %v3087 = vmin.f32 %v3071, 1.0
          %v3088 = vmin.f32 %v3072, 1.0
          %v3089 = vmin.f32 %v3073, 1.0
          %v3090 = vmin.f32 %v3074, 1.0
          %v3091 = vmin.f32 %v3075, 1.0
          %v3092 = vmin.f32 %v3076, 1.0
          %v3093 = vmin.f32 %v3077, 1.0
          %v3094 = vmin.f32 %v3078, 1.0
          %v3095 = vmin.f32 %v3079, 1.0
          %v3096 = vmin.f32 %v3080, 1.0
          %v3097 = vmin.f32 %v3081, 1.0
          %v3098 = vmin.f32 %v3082, 1.0
          %v3099 = vld [vmem:[%s3] sm:$0xff]
          %v3100 = vld [vmem:[%s3 + $0x8] sm:$0xff]
          %v3101 = vld [vmem:[%s3 + $0x10] sm:$0xff]
          %v3102 = vld [vmem:[%s3 + $0x18] sm:$0xff]
          %v3103 = vld [vmem:[%s3 + $0x20] sm:$0xff]
          %v3104 = vld [vmem:[%s3 + $0x28] sm:$0xff]
          %v3105 = vld [vmem:[%s3 + $0x30] sm:$0xff]
          %v3106 = vld [vmem:[%s3 + $0x38] sm:$0xff]
          %v3107 = vld [vmem:[%s3 + $0x40] sm:$0xff]
          %v3108 = vld [vmem:[%s3 + $0x48] sm:$0xff]
          %v3109 = vld [vmem:[%s3 + $0x50] sm:$0xff]
          %v3110 = vld [vmem:[%s3 + $0x58] sm:$0xff]
          %v3111 = vld [vmem:[%s3 + $0x60] sm:$0xff]
          %v3112 = vld [vmem:[%s3 + $0x68] sm:$0xff]
          %v3113 = vld [vmem:[%s3 + $0x70] sm:$0xff]
          %v3114 = vld [vmem:[%s3 + $0x78] sm:$0xff]
          %3115 = vmatpush.msra.mxu0 %v3114
          %3116 = vmatpush.msra.mxu0 %v3113
          %3117 = vmatpush.msra.mxu0 %v3112
          %3118 = vmatpush.msra.mxu0 %v3111
          %3119 = vmatpush.msra.mxu0 %v3110
          %3120 = vmatpush.msra.mxu0 %v3109
          %3121 = vmatpush.msra.mxu0 %v3108
          %3122 = vmatpush.msra.mxu0 %v3107
          %3123 = vmatpush.msra.mxu0 %v3106
          %3124 = vmatpush.msra.mxu0 %v3105
          %3125 = vmatpush.msra.mxu0 %v3104
          %3126 = vmatpush.msra.mxu0 %v3103
          %3127 = vmatpush.msra.mxu0 %v3102
          %3128 = vmatpush.msra.mxu0 %v3101
          %3129 = vmatpush.msra.mxu0 %v3100
          %3130 = vmatpush.msra.mxu0 %v3099
          %3131 = vmatmul.f32.gmra.mxu0 %v3083
          %v3132 = vpop.f32.mrf.mxu0
          %v3133 = vadd.f32 0.0, %v3132
          %3134 = vmatmul.f32.gmra.mxu0 %v3084
          %v3135 = vpop.f32.mrf.mxu0
          %v3136 = vadd.f32 0.0, %v3135
          %3137 = vmatmul.f32.gmra.mxu0 %v3085
          %v3138 = vpop.f32.mrf.mxu0
          %v3139 = vadd.f32 0.0, %v3138
          %3140 = vmatmul.f32.gmra.mxu0 %v3086
          %v3141 = vpop.f32.mrf.mxu0
          %v3142 = vadd.f32 0.0, %v3141
          %3143 = vmatmul.f32.gmra.mxu0 %v3087
          %v3144 = vpop.f32.mrf.mxu0
          %v3145 = vadd.f32 0.0, %v3144
          %3146 = vmatmul.f32.gmra.mxu0 %v3088
          %v3147 = vpop.f32.mrf.mxu0
          %v3148 = vadd.f32 0.0, %v3147
          %3149 = vmatmul.f32.gmra.mxu0 %v3089
          %v3150 = vpop.f32.mrf.mxu0
          %v3151 = vadd.f32 0.0, %v3150
          %3152 = vmatmul.f32.gmra.mxu0 %v3090
          %v3153 = vpop.f32.mrf.mxu0
          %v3154 = vadd.f32 0.0, %v3153
          %3155 = vmatmul.f32.gmra.mxu0 %v3091
          %v3156 = vpop.f32.mrf.mxu0
          %v3157 = vadd.f32 0.0, %v3156
          %3158 = vmatmul.f32.gmra.mxu0 %v3092
          %v3159 = vpop.f32.mrf.mxu0
          %v3160 = vadd.f32 0.0, %v3159
          %3161 = vmatmul.f32.gmra.mxu0 %v3093
          %v3162 = vpop.f32.mrf.mxu0
          %v3163 = vadd.f32 0.0, %v3162
          %3164 = vmatmul.f32.gmra.mxu0 %v3094
          %v3165 = vpop.f32.mrf.mxu0
          %v3166 = vadd.f32 0.0, %v3165
          %3167 = vmatmul.f32.gmra.mxu0 %v3095
          %v3168 = vpop.f32.mrf.mxu0
          %v3169 = vadd.f32 0.0, %v3168
          %3170 = vmatmul.f32.gmra.mxu0 %v3096
          %v3171 = vpop.f32.mrf.mxu0
          %v3172 = vadd.f32 0.0, %v3171
          %3173 = vmatmul.f32.gmra.mxu0 %v3097
          %v3174 = vpop.f32.mrf.mxu0
          %v3175 = vadd.f32 0.0, %v3174
          %3176 = vmatmul.f32.gmra.mxu0 %v3098
          %v3177 = vpop.f32.mrf.mxu0
          %v3178 = vadd.f32 0.0, %v3177
          %3179 = vdwg.mxu0
          %v3180 = vld [vmem:[%s316] sm:$0xff]
          %v3181 = vld [vmem:[%s316 + $0x8] sm:$0xff]
          %v3182 = vld [vmem:[%s316 + $0x10] sm:$0xff]
          %v3183 = vld [vmem:[%s316 + $0x18] sm:$0xff]
          %v3184 = vld [vmem:[%s316 + $0x20] sm:$0xff]
          %v3185 = vld [vmem:[%s316 + $0x28] sm:$0xff]
          %v3186 = vld [vmem:[%s316 + $0x30] sm:$0xff]
          %v3187 = vld [vmem:[%s316 + $0x38] sm:$0xff]
          %v3188 = vld [vmem:[%s316 + $0x40] sm:$0xff]
          %v3189 = vld [vmem:[%s316 + $0x48] sm:$0xff]
          %v3190 = vld [vmem:[%s316 + $0x50] sm:$0xff]
          %v3191 = vld [vmem:[%s316 + $0x58] sm:$0xff]
          %v3192 = vld [vmem:[%s316 + $0x60] sm:$0xff]
          %v3193 = vld [vmem:[%s316 + $0x68] sm:$0xff]
          %v3194 = vld [vmem:[%s316 + $0x70] sm:$0xff]
          %v3195 = vld [vmem:[%s316 + $0x78] sm:$0xff]
          %v3196 = vmul.f32 %v3133, %v3180
          %v3197 = vmul.f32 %v3136, %v3181
          %v3198 = vmul.f32 %v3139, %v3182
          %v3199 = vmul.f32 %v3142, %v3183
          %v3200 = vmul.f32 %v3145, %v3184
          %v3201 = vmul.f32 %v3148, %v3185
          %v3202 = vmul.f32 %v3151, %v3186
          %v3203 = vmul.f32 %v3154, %v3187
          %v3204 = vmul.f32 %v3157, %v3188
          %v3205 = vmul.f32 %v3160, %v3189
          %v3206 = vmul.f32 %v3163, %v3190
          %v3207 = vmul.f32 %v3166, %v3191
          %v3208 = vmul.f32 %v3169, %v3192
          %v3209 = vmul.f32 %v3172, %v3193
          %v3210 = vmul.f32 %v3175, %v3194
          %v3211 = vmul.f32 %v3178, %v3195
          %3212 = vadd.xlane.f32.xlu0 %v3196
          %v3213 = vpop.xlane.xlu0 %3212
          %3214 = vadd.xlane.f32.xlu0 %v3197
          %v3215 = vpop.xlane.xlu0 %3214
          %3216 = vadd.xlane.f32.xlu0 %v3198
          %v3217 = vpop.xlane.xlu0 %3216
          %3218 = vadd.xlane.f32.xlu0 %v3199
          %v3219 = vpop.xlane.xlu0 %3218
          %3220 = vadd.xlane.f32.xlu0 %v3200
          %v3221 = vpop.xlane.xlu0 %3220
          %3222 = vadd.xlane.f32.xlu0 %v3201
          %v3223 = vpop.xlane.xlu0 %3222
          %3224 = vadd.xlane.f32.xlu0 %v3202
          %v3225 = vpop.xlane.xlu0 %3224
          %3226 = vadd.xlane.f32.xlu0 %v3203
          %v3227 = vpop.xlane.xlu0 %3226
          %3228 = vadd.xlane.f32.xlu0 %v3204
          %v3229 = vpop.xlane.xlu0 %3228
          %3230 = vadd.xlane.f32.xlu0 %v3205
          %v3231 = vpop.xlane.xlu0 %3230
          %3232 = vadd.xlane.f32.xlu0 %v3206
          %v3233 = vpop.xlane.xlu0 %3232
          %3234 = vadd.xlane.f32.xlu0 %v3207
          %v3235 = vpop.xlane.xlu0 %3234
          %3236 = vadd.xlane.f32.xlu0 %v3208
          %v3237 = vpop.xlane.xlu0 %3236
          %3238 = vadd.xlane.f32.xlu0 %v3209
          %v3239 = vpop.xlane.xlu0 %3238
          %3240 = vadd.xlane.f32.xlu0 %v3210
          %v3241 = vpop.xlane.xlu0 %3240
          %3242 = vadd.xlane.f32.xlu0 %v3211
          %v3243 = vpop.xlane.xlu0 %3242
          %v3244 = vsub.f32 0.0, %v3213
          %v3245 = vsub.f32 0.0, %v3215
          %v3246 = vsub.f32 0.0, %v3217
          %v3247 = vsub.f32 0.0, %v3219
          %v3248 = vsub.f32 0.0, %v3221
          %v3249 = vsub.f32 0.0, %v3223
          %v3250 = vsub.f32 0.0, %v3225
          %v3251 = vsub.f32 0.0, %v3227
          %v3252 = vsub.f32 0.0, %v3229
          %v3253 = vsub.f32 0.0, %v3231
          %v3254 = vsub.f32 0.0, %v3233
          %v3255 = vsub.f32 0.0, %v3235
          %v3256 = vsub.f32 0.0, %v3237
          %v3257 = vsub.f32 0.0, %v3239
          %v3258 = vsub.f32 0.0, %v3241
          %v3259 = vsub.f32 0.0, %v3243
          %v3260 = vmax.f32 %v3244, 0.0
          %v3261 = vmax.f32 %v3245, 0.0
          %v3262 = vmax.f32 %v3246, 0.0
          %v3263 = vmax.f32 %v3247, 0.0
          %v3264 = vmax.f32 %v3248, 0.0
          %v3265 = vmax.f32 %v3249, 0.0
          %v3266 = vmax.f32 %v3250, 0.0
          %v3267 = vmax.f32 %v3251, 0.0
          %v3268 = vmax.f32 %v3252, 0.0
          %v3269 = vmax.f32 %v3253, 0.0
          %v3270 = vmax.f32 %v3254, 0.0
          %v3271 = vmax.f32 %v3255, 0.0
          %v3272 = vmax.f32 %v3256, 0.0
          %v3273 = vmax.f32 %v3257, 0.0
          %v3274 = vmax.f32 %v3258, 0.0
          %v3275 = vmax.f32 %v3259, 0.0
          %v3276 = vand.u32 2147483647, %v3244
          %v3277 = vand.u32 2147483647, %v3245
          %v3278 = vand.u32 2147483647, %v3246
          %v3279 = vand.u32 2147483647, %v3247
          %v3280 = vand.u32 2147483647, %v3248
          %v3281 = vand.u32 2147483647, %v3249
          %v3282 = vand.u32 2147483647, %v3250
          %v3283 = vand.u32 2147483647, %v3251
          %v3284 = vand.u32 2147483647, %v3252
          %v3285 = vand.u32 2147483647, %v3253
          %v3286 = vand.u32 2147483647, %v3254
          %v3287 = vand.u32 2147483647, %v3255
          %v3288 = vand.u32 2147483647, %v3256
          %v3289 = vand.u32 2147483647, %v3257
          %v3290 = vand.u32 2147483647, %v3258
          %v3291 = vand.u32 2147483647, %v3259
          %v3292 = vsub.f32 0.0, %v3276
          %v3293 = vsub.f32 0.0, %v3277
          %v3294 = vsub.f32 0.0, %v3278
          %v3295 = vsub.f32 0.0, %v3279
          %v3296 = vsub.f32 0.0, %v3280
          %v3297 = vsub.f32 0.0, %v3281
          %v3298 = vsub.f32 0.0, %v3282
          %v3299 = vsub.f32 0.0, %v3283
          %v3300 = vsub.f32 0.0, %v3284
          %v3301 = vsub.f32 0.0, %v3285
          %v3302 = vsub.f32 0.0, %v3286
          %v3303 = vsub.f32 0.0, %v3287
          %v3304 = vsub.f32 0.0, %v3288
          %v3305 = vsub.f32 0.0, %v3289
          %v3306 = vsub.f32 0.0, %v3290
          %v3307 = vsub.f32 0.0, %v3291
          %v3308 = vmul.f32 %v3292, 1.442695
          %v3309 = vpow.pop %v3308
          %v3310 = vmul.f32 %v3293, 1.442695
          %v3311 = vpow.pop %v3310
          %v3312 = vmul.f32 %v3294, 1.442695
          %v3313 = vpow.pop %v3312
          %v3314 = vmul.f32 %v3295, 1.442695
          %v3315 = vpow.pop %v3314
          %v3316 = vmul.f32 %v3296, 1.442695
          %v3317 = vpow.pop %v3316
          %v3318 = vmul.f32 %v3297, 1.442695
          %v3319 = vpow.pop %v3318
          %v3320 = vmul.f32 %v3298, 1.442695
          %v3321 = vpow.pop %v3320
          %v3322 = vmul.f32 %v3299, 1.442695
          %v3323 = vpow.pop %v3322
          %v3324 = vmul.f32 %v3300, 1.442695
          %v3325 = vpow.pop %v3324
          %v3326 = vmul.f32 %v3301, 1.442695
          %v3327 = vpow.pop %v3326
          %v3328 = vmul.f32 %v3302, 1.442695
          %v3329 = vpow.pop %v3328
          %v3330 = vmul.f32 %v3303, 1.442695
          %v3331 = vpow.pop %v3330
          %v3332 = vmul.f32 %v3304, 1.442695
          %v3333 = vpow.pop %v3332
          %v3334 = vmul.f32 %v3305, 1.442695
          %v3335 = vpow.pop %v3334
          %v3336 = vmul.f32 %v3306, 1.442695
          %v3337 = vpow.pop %v3336
          %v3338 = vmul.f32 %v3307, 1.442695
          %v3339 = vpow.pop %v3338
          %v3340 = vadd.f32 %v3309, 1.0
          %v3341 = vadd.f32 %v3311, 1.0
          %v3342 = vadd.f32 %v3313, 1.0
          %v3343 = vadd.f32 %v3315, 1.0
          %v3344 = vadd.f32 %v3317, 1.0
          %v3345 = vadd.f32 %v3319, 1.0
          %v3346 = vadd.f32 %v3321, 1.0
          %v3347 = vadd.f32 %v3323, 1.0
          %v3348 = vadd.f32 %v3325, 1.0
          %v3349 = vadd.f32 %v3327, 1.0
          %v3350 = vadd.f32 %v3329, 1.0
          %v3351 = vadd.f32 %v3331, 1.0
          %v3352 = vadd.f32 %v3333, 1.0
          %v3353 = vadd.f32 %v3335, 1.0
          %v3354 = vadd.f32 %v3337, 1.0
          %v3355 = vadd.f32 %v3339, 1.0
          %v3356 = vlog2.pop %v3340
          %v3357 = vmul.f32 %v3356, 0.6931472
          %v3358 = vlog2.pop %v3341
          %v3359 = vmul.f32 %v3358, 0.6931472
          %v3360 = vlog2.pop %v3342
          %v3361 = vmul.f32 %v3360, 0.6931472
          %v3362 = vlog2.pop %v3343
          %v3363 = vmul.f32 %v3362, 0.6931472
          %v3364 = vlog2.pop %v3344
          %v3365 = vmul.f32 %v3364, 0.6931472
          %v3366 = vlog2.pop %v3345
          %v3367 = vmul.f32 %v3366, 0.6931472
          %v3368 = vlog2.pop %v3346
          %v3369 = vmul.f32 %v3368, 0.6931472
          %v3370 = vlog2.pop %v3347
          %v3371 = vmul.f32 %v3370, 0.6931472
          %v3372 = vlog2.pop %v3348
          %v3373 = vmul.f32 %v3372, 0.6931472
          %v3374 = vlog2.pop %v3349
          %v3375 = vmul.f32 %v3374, 0.6931472
          %v3376 = vlog2.pop %v3350
          %v3377 = vmul.f32 %v3376, 0.6931472
          %v3378 = vlog2.pop %v3351
          %v3379 = vmul.f32 %v3378, 0.6931472
          %v3380 = vlog2.pop %v3352
          %v3381 = vmul.f32 %v3380, 0.6931472
          %v3382 = vlog2.pop %v3353
          %v3383 = vmul.f32 %v3382, 0.6931472
          %v3384 = vlog2.pop %v3354
          %v3385 = vmul.f32 %v3384, 0.6931472
          %v3386 = vlog2.pop %v3355
          %v3387 = vmul.f32 %v3386, 0.6931472
          %v3388 = vadd.f32 %v3260, %v3357
          %v3389 = vadd.f32 %v3261, %v3359
          %v3390 = vadd.f32 %v3262, %v3361
          %v3391 = vadd.f32 %v3263, %v3363
          %v3392 = vadd.f32 %v3264, %v3365
          %v3393 = vadd.f32 %v3265, %v3367
          %v3394 = vadd.f32 %v3266, %v3369
          %v3395 = vadd.f32 %v3267, %v3371
          %v3396 = vadd.f32 %v3268, %v3373
          %v3397 = vadd.f32 %v3269, %v3375
          %v3398 = vadd.f32 %v3270, %v3377
          %v3399 = vadd.f32 %v3271, %v3379
          %v3400 = vadd.f32 %v3272, %v3381
          %v3401 = vadd.f32 %v3273, %v3383
          %v3402 = vadd.f32 %v3274, %v3385
          %v3403 = vadd.f32 %v3275, %v3387
          %v3404 = vsub.f32 0.0, %v3388
          %v3405 = vsub.f32 0.0, %v3389
          %v3406 = vsub.f32 0.0, %v3390
          %v3407 = vsub.f32 0.0, %v3391
          %v3408 = vsub.f32 0.0, %v3392
          %v3409 = vsub.f32 0.0, %v3393
          %v3410 = vsub.f32 0.0, %v3394
          %v3411 = vsub.f32 0.0, %v3395
          %v3412 = vsub.f32 0.0, %v3396
          %v3413 = vsub.f32 0.0, %v3397
          %v3414 = vsub.f32 0.0, %v3398
          %v3415 = vsub.f32 0.0, %v3399
          %v3416 = vsub.f32 0.0, %v3400
          %v3417 = vsub.f32 0.0, %v3401
          %v3418 = vsub.f32 0.0, %v3402
          %v3419 = vsub.f32 0.0, %v3403
          %v3420 = vmul.f32 %v3404, 4.0
          %v3421 = vmul.f32 %v3405, 4.0
          %v3422 = vmul.f32 %v3406, 4.0
          %v3423 = vmul.f32 %v3407, 4.0
          %v3424 = vmul.f32 %v3408, 4.0
          %v3425 = vmul.f32 %v3409, 4.0
          %v3426 = vmul.f32 %v3410, 4.0
          %v3427 = vmul.f32 %v3411, 4.0
          %v3428 = vmul.f32 %v3412, 4.0
          %v3429 = vmul.f32 %v3413, 4.0
          %v3430 = vmul.f32 %v3414, 4.0
          %v3431 = vmul.f32 %v3415, 4.0
          %v3432 = vmul.f32 %v3416, 4.0
          %v3433 = vmul.f32 %v3417, 4.0
          %v3434 = vmul.f32 %v3418, 4.0
          %v3435 = vmul.f32 %v3419, 4.0
          %v3436 = vld [vmem:[%s322] sm:$0xff]
          %v3437 = vld [vmem:[%s322 + $0x8] sm:$0xff]
          %v3438 = vld [vmem:[%s322 + $0x10] sm:$0xff]
          %v3439 = vld [vmem:[%s322 + $0x18] sm:$0xff]
          %v3440 = vld [vmem:[%s322 + $0x20] sm:$0xff]
          %v3441 = vld [vmem:[%s322 + $0x28] sm:$0xff]
          %v3442 = vld [vmem:[%s322 + $0x30] sm:$0xff]
          %v3443 = vld [vmem:[%s322 + $0x38] sm:$0xff]
          %v3444 = vld [vmem:[%s322 + $0x40] sm:$0xff]
          %v3445 = vld [vmem:[%s322 + $0x48] sm:$0xff]
          %v3446 = vld [vmem:[%s322 + $0x50] sm:$0xff]
          %v3447 = vld [vmem:[%s322 + $0x58] sm:$0xff]
          %v3448 = vld [vmem:[%s322 + $0x60] sm:$0xff]
          %v3449 = vld [vmem:[%s322 + $0x68] sm:$0xff]
          %v3450 = vld [vmem:[%s322 + $0x70] sm:$0xff]
          %v3451 = vld [vmem:[%s322 + $0x78] sm:$0xff]
          %v3452 = vmax.f32 %v3133, 0.0
          %v3453 = vmax.f32 %v3136, 0.0
          %v3454 = vmax.f32 %v3139, 0.0
          %v3455 = vmax.f32 %v3142, 0.0
          %v3456 = vmax.f32 %v3145, 0.0
          %v3457 = vmax.f32 %v3148, 0.0
          %v3458 = vmax.f32 %v3151, 0.0
          %v3459 = vmax.f32 %v3154, 0.0
          %v3460 = vmax.f32 %v3157, 0.0
          %v3461 = vmax.f32 %v3160, 0.0
          %v3462 = vmax.f32 %v3163, 0.0
          %v3463 = vmax.f32 %v3166, 0.0
          %v3464 = vmax.f32 %v3169, 0.0
          %v3465 = vmax.f32 %v3172, 0.0
          %v3466 = vmax.f32 %v3175, 0.0
          %v3467 = vmax.f32 %v3178, 0.0
          %v3468 = vand.u32 2147483647, %v3133
          %v3469 = vand.u32 2147483647, %v3136
          %v3470 = vand.u32 2147483647, %v3139
          %v3471 = vand.u32 2147483647, %v3142
          %v3472 = vand.u32 2147483647, %v3145
          %v3473 = vand.u32 2147483647, %v3148
          %v3474 = vand.u32 2147483647, %v3151
          %v3475 = vand.u32 2147483647, %v3154
          %v3476 = vand.u32 2147483647, %v3157
          %v3477 = vand.u32 2147483647, %v3160
          %v3478 = vand.u32 2147483647, %v3163
          %v3479 = vand.u32 2147483647, %v3166
          %v3480 = vand.u32 2147483647, %v3169
          %v3481 = vand.u32 2147483647, %v3172
          %v3482 = vand.u32 2147483647, %v3175
          %v3483 = vand.u32 2147483647, %v3178
          %v3484 = vsub.f32 0.0, %v3468
          %v3485 = vsub.f32 0.0, %v3469
          %v3486 = vsub.f32 0.0, %v3470
          %v3487 = vsub.f32 0.0, %v3471
          %v3488 = vsub.f32 0.0, %v3472
          %v3489 = vsub.f32 0.0, %v3473
          %v3490 = vsub.f32 0.0, %v3474
          %v3491 = vsub.f32 0.0, %v3475
          %v3492 = vsub.f32 0.0, %v3476
          %v3493 = vsub.f32 0.0, %v3477
          %v3494 = vsub.f32 0.0, %v3478
          %v3495 = vsub.f32 0.0, %v3479
          %v3496 = vsub.f32 0.0, %v3480
          %v3497 = vsub.f32 0.0, %v3481
          %v3498 = vsub.f32 0.0, %v3482
          %v3499 = vsub.f32 0.0, %v3483
          %v3500 = vmul.f32 %v3484, 1.442695
          %v3501 = vpow.pop %v3500
          %v3502 = vmul.f32 %v3485, 1.442695
          %v3503 = vpow.pop %v3502
          %v3504 = vmul.f32 %v3486, 1.442695
          %v3505 = vpow.pop %v3504
          %v3506 = vmul.f32 %v3487, 1.442695
          %v3507 = vpow.pop %v3506
          %v3508 = vmul.f32 %v3488, 1.442695
          %v3509 = vpow.pop %v3508
          %v3510 = vmul.f32 %v3489, 1.442695
          %v3511 = vpow.pop %v3510
          %v3512 = vmul.f32 %v3490, 1.442695
          %v3513 = vpow.pop %v3512
          %v3514 = vmul.f32 %v3491, 1.442695
          %v3515 = vpow.pop %v3514
          %v3516 = vmul.f32 %v3492, 1.442695
          %v3517 = vpow.pop %v3516
          %v3518 = vmul.f32 %v3493, 1.442695
          %v3519 = vpow.pop %v3518
          %v3520 = vmul.f32 %v3494, 1.442695
          %v3521 = vpow.pop %v3520
          %v3522 = vmul.f32 %v3495, 1.442695
          %v3523 = vpow.pop %v3522
          %v3524 = vmul.f32 %v3496, 1.442695
          %v3525 = vpow.pop %v3524
          %v3526 = vmul.f32 %v3497, 1.442695
          %v3527 = vpow.pop %v3526
          %v3528 = vmul.f32 %v3498, 1.442695
          %v3529 = vpow.pop %v3528
          %v3530 = vmul.f32 %v3499, 1.442695
          %v3531 = vpow.pop %v3530
          %v3532 = vadd.f32 %v3501, 1.0
          %v3533 = vadd.f32 %v3503, 1.0
          %v3534 = vadd.f32 %v3505, 1.0
          %v3535 = vadd.f32 %v3507, 1.0
          %v3536 = vadd.f32 %v3509, 1.0
          %v3537 = vadd.f32 %v3511, 1.0
          %v3538 = vadd.f32 %v3513, 1.0
          %v3539 = vadd.f32 %v3515, 1.0
          %v3540 = vadd.f32 %v3517, 1.0
          %v3541 = vadd.f32 %v3519, 1.0
          %v3542 = vadd.f32 %v3521, 1.0
          %v3543 = vadd.f32 %v3523, 1.0
          %v3544 = vadd.f32 %v3525, 1.0
          %v3545 = vadd.f32 %v3527, 1.0
          %v3546 = vadd.f32 %v3529, 1.0
          %v3547 = vadd.f32 %v3531, 1.0
          %v3548 = vlog2.pop %v3532
          %v3549 = vmul.f32 %v3548, 0.6931472
          %v3550 = vlog2.pop %v3533
          %v3551 = vmul.f32 %v3550, 0.6931472
          %v3552 = vlog2.pop %v3534
          %v3553 = vmul.f32 %v3552, 0.6931472
          %v3554 = vlog2.pop %v3535
          %v3555 = vmul.f32 %v3554, 0.6931472
          %v3556 = vlog2.pop %v3536
          %v3557 = vmul.f32 %v3556, 0.6931472
          %v3558 = vlog2.pop %v3537
          %v3559 = vmul.f32 %v3558, 0.6931472
          %v3560 = vlog2.pop %v3538
          %v3561 = vmul.f32 %v3560, 0.6931472
          %v3562 = vlog2.pop %v3539
          %v3563 = vmul.f32 %v3562, 0.6931472
          %v3564 = vlog2.pop %v3540
          %v3565 = vmul.f32 %v3564, 0.6931472
          %v3566 = vlog2.pop %v3541
          %v3567 = vmul.f32 %v3566, 0.6931472
          %v3568 = vlog2.pop %v3542
          %v3569 = vmul.f32 %v3568, 0.6931472
          %v3570 = vlog2.pop %v3543
          %v3571 = vmul.f32 %v3570, 0.6931472
          %v3572 = vlog2.pop %v3544
          %v3573 = vmul.f32 %v3572, 0.6931472
          %v3574 = vlog2.pop %v3545
          %v3575 = vmul.f32 %v3574, 0.6931472
          %v3576 = vlog2.pop %v3546
          %v3577 = vmul.f32 %v3576, 0.6931472
          %v3578 = vlog2.pop %v3547
          %v3579 = vmul.f32 %v3578, 0.6931472
          %v3580 = vadd.f32 %v3452, %v3549
          %v3581 = vadd.f32 %v3453, %v3551
          %v3582 = vadd.f32 %v3454, %v3553
          %v3583 = vadd.f32 %v3455, %v3555
          %v3584 = vadd.f32 %v3456, %v3557
          %v3585 = vadd.f32 %v3457, %v3559
          %v3586 = vadd.f32 %v3458, %v3561
          %v3587 = vadd.f32 %v3459, %v3563
          %v3588 = vadd.f32 %v3460, %v3565
          %v3589 = vadd.f32 %v3461, %v3567
          %v3590 = vadd.f32 %v3462, %v3569
          %v3591 = vadd.f32 %v3463, %v3571
          %v3592 = vadd.f32 %v3464, %v3573
          %v3593 = vadd.f32 %v3465, %v3575
          %v3594 = vadd.f32 %v3466, %v3577
          %v3595 = vadd.f32 %v3467, %v3579
          %v3596 = vmul.f32 %v3436, %v3580
          %v3597 = vmul.f32 %v3437, %v3581
          %v3598 = vmul.f32 %v3438, %v3582
          %v3599 = vmul.f32 %v3439, %v3583
          %v3600 = vmul.f32 %v3440, %v3584
          %v3601 = vmul.f32 %v3441, %v3585
          %v3602 = vmul.f32 %v3442, %v3586
          %v3603 = vmul.f32 %v3443, %v3587
          %v3604 = vmul.f32 %v3444, %v3588
          %v3605 = vmul.f32 %v3445, %v3589
          %v3606 = vmul.f32 %v3446, %v3590
          %v3607 = vmul.f32 %v3447, %v3591
          %v3608 = vmul.f32 %v3448, %v3592
          %v3609 = vmul.f32 %v3449, %v3593
          %v3610 = vmul.f32 %v3450, %v3594
          %v3611 = vmul.f32 %v3451, %v3595
          %3612 = vadd.xlane.f32.xlu0 %v3596
          %v3613 = vpop.xlane.xlu0 %3612
          %3614 = vadd.xlane.f32.xlu0 %v3597
          %v3615 = vpop.xlane.xlu0 %3614
          %3616 = vadd.xlane.f32.xlu0 %v3598
          %v3617 = vpop.xlane.xlu0 %3616
          %3618 = vadd.xlane.f32.xlu0 %v3599
          %v3619 = vpop.xlane.xlu0 %3618
          %3620 = vadd.xlane.f32.xlu0 %v3600
          %v3621 = vpop.xlane.xlu0 %3620
          %3622 = vadd.xlane.f32.xlu0 %v3601
          %v3623 = vpop.xlane.xlu0 %3622
          %3624 = vadd.xlane.f32.xlu0 %v3602
          %v3625 = vpop.xlane.xlu0 %3624
          %3626 = vadd.xlane.f32.xlu0 %v3603
          %v3627 = vpop.xlane.xlu0 %3626
          %3628 = vadd.xlane.f32.xlu0 %v3604
          %v3629 = vpop.xlane.xlu0 %3628
          %3630 = vadd.xlane.f32.xlu0 %v3605
          %v3631 = vpop.xlane.xlu0 %3630
          %3632 = vadd.xlane.f32.xlu0 %v3606
          %v3633 = vpop.xlane.xlu0 %3632
          %3634 = vadd.xlane.f32.xlu0 %v3607
          %v3635 = vpop.xlane.xlu0 %3634
          %3636 = vadd.xlane.f32.xlu0 %v3608
          %v3637 = vpop.xlane.xlu0 %3636
          %3638 = vadd.xlane.f32.xlu0 %v3609
          %v3639 = vpop.xlane.xlu0 %3638
          %3640 = vadd.xlane.f32.xlu0 %v3610
          %v3641 = vpop.xlane.xlu0 %3640
          %3642 = vadd.xlane.f32.xlu0 %v3611
          %v3643 = vpop.xlane.xlu0 %3642
          %v3644 = vsub.f32 0.0, %v3613
          %v3645 = vsub.f32 0.0, %v3615
          %v3646 = vsub.f32 0.0, %v3617
          %v3647 = vsub.f32 0.0, %v3619
          %v3648 = vsub.f32 0.0, %v3621
          %v3649 = vsub.f32 0.0, %v3623
          %v3650 = vsub.f32 0.0, %v3625
          %v3651 = vsub.f32 0.0, %v3627
          %v3652 = vsub.f32 0.0, %v3629
          %v3653 = vsub.f32 0.0, %v3631
          %v3654 = vsub.f32 0.0, %v3633
          %v3655 = vsub.f32 0.0, %v3635
          %v3656 = vsub.f32 0.0, %v3637
          %v3657 = vsub.f32 0.0, %v3639
          %v3658 = vsub.f32 0.0, %v3641
          %v3659 = vsub.f32 0.0, %v3643
          %v3660 = vadd.f32 %v3420, %v3644
          %v3661 = vadd.f32 %v3421, %v3645
          %v3662 = vadd.f32 %v3422, %v3646
          %v3663 = vadd.f32 %v3423, %v3647
          %v3664 = vadd.f32 %v3424, %v3648
          %v3665 = vadd.f32 %v3425, %v3649
          %v3666 = vadd.f32 %v3426, %v3650
          %v3667 = vadd.f32 %v3427, %v3651
          %v3668 = vadd.f32 %v3428, %v3652
          %v3669 = vadd.f32 %v3429, %v3653
          %v3670 = vadd.f32 %v3430, %v3654
          %v3671 = vadd.f32 %v3431, %v3655
          %v3672 = vadd.f32 %v3432, %v3656
          %v3673 = vadd.f32 %v3433, %v3657
          %v3674 = vadd.f32 %v3434, %v3658
          %v3675 = vadd.f32 %v3435, %v3659
          %v3676 = vmul.f32 %v3660, 0.625
          %v3677 = vmul.f32 %v3661, 0.625
          %v3678 = vmul.f32 %v3662, 0.625
          %v3679 = vmul.f32 %v3663, 0.625
          %v3680 = vmul.f32 %v3664, 0.625
          %v3681 = vmul.f32 %v3665, 0.625
          %v3682 = vmul.f32 %v3666, 0.625
          %v3683 = vmul.f32 %v3667, 0.625
          %v3684 = vmul.f32 %v3668, 0.625
          %v3685 = vmul.f32 %v3669, 0.625
          %v3686 = vmul.f32 %v3670, 0.625
          %v3687 = vmul.f32 %v3671, 0.625
          %v3688 = vmul.f32 %v3672, 0.625
          %v3689 = vmul.f32 %v3673, 0.625
          %v3690 = vmul.f32 %v3674, 0.625
          %v3691 = vmul.f32 %v3675, 0.625
          %s3692 = sld [smem:[#allocation4]]
          %vm3693 = vcmask 7168
          %v3694 = vsel %vm3693, %v3676, 0.0
          %v3695 = vsel %vm3693, %v3677, 0.0
          %v3696 = vadd.f32 %v3694, %v3695
          %v3697 = vsel %vm3693, %v3678, 0.0
          %v3698 = vadd.f32 %v3696, %v3697
          %v3699 = vsel %vm3693, %v3679, 0.0
          %v3700 = vadd.f32 %v3698, %v3699
          %v3701 = vsel %vm3693, %v3680, 0.0
          %v3702 = vadd.f32 %v3700, %v3701
          %v3703 = vsel %vm3693, %v3681, 0.0
          %v3704 = vadd.f32 %v3702, %v3703
          %v3705 = vsel %vm3693, %v3682, 0.0
          %v3706 = vadd.f32 %v3704, %v3705
          %v3707 = vsel %vm3693, %v3683, 0.0
          %v3708 = vadd.f32 %v3706, %v3707
          %v3709 = vsel %vm3693, %v3684, 0.0
          %v3710 = vadd.f32 %v3708, %v3709
          %v3711 = vsel %vm3693, %v3685, 0.0
          %v3712 = vadd.f32 %v3710, %v3711
          %v3713 = vsel %vm3693, %v3686, 0.0
          %v3714 = vadd.f32 %v3712, %v3713
          %v3715 = vsel %vm3693, %v3687, 0.0
          %v3716 = vadd.f32 %v3714, %v3715
          %v3717 = vsel %vm3693, %v3688, 0.0
          %v3718 = vadd.f32 %v3716, %v3717
          %v3719 = vsel %vm3693, %v3689, 0.0
          %v3720 = vadd.f32 %v3718, %v3719
          %v3721 = vsel %vm3693, %v3690, 0.0
          %v3722 = vadd.f32 %v3720, %v3721
          %v3723 = vsel %vm3693, %v3691, 0.0
          %v3724 = vadd.f32 %v3722, %v3723
          %3725 = vadd.xlane.f32.xlu0 %v3724
          %v3726 = vpop.xlane.xlu0 %3725
          %v3727 = vrot.slane %v3726, 4
          %v3728 = vadd.f32 %v3726, %v3727
          %v3729 = vrot.slane %v3728, 2
          %v3730 = vadd.f32 %v3728, %v3729
          %v3731 = vrot.slane %v3730, 1
          %v3732 = vadd.f32 %v3730, %v3731
          %s3733 = vtos %v3732
          %s3734 = sadd.f32 %s3692, %s3733
          %s3735 = scalar_lea.smem [#allocation4], 0
          %3736 = sst [smem:[%s3735]] %s3734
        $region60: #{tpu_custom_call.1} parent=47 // pred_fallthru
          _
        %p3737 = scmp.eq.s32.totalorder %s25, 1
        %p3738 = pnand %p2977, %p3737
        %p3739 = pneg %p3738
        // Predicated region
        $region61: #{tpu_custom_call.1} parent=47 // pred_check
          _
        $region62: #{tpu_custom_call.1} parent=47 // pred_check_branch
          %3741 = sbr.rel (%p3738) target = $region64
        $region63: #{tpu_custom_call.1} parent=47 // pred_region
          %s3742 = sld [smem:[#allocation4]]
          %s3743 = smul.f32 %s3742, 0.00390625
          %s3744 = sld [smem:[#allocation5]]
          %s3745 = smul.f32 %s3744, 0.0005
          %s3746 = sadd.f32 %s3743, %s3745
          %s3747 = scalar_lea.smem [#allocation6], 0
          %3748 = sst [smem:[%s3747]] %s3746
        $region64: #{tpu_custom_call.1} parent=47 // pred_fallthru
          _
        // Predicated region
        $region65: #{tpu_custom_call.1} parent=47 // pred_check
          %p3749 = pneg %p207
        $region66: #{tpu_custom_call.1} parent=47 // pred_check_branch
          %3751 = sbr.rel (%p3749) target = $region68
        $region67: #{tpu_custom_call.1} parent=47 // pred_region
          %3753 = vsyncadd [#allocation7], 0
          %s3755 = sshll.u32 %s7, 4
          %s3756 = int_to_ptr.hbm [resolvable:$true] %s3755
          %3758 = dma.smem_to_hbm [#allocation6], 16, %s3756, [#allocation7]
        $region68: #{tpu_custom_call.1} parent=47 // pred_fallthru
          _
        // Predicated region
        $region69: #{tpu_custom_call.1} parent=47 // pred_check
          %p3759 = pneg %p207
        $region70: #{tpu_custom_call.1} parent=47 // pred_check_branch
          %3761 = sbr.rel (%p3759) target = $region72
        $region71: #{tpu_custom_call.1} parent=47 // pred_region
          %3763 = dma.done [#allocation7], 16
        $region72: #{tpu_custom_call.1} parent=47 // pred_fallthru
          _
        %3764 = sfence
      $region48: #{tpu_custom_call.1} parent=5 // pred_fallthru
        _
      %p3765 = scmp.le.s32.totalorder 2, %s15
      // Predicated region
      $region73: #{tpu_custom_call.1} parent=5 // pred_check
        %p3766 = pneg %p3765
      $region74: #{tpu_custom_call.1} parent=5 // pred_check_branch
        %3768 = sbr.rel (%p3766) target = $region76
      $region75: #{tpu_custom_call.1} parent=5 // pred_region
        %s3769 = ssub.s32 %s15, 2
      $region76: #{tpu_custom_call.1} parent=5 // pred_fallthru
        _
    $region6: #{tpu_custom_call.1} parent=1 // loop_footer
      %s19 = sadd.s32 1, %s15
    $region7: #{tpu_custom_call.1} parent=1 // loop_footer_branch
      %14 = sbr.rel target = $region3
    $region8: #{tpu_custom_call.1} parent=1 // loop_exit
      _
    %3770 = vsyncpa [#allocation7], 1
    %s3771 = scalar_lea.sflag [#allocation7], 1
    %3772 = vsyncpa %s3771, 1

</llo_original>
